<compile_context>
chip_gen: v5e
topology: v5e:2x2
jax: 0.10.0
libtpu: 0.0.40
codegen_flags: <defaults>
</compile_context>

<pallas_src>
import numpy as np
import jax
import jax.numpy as jnp
from jax import lax
from jax.experimental import pallas as pl
from jax.experimental.pallas import tpu as pltpu


def _pick_batch_block(n, c_f, spatial, k, vmem_budget_bytes=4 << 20):
    """Largest batch fold b s.t. b | n, the grid keeps >= 2 steps (two v7x
    TensorCores), and the bf16 im2col scratch stays within a small budget."""
    best = 1
    for b in range(1, n + 1):
        if n % b:
            continue
        if n >= 2 and n // b < 2:
            continue
        if k * k * c_f * b * spatial * 2 > vmem_budget_bytes:  # bf16 bytes
            continue
        best = b
    return best


def pab_forward_nchw(x_nchw, w1, w2, wpa1, wpa2, *, batch_block=None):
    """PAB forward.

    x_nchw: [N, Cf, H, W]
    w1, w2: [Cf, Cf, K, K]   (OIHW, bias=False)
    wpa1:   [Cr, Cf, 1, 1]   (PALayer squeeze)
    wpa2:   [Cf, Cr, 1, 1]   (PALayer excite)
    Returns [N, Cf, H, W].
    """
    N, Cf, H, W = x_nchw.shape
    K = w1.shape[-1]
    p = K // 2
    L = H * W
    Cr = wpa1.shape[0]
    KK = K * K
    KK_pad = 8 * ((KK + 7) // 8)       # tile-aligned mask block (9 -> 16)
    Cr_pad = 8 * ((Cr + 7) // 8)       # sublane-aligned squeeze output (2 -> 8)

    b_blk = batch_block if batch_block is not None else _pick_batch_block(N, Cf, L, K)
    assert N % b_blk == 0, (N, b_blk)

    # Lane-dense NCHW view: [N, Cf, H*W] (contiguity-preserving, ~free).
    x3 = x_nchw.reshape(N, Cf, L)

    # im2col weight packing: Wm[co, t*Cf + ci] = w[co, ci, kh, kw], t = kh*K+kw.
    # bf16 operands; accumulation stays f32 inside the kernel.
    w1m = jnp.transpose(w1, (0, 2, 3, 1)).reshape(Cf, KK * Cf).astype(jnp.bfloat16)
    w2m = jnp.transpose(w2, (0, 2, 3, 1)).reshape(Cf, KK * Cf).astype(jnp.bfloat16)

    # PALayer squeeze weight, zero-padded Cr -> Cr_pad rows (bf16, MXU).
    wpa1m = jnp.zeros((Cr_pad, Cf), jnp.bfloat16).at[:Cr, :].set(
        wpa1.reshape(Cr, Cf).astype(jnp.bfloat16))
    # PALayer excite weight kept f32, lane-padded to 128: the Cf x Cr excite
    # (K = Cr) is done as Cr VPU broadcast-FMAs instead of an MXU push.
    wpa2m = jnp.zeros((Cf, 128), jnp.float32).at[:, :Cr].set(
        wpa2.reshape(Cf, Cr).astype(jnp.float32))

    # Host-precomputed per-tap border-validity masks over the flat spatial axis
    # (zero SAME-padding realized as roll + mask), padded to KK_pad sublanes.
    masks_np = np.zeros((KK_pad, L), np.float32)
    for kh in range(K):
        for kw in range(K):
            dh, dw = kh - p, kw - p
            m = np.zeros((H, W), np.float32)
            hs, he = max(0, -dh), min(H, H - dh)
            ws, we = max(0, -dw), min(W, W - dw)
            m[hs:he, ws:we] = 1.0
            masks_np[kh * K + kw] = m.reshape(L)
    masks = jnp.asarray(masks_np)

    def kernel(x_ref, masks_ref, w1_ref, w2_ref, wpa1_ref, wpa2_ref,
               out_ref, s_ref, act_ref):
        # x_ref   : [b_blk, Cf, L]     f32, lane-dense per-batch slabs
        # s_ref   : [KK*Cf, b_blk*L]   bf16 im2col scratch (both convs)
        # act_ref : [Cf, b_blk*L]      f32 scratch for h1 then res

        def im2col_store(val_f32, b):
            # val_f32: [Cf, L] f32. Each tap = XLU roll + (VPU mask), bf16 store.
            for t in range(KK):
                dh, dw = t // K - p, t % K - p
                sh = (-(dh * W + dw)) % L
                tap = val_f32 if sh == 0 else pltpu.roll(val_f32, shift=sh, axis=1)
                if not (dh == 0 and dw == 0):          # center tap: all-ones mask
                    tap = tap * masks_ref[t:t + 1, :]
                s_ref[t * Cf:(t + 1) * Cf, b * L:(b + 1) * L] = tap.astype(s_ref.dtype)

        # ---- conv1 + ReLU: one bf16 im2col matmul over the whole sub-batch ----
        for b in range(b_blk):
            im2col_store(x_ref[b].astype(jnp.float32), b)
        act_ref[...] = jnp.maximum(
            jnp.dot(w1_ref[...], s_ref[...],
                    preferred_element_type=jnp.float32), 0.0)          # h1

        # ---- conv2 (reuses the same im2col scratch) ----
        for b in range(b_blk):
            im2col_store(act_ref[:, b * L:(b + 1) * L], b)
        act_ref[...] = jnp.dot(w2_ref[...], s_ref[...],
                               preferred_element_type=jnp.float32)      # res

        # ---- PALayer squeeze: MXU matmul, Cr zero-padded to Cr_pad ----
        y = jnp.maximum(
            jnp.dot(wpa1_ref[...], act_ref[...].astype(jnp.bfloat16),
                    preferred_element_type=jnp.float32), 0.0)           # [Cr_pad, b*L]

        # ---- excite (VPU broadcast-FMAs) + sigmoid + gate + residual, per batch ----
        for b in range(b_blk):
            lo, hi = b * L, (b + 1) * L
            z = wpa2_ref[:, 0:1] * y[0:1, lo:hi]
            for cr in range(1, Cr):
                z = z + wpa2_ref[:, cr:cr + 1] * y[cr:cr + 1, lo:hi]
            gate = jax.nn.sigmoid(z)
            res_b = act_ref[:, lo:hi]
            out_ref[b] = (res_b * gate
                          + x_ref[b].astype(jnp.float32)).astype(out_ref.dtype)

    out3 = pl.pallas_call(
        kernel,
        out_shape=jax.ShapeDtypeStruct((N, Cf, L), x_nchw.dtype),
        grid_spec=pltpu.PrefetchScalarGridSpec(
            num_scalar_prefetch=0,
            grid=(N // b_blk,),
            in_specs=[
                pl.BlockSpec((b_blk, Cf, L), lambda n: (n, 0, 0)),   # x (batch fold)
                pl.BlockSpec((KK_pad, L), lambda n: (0, 0)),         # tap masks
                pl.BlockSpec((Cf, KK * Cf), lambda n: (0, 0)),       # conv1 W (bf16)
                pl.BlockSpec((Cf, KK * Cf), lambda n: (0, 0)),       # conv2 W (bf16)
                pl.BlockSpec((Cr_pad, Cf), lambda n: (0, 0)),        # PA squeeze (bf16)
                pl.BlockSpec((Cf, 128), lambda n: (0, 0)),           # PA excite (f32)
            ],
            out_specs=pl.BlockSpec((b_blk, Cf, L), lambda n: (n, 0, 0)),
            scratch_shapes=[
                pltpu.VMEM((KK * Cf, b_blk * L), jnp.bfloat16),      # im2col stack
                pltpu.VMEM((Cf, b_blk * L), jnp.float32),            # h1 / res
            ],
        ),
        compiler_params=pltpu.CompilerParams(
            dimension_semantics=("parallel",)),
    )(x3, masks, w1m, w2m, wpa1m, wpa2m)

    return out3.reshape(N, Cf, H, W)


def _ref_pab_nchw(x, w1, w2, wpa1, wpa2):
    dn = ("NCHW", "OIHW", "NCHW")
    h = lax.conv_general_dilated(x, w1, (1, 1), "SAME", dimension_numbers=dn)
    h = jnp.maximum(h, 0.0)                       # act = ReLU
    res = lax.conv_general_dilated(h, w2, (1, 1), "SAME", dimension_numbers=dn)
    y = lax.conv_general_dilated(res, wpa1, (1, 1), "SAME", dimension_numbers=dn)
    y = jnp.maximum(y, 0.0)
    y = jax.nn.sigmoid(
        lax.conv_general_dilated(y, wpa2, (1, 1), "SAME", dimension_numbers=dn))
    return res * y + x


if __name__ == "__main__":
    # PAB(n_feat=32, kernel_size=3, reduction=16, bias=False, act=ReLU)
    n_feat, K, reduction = 32, 3, 16
    N, H, W = 4, 16, 16                   # N=4 exercises batch folding (b_blk=2)
    Cr = n_feat // reduction

    key = jax.random.PRNGKey(0)
    kx, k1, k2, k3, k4 = jax.random.split(key, 5)

    x = jax.random.normal(kx, (N, n_feat, H, W), dtype=jnp.float32)

    def init_w(k, cout, cin, ksz):
        std = 1.0 / np.sqrt(cin * ksz * ksz)
        return jax.random.normal(k, (cout, cin, ksz, ksz), dtype=jnp.float32) * std

    w1 = init_w(k1, n_feat, n_feat, K)     # conv1
    w2 = init_w(k2, n_feat, n_feat, K)     # conv2
    wpa1 = init_w(k3, Cr, n_feat, 1)       # PALayer 1x1 squeeze
    wpa2 = init_w(k4, n_feat, Cr, 1)       # PALayer 1x1 excite

    out = jax.jit(pab_forward_nchw)(x, w1, w2, wpa1, wpa2)
    jax.block_until_ready(out)

    ref = _ref_pab_nchw(x, w1, w2, wpa1, wpa2)
    # Tolerance is set for bf16 MXU operands (f32 accumulation); an all-f32
    # path would match to ~1e-4.
    np.testing.assert_allclose(np.asarray(out), np.asarray(ref),
                               rtol=5e-2, atol=5e-2)

    print("KERNEL_OK")
</pallas_src>

<mosaic_0001>
module attributes {stable_mosaic.version = 11 : i64} {
  func.func @kernel(%arg0: i32, %arg1: memref<2x32x256xf32, #tpu.memory_space<vmem>>, %arg2: memref<16x256xf32, #tpu.memory_space<vmem>>, %arg3: memref<32x288xbf16, #tpu.memory_space<vmem>>, %arg4: memref<32x288xbf16, #tpu.memory_space<vmem>>, %arg5: memref<8x32xbf16, #tpu.memory_space<vmem>>, %arg6: memref<32x128xf32, #tpu.memory_space<vmem>>, %arg7: memref<2x32x256xf32, #tpu.memory_space<vmem>>, %arg8: memref<288x512xbf16, #tpu.memory_space<vmem>>, %arg9: memref<32x512xf32, #tpu.memory_space<vmem>>) attributes {dimension_semantics = [#tpu.dimension_semantics<parallel>], iteration_bounds = array<i64: 2>, scalar_prefetch = 0 : i64, scratch_operands = 2 : i64, tpu.core_type = #tpu.core_type<tc>, window_params = [{transform_indices = @transform_0, window_bounds = array<i64: 2, 32, 256>}, {pipeline_mode = #tpu.pipeline_mode<synchronous>, transform_indices = @transform_1, window_bounds = array<i64: 16, 256>}, {pipeline_mode = #tpu.pipeline_mode<synchronous>, transform_indices = @transform_2, window_bounds = array<i64: 32, 288>}, {pipeline_mode = #tpu.pipeline_mode<synchronous>, transform_indices = @transform_3, window_bounds = array<i64: 32, 288>}, {pipeline_mode = #tpu.pipeline_mode<synchronous>, transform_indices = @transform_4, window_bounds = array<i64: 8, 32>}, {pipeline_mode = #tpu.pipeline_mode<synchronous>, transform_indices = @transform_5, window_bounds = array<i64: 32, 128>}, {transform_indices = @transform_6, window_bounds = array<i64: 2, 32, 256>}]} {
    %c0 = arith.constant 0 : index
    %c0_0 = arith.constant 0 : index
    %c0_1 = arith.constant 0 : index
    %0 = vector.load %arg1[%c0, %c0_0, %c0_1] : memref<2x32x256xf32, #tpu.memory_space<vmem>>, vector<1x32x256xf32>
    %1 = vector.shape_cast %0 : vector<1x32x256xf32> to vector<32x256xf32>
    %c17_i32 = arith.constant 17 : i32
    %2 = tpu.dynamic_rotate %1 by %c17_i32 dim 1 : vector<32x256xf32>, i32 -> vector<32x256xf32>
    %c0_2 = arith.constant 0 : index
    %c0_3 = arith.constant 0 : index
    %3 = vector.load %arg2[%c0_2, %c0_3] : memref<16x256xf32, #tpu.memory_space<vmem>>, vector<1x256xf32>
    %4 = vector.broadcast %3 : vector<1x256xf32> to vector<32x256xf32>
    %5 = arith.mulf %2, %4 : vector<32x256xf32>
    %6 = arith.truncf %5 : vector<32x256xf32> to vector<32x256xbf16>
    %c0_4 = arith.constant 0 : index
    %c0_5 = arith.constant 0 : index
    %7 = vector.load %arg8[%c0_4, %c0_5] : memref<288x512xbf16, #tpu.memory_space<vmem>>, vector<32x256xbf16>
    tpu.vector_store %arg8[%c0_4, %c0_5], %6 {strides = array<i32>} : memref<288x512xbf16, #tpu.memory_space<vmem>>, vector<32x256xbf16>,
    %c16_i32 = arith.constant 16 : i32
    %8 = tpu.dynamic_rotate %1 by %c16_i32 dim 1 : vector<32x256xf32>, i32 -> vector<32x256xf32>
    %c1 = arith.constant 1 : index
    %c0_6 = arith.constant 0 : index
    %9 = vector.load %arg2[%c1, %c0_6] : memref<16x256xf32, #tpu.memory_space<vmem>>, vector<1x256xf32>
    %10 = vector.broadcast %9 : vector<1x256xf32> to vector<32x256xf32>
    %11 = arith.mulf %8, %10 : vector<32x256xf32>
    %12 = arith.truncf %11 : vector<32x256xf32> to vector<32x256xbf16>
    %c32 = arith.constant 32 : index
    %c0_7 = arith.constant 0 : index
    %13 = vector.load %arg8[%c32, %c0_7] : memref<288x512xbf16, #tpu.memory_space<vmem>>, vector<32x256xbf16>
    tpu.vector_store %arg8[%c32, %c0_7], %12 {strides = array<i32>} : memref<288x512xbf16, #tpu.memory_space<vmem>>, vector<32x256xbf16>,
    %c15_i32 = arith.constant 15 : i32
    %14 = tpu.dynamic_rotate %1 by %c15_i32 dim 1 : vector<32x256xf32>, i32 -> vector<32x256xf32>
    %c2 = arith.constant 2 : index
    %c0_8 = arith.constant 0 : index
    %15 = vector.load %arg2[%c2, %c0_8] : memref<16x256xf32, #tpu.memory_space<vmem>>, vector<1x256xf32>
    %16 = vector.broadcast %15 : vector<1x256xf32> to vector<32x256xf32>
    %17 = arith.mulf %14, %16 : vector<32x256xf32>
    %18 = arith.truncf %17 : vector<32x256xf32> to vector<32x256xbf16>
    %c64 = arith.constant 64 : index
    %c0_9 = arith.constant 0 : index
    %19 = vector.load %arg8[%c64, %c0_9] : memref<288x512xbf16, #tpu.memory_space<vmem>>, vector<32x256xbf16>
    tpu.vector_store %arg8[%c64, %c0_9], %18 {strides = array<i32>} : memref<288x512xbf16, #tpu.memory_space<vmem>>, vector<32x256xbf16>,
    %c1_i32 = arith.constant 1 : i32
    %20 = tpu.dynamic_rotate %1 by %c1_i32 dim 1 : vector<32x256xf32>, i32 -> vector<32x256xf32>
    %c3 = arith.constant 3 : index
    %c0_10 = arith.constant 0 : index
    %21 = vector.load %arg2[%c3, %c0_10] : memref<16x256xf32, #tpu.memory_space<vmem>>, vector<1x256xf32>
    %22 = vector.broadcast %21 : vector<1x256xf32> to vector<32x256xf32>
    %23 = arith.mulf %20, %22 : vector<32x256xf32>
    %24 = arith.truncf %23 : vector<32x256xf32> to vector<32x256xbf16>
    %c96 = arith.constant 96 : index
    %c0_11 = arith.constant 0 : index
    %25 = vector.load %arg8[%c96, %c0_11] : memref<288x512xbf16, #tpu.memory_space<vmem>>, vector<32x256xbf16>
    tpu.vector_store %arg8[%c96, %c0_11], %24 {strides = array<i32>} : memref<288x512xbf16, #tpu.memory_space<vmem>>, vector<32x256xbf16>,
    %26 = arith.truncf %1 : vector<32x256xf32> to vector<32x256xbf16>
    %c128 = arith.constant 128 : index
    %c0_12 = arith.constant 0 : index
    %27 = vector.load %arg8[%c128, %c0_12] : memref<288x512xbf16, #tpu.memory_space<vmem>>, vector<32x256xbf16>
    tpu.vector_store %arg8[%c128, %c0_12], %26 {strides = array<i32>} : memref<288x512xbf16, #tpu.memory_space<vmem>>, vector<32x256xbf16>,
    %c255_i32 = arith.constant 255 : i32
    %28 = tpu.dynamic_rotate %1 by %c255_i32 dim 1 : vector<32x256xf32>, i32 -> vector<32x256xf32>
    %c5 = arith.constant 5 : index
    %c0_13 = arith.constant 0 : index
    %29 = vector.load %arg2[%c5, %c0_13] : memref<16x256xf32, #tpu.memory_space<vmem>>, vector<1x256xf32>
    %30 = vector.broadcast %29 : vector<1x256xf32> to vector<32x256xf32>
    %31 = arith.mulf %28, %30 : vector<32x256xf32>
    %32 = arith.truncf %31 : vector<32x256xf32> to vector<32x256xbf16>
    %c160 = arith.constant 160 : index
    %c0_14 = arith.constant 0 : index
    %33 = vector.load %arg8[%c160, %c0_14] : memref<288x512xbf16, #tpu.memory_space<vmem>>, vector<32x256xbf16>
    tpu.vector_store %arg8[%c160, %c0_14], %32 {strides = array<i32>} : memref<288x512xbf16, #tpu.memory_space<vmem>>, vector<32x256xbf16>,
    %c241_i32 = arith.constant 241 : i32
    %34 = tpu.dynamic_rotate %1 by %c241_i32 dim 1 : vector<32x256xf32>, i32 -> vector<32x256xf32>
    %c6 = arith.constant 6 : index
    %c0_15 = arith.constant 0 : index
    %35 = vector.load %arg2[%c6, %c0_15] : memref<16x256xf32, #tpu.memory_space<vmem>>, vector<1x256xf32>
    %36 = vector.broadcast %35 : vector<1x256xf32> to vector<32x256xf32>
    %37 = arith.mulf %34, %36 : vector<32x256xf32>
    %38 = arith.truncf %37 : vector<32x256xf32> to vector<32x256xbf16>
    %c192 = arith.constant 192 : index
    %c0_16 = arith.constant 0 : index
    %39 = vector.load %arg8[%c192, %c0_16] : memref<288x512xbf16, #tpu.memory_space<vmem>>, vector<32x256xbf16>
    tpu.vector_store %arg8[%c192, %c0_16], %38 {strides = array<i32>} : memref<288x512xbf16, #tpu.memory_space<vmem>>, vector<32x256xbf16>,
    %c240_i32 = arith.constant 240 : i32
    %40 = tpu.dynamic_rotate %1 by %c240_i32 dim 1 : vector<32x256xf32>, i32 -> vector<32x256xf32>
    %c7 = arith.constant 7 : index
    %c0_17 = arith.constant 0 : index
    %41 = vector.load %arg2[%c7, %c0_17] : memref<16x256xf32, #tpu.memory_space<vmem>>, vector<1x256xf32>
    %42 = vector.broadcast %41 : vector<1x256xf32> to vector<32x256xf32>
    %43 = arith.mulf %40, %42 : vector<32x256xf32>
    %44 = arith.truncf %43 : vector<32x256xf32> to vector<32x256xbf16>
    %c224 = arith.constant 224 : index
    %c0_18 = arith.constant 0 : index
    %45 = vector.load %arg8[%c224, %c0_18] : memref<288x512xbf16, #tpu.memory_space<vmem>>, vector<32x256xbf16>
    tpu.vector_store %arg8[%c224, %c0_18], %44 {strides = array<i32>} : memref<288x512xbf16, #tpu.memory_space<vmem>>, vector<32x256xbf16>,
    %c239_i32 = arith.constant 239 : i32
    %46 = tpu.dynamic_rotate %1 by %c239_i32 dim 1 : vector<32x256xf32>, i32 -> vector<32x256xf32>
    %c8 = arith.constant 8 : index
    %c0_19 = arith.constant 0 : index
    %47 = vector.load %arg2[%c8, %c0_19] : memref<16x256xf32, #tpu.memory_space<vmem>>, vector<1x256xf32>
    %48 = vector.broadcast %47 : vector<1x256xf32> to vector<32x256xf32>
    %49 = arith.mulf %46, %48 : vector<32x256xf32>
    %50 = arith.truncf %49 : vector<32x256xf32> to vector<32x256xbf16>
    %c256 = arith.constant 256 : index
    %c0_20 = arith.constant 0 : index
    %51 = vector.load %arg8[%c256, %c0_20] : memref<288x512xbf16, #tpu.memory_space<vmem>>, vector<32x256xbf16>
    tpu.vector_store %arg8[%c256, %c0_20], %50 {strides = array<i32>} : memref<288x512xbf16, #tpu.memory_space<vmem>>, vector<32x256xbf16>,
    %c1_21 = arith.constant 1 : index
    %c0_22 = arith.constant 0 : index
    %c0_23 = arith.constant 0 : index
    %52 = vector.load %arg1[%c1_21, %c0_22, %c0_23] : memref<2x32x256xf32, #tpu.memory_space<vmem>>, vector<1x32x256xf32>
    %53 = vector.shape_cast %52 : vector<1x32x256xf32> to vector<32x256xf32>
    %c17_i32_24 = arith.constant 17 : i32
    %54 = tpu.dynamic_rotate %53 by %c17_i32_24 dim 1 : vector<32x256xf32>, i32 -> vector<32x256xf32>
    %c0_25 = arith.constant 0 : index
    %c0_26 = arith.constant 0 : index
    %55 = vector.load %arg2[%c0_25, %c0_26] : memref<16x256xf32, #tpu.memory_space<vmem>>, vector<1x256xf32>
    %56 = vector.broadcast %55 : vector<1x256xf32> to vector<32x256xf32>
    %57 = arith.mulf %54, %56 : vector<32x256xf32>
    %58 = arith.truncf %57 : vector<32x256xf32> to vector<32x256xbf16>
    %c0_27 = arith.constant 0 : index
    %c256_28 = arith.constant 256 : index
    %59 = vector.load %arg8[%c0_27, %c256_28] : memref<288x512xbf16, #tpu.memory_space<vmem>>, vector<32x256xbf16>
    tpu.vector_store %arg8[%c0_27, %c256_28], %58 {strides = array<i32>} : memref<288x512xbf16, #tpu.memory_space<vmem>>, vector<32x256xbf16>,
    %c16_i32_29 = arith.constant 16 : i32
    %60 = tpu.dynamic_rotate %53 by %c16_i32_29 dim 1 : vector<32x256xf32>, i32 -> vector<32x256xf32>
    %c1_30 = arith.constant 1 : index
    %c0_31 = arith.constant 0 : index
    %61 = vector.load %arg2[%c1_30, %c0_31] : memref<16x256xf32, #tpu.memory_space<vmem>>, vector<1x256xf32>
    %62 = vector.broadcast %61 : vector<1x256xf32> to vector<32x256xf32>
    %63 = arith.mulf %60, %62 : vector<32x256xf32>
    %64 = arith.truncf %63 : vector<32x256xf32> to vector<32x256xbf16>
    %c32_32 = arith.constant 32 : index
    %c256_33 = arith.constant 256 : index
    %65 = vector.load %arg8[%c32_32, %c256_33] : memref<288x512xbf16, #tpu.memory_space<vmem>>, vector<32x256xbf16>
    tpu.vector_store %arg8[%c32_32, %c256_33], %64 {strides = array<i32>} : memref<288x512xbf16, #tpu.memory_space<vmem>>, vector<32x256xbf16>,
    %c15_i32_34 = arith.constant 15 : i32
    %66 = tpu.dynamic_rotate %53 by %c15_i32_34 dim 1 : vector<32x256xf32>, i32 -> vector<32x256xf32>
    %c2_35 = arith.constant 2 : index
    %c0_36 = arith.constant 0 : index
    %67 = vector.load %arg2[%c2_35, %c0_36] : memref<16x256xf32, #tpu.memory_space<vmem>>, vector<1x256xf32>
    %68 = vector.broadcast %67 : vector<1x256xf32> to vector<32x256xf32>
    %69 = arith.mulf %66, %68 : vector<32x256xf32>
    %70 = arith.truncf %69 : vector<32x256xf32> to vector<32x256xbf16>
    %c64_37 = arith.constant 64 : index
    %c256_38 = arith.constant 256 : index
    %71 = vector.load %arg8[%c64_37, %c256_38] : memref<288x512xbf16, #tpu.memory_space<vmem>>, vector<32x256xbf16>
    tpu.vector_store %arg8[%c64_37, %c256_38], %70 {strides = array<i32>} : memref<288x512xbf16, #tpu.memory_space<vmem>>, vector<32x256xbf16>,
    %c1_i32_39 = arith.constant 1 : i32
    %72 = tpu.dynamic_rotate %53 by %c1_i32_39 dim 1 : vector<32x256xf32>, i32 -> vector<32x256xf32>
    %c3_40 = arith.constant 3 : index
    %c0_41 = arith.constant 0 : index
    %73 = vector.load %arg2[%c3_40, %c0_41] : memref<16x256xf32, #tpu.memory_space<vmem>>, vector<1x256xf32>
    %74 = vector.broadcast %73 : vector<1x256xf32> to vector<32x256xf32>
    %75 = arith.mulf %72, %74 : vector<32x256xf32>
    %76 = arith.truncf %75 : vector<32x256xf32> to vector<32x256xbf16>
    %c96_42 = arith.constant 96 : index
    %c256_43 = arith.constant 256 : index
    %77 = vector.load %arg8[%c96_42, %c256_43] : memref<288x512xbf16, #tpu.memory_space<vmem>>, vector<32x256xbf16>
    tpu.vector_store %arg8[%c96_42, %c256_43], %76 {strides = array<i32>} : memref<288x512xbf16, #tpu.memory_space<vmem>>, vector<32x256xbf16>,
    %78 = arith.truncf %53 : vector<32x256xf32> to vector<32x256xbf16>
    %c128_44 = arith.constant 128 : index
    %c256_45 = arith.constant 256 : index
    %79 = vector.load %arg8[%c128_44, %c256_45] : memref<288x512xbf16, #tpu.memory_space<vmem>>, vector<32x256xbf16>
    tpu.vector_store %arg8[%c128_44, %c256_45], %78 {strides = array<i32>} : memref<288x512xbf16, #tpu.memory_space<vmem>>, vector<32x256xbf16>,
    %c255_i32_46 = arith.constant 255 : i32
    %80 = tpu.dynamic_rotate %53 by %c255_i32_46 dim 1 : vector<32x256xf32>, i32 -> vector<32x256xf32>
    %c5_47 = arith.constant 5 : index
    %c0_48 = arith.constant 0 : index
    %81 = vector.load %arg2[%c5_47, %c0_48] : memref<16x256xf32, #tpu.memory_space<vmem>>, vector<1x256xf32>
    %82 = vector.broadcast %81 : vector<1x256xf32> to vector<32x256xf32>
    %83 = arith.mulf %80, %82 : vector<32x256xf32>
    %84 = arith.truncf %83 : vector<32x256xf32> to vector<32x256xbf16>
    %c160_49 = arith.constant 160 : index
    %c256_50 = arith.constant 256 : index
    %85 = vector.load %arg8[%c160_49, %c256_50] : memref<288x512xbf16, #tpu.memory_space<vmem>>, vector<32x256xbf16>
    tpu.vector_store %arg8[%c160_49, %c256_50], %84 {strides = array<i32>} : memref<288x512xbf16, #tpu.memory_space<vmem>>, vector<32x256xbf16>,
    %c241_i32_51 = arith.constant 241 : i32
    %86 = tpu.dynamic_rotate %53 by %c241_i32_51 dim 1 : vector<32x256xf32>, i32 -> vector<32x256xf32>
    %c6_52 = arith.constant 6 : index
    %c0_53 = arith.constant 0 : index
    %87 = vector.load %arg2[%c6_52, %c0_53] : memref<16x256xf32, #tpu.memory_space<vmem>>, vector<1x256xf32>
    %88 = vector.broadcast %87 : vector<1x256xf32> to vector<32x256xf32>
    %89 = arith.mulf %86, %88 : vector<32x256xf32>
    %90 = arith.truncf %89 : vector<32x256xf32> to vector<32x256xbf16>
    %c192_54 = arith.constant 192 : index
    %c256_55 = arith.constant 256 : index
    %91 = vector.load %arg8[%c192_54, %c256_55] : memref<288x512xbf16, #tpu.memory_space<vmem>>, vector<32x256xbf16>
    tpu.vector_store %arg8[%c192_54, %c256_55], %90 {strides = array<i32>} : memref<288x512xbf16, #tpu.memory_space<vmem>>, vector<32x256xbf16>,
    %c240_i32_56 = arith.constant 240 : i32
    %92 = tpu.dynamic_rotate %53 by %c240_i32_56 dim 1 : vector<32x256xf32>, i32 -> vector<32x256xf32>
    %c7_57 = arith.constant 7 : index
    %c0_58 = arith.constant 0 : index
    %93 = vector.load %arg2[%c7_57, %c0_58] : memref<16x256xf32, #tpu.memory_space<vmem>>, vector<1x256xf32>
    %94 = vector.broadcast %93 : vector<1x256xf32> to vector<32x256xf32>
    %95 = arith.mulf %92, %94 : vector<32x256xf32>
    %96 = arith.truncf %95 : vector<32x256xf32> to vector<32x256xbf16>
    %c224_59 = arith.constant 224 : index
    %c256_60 = arith.constant 256 : index
    %97 = vector.load %arg8[%c224_59, %c256_60] : memref<288x512xbf16, #tpu.memory_space<vmem>>, vector<32x256xbf16>
    tpu.vector_store %arg8[%c224_59, %c256_60], %96 {strides = array<i32>} : memref<288x512xbf16, #tpu.memory_space<vmem>>, vector<32x256xbf16>,
    %c239_i32_61 = arith.constant 239 : i32
    %98 = tpu.dynamic_rotate %53 by %c239_i32_61 dim 1 : vector<32x256xf32>, i32 -> vector<32x256xf32>
    %c8_62 = arith.constant 8 : index
    %c0_63 = arith.constant 0 : index
    %99 = vector.load %arg2[%c8_62, %c0_63] : memref<16x256xf32, #tpu.memory_space<vmem>>, vector<1x256xf32>
    %100 = vector.broadcast %99 : vector<1x256xf32> to vector<32x256xf32>
    %101 = arith.mulf %98, %100 : vector<32x256xf32>
    %102 = arith.truncf %101 : vector<32x256xf32> to vector<32x256xbf16>
    %c256_64 = arith.constant 256 : index
    %c256_65 = arith.constant 256 : index
    %103 = vector.load %arg8[%c256_64, %c256_65] : memref<288x512xbf16, #tpu.memory_space<vmem>>, vector<32x256xbf16>
    tpu.vector_store %arg8[%c256_64, %c256_65], %102 {strides = array<i32>} : memref<288x512xbf16, #tpu.memory_space<vmem>>, vector<32x256xbf16>,
    %c0_66 = arith.constant 0 : index
    %c0_67 = arith.constant 0 : index
    %104 = vector.load %arg3[%c0_66, %c0_67] : memref<32x288xbf16, #tpu.memory_space<vmem>>, vector<32x288xbf16>
    %c0_68 = arith.constant 0 : index
    %c0_69 = arith.constant 0 : index
    %105 = vector.load %arg8[%c0_68, %c0_69] : memref<288x512xbf16, #tpu.memory_space<vmem>>, vector<288x512xbf16>
    %cst = arith.constant dense<0.000000e+00> : vector<32x512xf32>
    %106 = tpu.matmul %104, %105, %cst {dimension_numbers = #tpu.dot_dimension_numbers<[1], [0], [0], [1], [0, 0, 1, 1], [], []>} : vector<32x288xbf16>, vector<288x512xbf16>, vector<32x512xf32> -> vector<32x512xf32>
    %cst_70 = arith.constant 0.000000e+00 : f32
    %107 = vector.broadcast %cst_70 : f32 to vector<32x512xf32>
    %108 = arith.maximumf %106, %107 : vector<32x512xf32>
    %c0_71 = arith.constant 0 : index
    %c0_72 = arith.constant 0 : index
    %109 = vector.load %arg9[%c0_71, %c0_72] : memref<32x512xf32, #tpu.memory_space<vmem>>, vector<32x512xf32>
    tpu.vector_store %arg9[%c0_71, %c0_72], %108 {strides = array<i32>} : memref<32x512xf32, #tpu.memory_space<vmem>>, vector<32x512xf32>,
    %c0_73 = arith.constant 0 : index
    %c0_74 = arith.constant 0 : index
    %110 = vector.load %arg9[%c0_73, %c0_74] : memref<32x512xf32, #tpu.memory_space<vmem>>, vector<32x256xf32>
    %c17_i32_75 = arith.constant 17 : i32
    %111 = tpu.dynamic_rotate %110 by %c17_i32_75 dim 1 : vector<32x256xf32>, i32 -> vector<32x256xf32>
    %c0_76 = arith.constant 0 : index
    %c0_77 = arith.constant 0 : index
    %112 = vector.load %arg2[%c0_76, %c0_77] : memref<16x256xf32, #tpu.memory_space<vmem>>, vector<1x256xf32>
    %113 = vector.broadcast %112 : vector<1x256xf32> to vector<32x256xf32>
    %114 = arith.mulf %111, %113 : vector<32x256xf32>
    %115 = arith.truncf %114 : vector<32x256xf32> to vector<32x256xbf16>
    %c0_78 = arith.constant 0 : index
    %c0_79 = arith.constant 0 : index
    %116 = vector.load %arg8[%c0_78, %c0_79] : memref<288x512xbf16, #tpu.memory_space<vmem>>, vector<32x256xbf16>
    tpu.vector_store %arg8[%c0_78, %c0_79], %115 {strides = array<i32>} : memref<288x512xbf16, #tpu.memory_space<vmem>>, vector<32x256xbf16>,
    %c16_i32_80 = arith.constant 16 : i32
    %117 = tpu.dynamic_rotate %110 by %c16_i32_80 dim 1 : vector<32x256xf32>, i32 -> vector<32x256xf32>
    %c1_81 = arith.constant 1 : index
    %c0_82 = arith.constant 0 : index
    %118 = vector.load %arg2[%c1_81, %c0_82] : memref<16x256xf32, #tpu.memory_space<vmem>>, vector<1x256xf32>
    %119 = vector.broadcast %118 : vector<1x256xf32> to vector<32x256xf32>
    %120 = arith.mulf %117, %119 : vector<32x256xf32>
    %121 = arith.truncf %120 : vector<32x256xf32> to vector<32x256xbf16>
    %c32_83 = arith.constant 32 : index
    %c0_84 = arith.constant 0 : index
    %122 = vector.load %arg8[%c32_83, %c0_84] : memref<288x512xbf16, #tpu.memory_space<vmem>>, vector<32x256xbf16>
    tpu.vector_store %arg8[%c32_83, %c0_84], %121 {strides = array<i32>} : memref<288x512xbf16, #tpu.memory_space<vmem>>, vector<32x256xbf16>,
    %c15_i32_85 = arith.constant 15 : i32
    %123 = tpu.dynamic_rotate %110 by %c15_i32_85 dim 1 : vector<32x256xf32>, i32 -> vector<32x256xf32>
    %c2_86 = arith.constant 2 : index
    %c0_87 = arith.constant 0 : index
    %124 = vector.load %arg2[%c2_86, %c0_87] : memref<16x256xf32, #tpu.memory_space<vmem>>, vector<1x256xf32>
    %125 = vector.broadcast %124 : vector<1x256xf32> to vector<32x256xf32>
    %126 = arith.mulf %123, %125 : vector<32x256xf32>
    %127 = arith.truncf %126 : vector<32x256xf32> to vector<32x256xbf16>
    %c64_88 = arith.constant 64 : index
    %c0_89 = arith.constant 0 : index
    %128 = vector.load %arg8[%c64_88, %c0_89] : memref<288x512xbf16, #tpu.memory_space<vmem>>, vector<32x256xbf16>
    tpu.vector_store %arg8[%c64_88, %c0_89], %127 {strides = array<i32>} : memref<288x512xbf16, #tpu.memory_space<vmem>>, vector<32x256xbf16>,
    %c1_i32_90 = arith.constant 1 : i32
    %129 = tpu.dynamic_rotate %110 by %c1_i32_90 dim 1 : vector<32x256xf32>, i32 -> vector<32x256xf32>
    %c3_91 = arith.constant 3 : index
    %c0_92 = arith.constant 0 : index
    %130 = vector.load %arg2[%c3_91, %c0_92] : memref<16x256xf32, #tpu.memory_space<vmem>>, vector<1x256xf32>
    %131 = vector.broadcast %130 : vector<1x256xf32> to vector<32x256xf32>
    %132 = arith.mulf %129, %131 : vector<32x256xf32>
    %133 = arith.truncf %132 : vector<32x256xf32> to vector<32x256xbf16>
    %c96_93 = arith.constant 96 : index
    %c0_94 = arith.constant 0 : index
    %134 = vector.load %arg8[%c96_93, %c0_94] : memref<288x512xbf16, #tpu.memory_space<vmem>>, vector<32x256xbf16>
    tpu.vector_store %arg8[%c96_93, %c0_94], %133 {strides = array<i32>} : memref<288x512xbf16, #tpu.memory_space<vmem>>, vector<32x256xbf16>,
    %135 = arith.truncf %110 : vector<32x256xf32> to vector<32x256xbf16>
    %c128_95 = arith.constant 128 : index
    %c0_96 = arith.constant 0 : index
    %136 = vector.load %arg8[%c128_95, %c0_96] : memref<288x512xbf16, #tpu.memory_space<vmem>>, vector<32x256xbf16>
    tpu.vector_store %arg8[%c128_95, %c0_96], %135 {strides = array<i32>} : memref<288x512xbf16, #tpu.memory_space<vmem>>, vector<32x256xbf16>,
    %c255_i32_97 = arith.constant 255 : i32
    %137 = tpu.dynamic_rotate %110 by %c255_i32_97 dim 1 : vector<32x256xf32>, i32 -> vector<32x256xf32>
    %c5_98 = arith.constant 5 : index
    %c0_99 = arith.constant 0 : index
    %138 = vector.load %arg2[%c5_98, %c0_99] : memref<16x256xf32, #tpu.memory_space<vmem>>, vector<1x256xf32>
    %139 = vector.broadcast %138 : vector<1x256xf32> to vector<32x256xf32>
    %140 = arith.mulf %137, %139 : vector<32x256xf32>
    %141 = arith.truncf %140 : vector<32x256xf32> to vector<32x256xbf16>
    %c160_100 = arith.constant 160 : index
    %c0_101 = arith.constant 0 : index
    %142 = vector.load %arg8[%c160_100, %c0_101] : memref<288x512xbf16, #tpu.memory_space<vmem>>, vector<32x256xbf16>
    tpu.vector_store %arg8[%c160_100, %c0_101], %141 {strides = array<i32>} : memref<288x512xbf16, #tpu.memory_space<vmem>>, vector<32x256xbf16>,
    %c241_i32_102 = arith.constant 241 : i32
    %143 = tpu.dynamic_rotate %110 by %c241_i32_102 dim 1 : vector<32x256xf32>, i32 -> vector<32x256xf32>
    %c6_103 = arith.constant 6 : index
    %c0_104 = arith.constant 0 : index
    %144 = vector.load %arg2[%c6_103, %c0_104] : memref<16x256xf32, #tpu.memory_space<vmem>>, vector<1x256xf32>
    %145 = vector.broadcast %144 : vector<1x256xf32> to vector<32x256xf32>
    %146 = arith.mulf %143, %145 : vector<32x256xf32>
    %147 = arith.truncf %146 : vector<32x256xf32> to vector<32x256xbf16>
    %c192_105 = arith.constant 192 : index
    %c0_106 = arith.constant 0 : index
    %148 = vector.load %arg8[%c192_105, %c0_106] : memref<288x512xbf16, #tpu.memory_space<vmem>>, vector<32x256xbf16>
    tpu.vector_store %arg8[%c192_105, %c0_106], %147 {strides = array<i32>} : memref<288x512xbf16, #tpu.memory_space<vmem>>, vector<32x256xbf16>,
    %c240_i32_107 = arith.constant 240 : i32
    %149 = tpu.dynamic_rotate %110 by %c240_i32_107 dim 1 : vector<32x256xf32>, i32 -> vector<32x256xf32>
    %c7_108 = arith.constant 7 : index
    %c0_109 = arith.constant 0 : index
    %150 = vector.load %arg2[%c7_108, %c0_109] : memref<16x256xf32, #tpu.memory_space<vmem>>, vector<1x256xf32>
    %151 = vector.broadcast %150 : vector<1x256xf32> to vector<32x256xf32>
    %152 = arith.mulf %149, %151 : vector<32x256xf32>
    %153 = arith.truncf %152 : vector<32x256xf32> to vector<32x256xbf16>
    %c224_110 = arith.constant 224 : index
    %c0_111 = arith.constant 0 : index
    %154 = vector.load %arg8[%c224_110, %c0_111] : memref<288x512xbf16, #tpu.memory_space<vmem>>, vector<32x256xbf16>
    tpu.vector_store %arg8[%c224_110, %c0_111], %153 {strides = array<i32>} : memref<288x512xbf16, #tpu.memory_space<vmem>>, vector<32x256xbf16>,
    %c239_i32_112 = arith.constant 239 : i32
    %155 = tpu.dynamic_rotate %110 by %c239_i32_112 dim 1 : vector<32x256xf32>, i32 -> vector<32x256xf32>
    %c8_113 = arith.constant 8 : index
    %c0_114 = arith.constant 0 : index
    %156 = vector.load %arg2[%c8_113, %c0_114] : memref<16x256xf32, #tpu.memory_space<vmem>>, vector<1x256xf32>
    %157 = vector.broadcast %156 : vector<1x256xf32> to vector<32x256xf32>
    %158 = arith.mulf %155, %157 : vector<32x256xf32>
    %159 = arith.truncf %158 : vector<32x256xf32> to vector<32x256xbf16>
    %c256_115 = arith.constant 256 : index
    %c0_116 = arith.constant 0 : index
    %160 = vector.load %arg8[%c256_115, %c0_116] : memref<288x512xbf16, #tpu.memory_space<vmem>>, vector<32x256xbf16>
    tpu.vector_store %arg8[%c256_115, %c0_116], %159 {strides = array<i32>} : memref<288x512xbf16, #tpu.memory_space<vmem>>, vector<32x256xbf16>,
    %c0_117 = arith.constant 0 : index
    %c256_118 = arith.constant 256 : index
    %161 = vector.load %arg9[%c0_117, %c256_118] : memref<32x512xf32, #tpu.memory_space<vmem>>, vector<32x256xf32>
    %c17_i32_119 = arith.constant 17 : i32
    %162 = tpu.dynamic_rotate %161 by %c17_i32_119 dim 1 : vector<32x256xf32>, i32 -> vector<32x256xf32>
    %c0_120 = arith.constant 0 : index
    %c0_121 = arith.constant 0 : index
    %163 = vector.load %arg2[%c0_120, %c0_121] : memref<16x256xf32, #tpu.memory_space<vmem>>, vector<1x256xf32>
    %164 = vector.broadcast %163 : vector<1x256xf32> to vector<32x256xf32>
    %165 = arith.mulf %162, %164 : vector<32x256xf32>
    %166 = arith.truncf %165 : vector<32x256xf32> to vector<32x256xbf16>
    %c0_122 = arith.constant 0 : index
    %c256_123 = arith.constant 256 : index
    %167 = vector.load %arg8[%c0_122, %c256_123] : memref<288x512xbf16, #tpu.memory_space<vmem>>, vector<32x256xbf16>
    tpu.vector_store %arg8[%c0_122, %c256_123], %166 {strides = array<i32>} : memref<288x512xbf16, #tpu.memory_space<vmem>>, vector<32x256xbf16>,
    %c16_i32_124 = arith.constant 16 : i32
    %168 = tpu.dynamic_rotate %161 by %c16_i32_124 dim 1 : vector<32x256xf32>, i32 -> vector<32x256xf32>
    %c1_125 = arith.constant 1 : index
    %c0_126 = arith.constant 0 : index
    %169 = vector.load %arg2[%c1_125, %c0_126] : memref<16x256xf32, #tpu.memory_space<vmem>>, vector<1x256xf32>
    %170 = vector.broadcast %169 : vector<1x256xf32> to vector<32x256xf32>
    %171 = arith.mulf %168, %170 : vector<32x256xf32>
    %172 = arith.truncf %171 : vector<32x256xf32> to vector<32x256xbf16>
    %c32_127 = arith.constant 32 : index
    %c256_128 = arith.constant 256 : index
    %173 = vector.load %arg8[%c32_127, %c256_128] : memref<288x512xbf16, #tpu.memory_space<vmem>>, vector<32x256xbf16>
    tpu.vector_store %arg8[%c32_127, %c256_128], %172 {strides = array<i32>} : memref<288x512xbf16, #tpu.memory_space<vmem>>, vector<32x256xbf16>,
    %c15_i32_129 = arith.constant 15 : i32
    %174 = tpu.dynamic_rotate %161 by %c15_i32_129 dim 1 : vector<32x256xf32>, i32 -> vector<32x256xf32>
    %c2_130 = arith.constant 2 : index
    %c0_131 = arith.constant 0 : index
    %175 = vector.load %arg2[%c2_130, %c0_131] : memref<16x256xf32, #tpu.memory_space<vmem>>, vector<1x256xf32>
    %176 = vector.broadcast %175 : vector<1x256xf32> to vector<32x256xf32>
    %177 = arith.mulf %174, %176 : vector<32x256xf32>
    %178 = arith.truncf %177 : vector<32x256xf32> to vector<32x256xbf16>
    %c64_132 = arith.constant 64 : index
    %c256_133 = arith.constant 256 : index
    %179 = vector.load %arg8[%c64_132, %c256_133] : memref<288x512xbf16, #tpu.memory_space<vmem>>, vector<32x256xbf16>
    tpu.vector_store %arg8[%c64_132, %c256_133], %178 {strides = array<i32>} : memref<288x512xbf16, #tpu.memory_space<vmem>>, vector<32x256xbf16>,
    %c1_i32_134 = arith.constant 1 : i32
    %180 = tpu.dynamic_rotate %161 by %c1_i32_134 dim 1 : vector<32x256xf32>, i32 -> vector<32x256xf32>
    %c3_135 = arith.constant 3 : index
    %c0_136 = arith.constant 0 : index
    %181 = vector.load %arg2[%c3_135, %c0_136] : memref<16x256xf32, #tpu.memory_space<vmem>>, vector<1x256xf32>
    %182 = vector.broadcast %181 : vector<1x256xf32> to vector<32x256xf32>
    %183 = arith.mulf %180, %182 : vector<32x256xf32>
    %184 = arith.truncf %183 : vector<32x256xf32> to vector<32x256xbf16>
    %c96_137 = arith.constant 96 : index
    %c256_138 = arith.constant 256 : index
    %185 = vector.load %arg8[%c96_137, %c256_138] : memref<288x512xbf16, #tpu.memory_space<vmem>>, vector<32x256xbf16>
    tpu.vector_store %arg8[%c96_137, %c256_138], %184 {strides = array<i32>} : memref<288x512xbf16, #tpu.memory_space<vmem>>, vector<32x256xbf16>,
    %186 = arith.truncf %161 : vector<32x256xf32> to vector<32x256xbf16>
    %c128_139 = arith.constant 128 : index
    %c256_140 = arith.constant 256 : index
    %187 = vector.load %arg8[%c128_139, %c256_140] : memref<288x512xbf16, #tpu.memory_space<vmem>>, vector<32x256xbf16>
    tpu.vector_store %arg8[%c128_139, %c256_140], %186 {strides = array<i32>} : memref<288x512xbf16, #tpu.memory_space<vmem>>, vector<32x256xbf16>,
    %c255_i32_141 = arith.constant 255 : i32
    %188 = tpu.dynamic_rotate %161 by %c255_i32_141 dim 1 : vector<32x256xf32>, i32 -> vector<32x256xf32>
    %c5_142 = arith.constant 5 : index
    %c0_143 = arith.constant 0 : index
    %189 = vector.load %arg2[%c5_142, %c0_143] : memref<16x256xf32, #tpu.memory_space<vmem>>, vector<1x256xf32>
    %190 = vector.broadcast %189 : vector<1x256xf32> to vector<32x256xf32>
    %191 = arith.mulf %188, %190 : vector<32x256xf32>
    %192 = arith.truncf %191 : vector<32x256xf32> to vector<32x256xbf16>
    %c160_144 = arith.constant 160 : index
    %c256_145 = arith.constant 256 : index
    %193 = vector.load %arg8[%c160_144, %c256_145] : memref<288x512xbf16, #tpu.memory_space<vmem>>, vector<32x256xbf16>
    tpu.vector_store %arg8[%c160_144, %c256_145], %192 {strides = array<i32>} : memref<288x512xbf16, #tpu.memory_space<vmem>>, vector<32x256xbf16>,
    %c241_i32_146 = arith.constant 241 : i32
    %194 = tpu.dynamic_rotate %161 by %c241_i32_146 dim 1 : vector<32x256xf32>, i32 -> vector<32x256xf32>
    %c6_147 = arith.constant 6 : index
    %c0_148 = arith.constant 0 : index
    %195 = vector.load %arg2[%c6_147, %c0_148] : memref<16x256xf32, #tpu.memory_space<vmem>>, vector<1x256xf32>
    %196 = vector.broadcast %195 : vector<1x256xf32> to vector<32x256xf32>
    %197 = arith.mulf %194, %196 : vector<32x256xf32>
    %198 = arith.truncf %197 : vector<32x256xf32> to vector<32x256xbf16>
    %c192_149 = arith.constant 192 : index
    %c256_150 = arith.constant 256 : index
    %199 = vector.load %arg8[%c192_149, %c256_150] : memref<288x512xbf16, #tpu.memory_space<vmem>>, vector<32x256xbf16>
    tpu.vector_store %arg8[%c192_149, %c256_150], %198 {strides = array<i32>} : memref<288x512xbf16, #tpu.memory_space<vmem>>, vector<32x256xbf16>,
    %c240_i32_151 = arith.constant 240 : i32
    %200 = tpu.dynamic_rotate %161 by %c240_i32_151 dim 1 : vector<32x256xf32>, i32 -> vector<32x256xf32>
    %c7_152 = arith.constant 7 : index
    %c0_153 = arith.constant 0 : index
    %201 = vector.load %arg2[%c7_152, %c0_153] : memref<16x256xf32, #tpu.memory_space<vmem>>, vector<1x256xf32>
    %202 = vector.broadcast %201 : vector<1x256xf32> to vector<32x256xf32>
    %203 = arith.mulf %200, %202 : vector<32x256xf32>
    %204 = arith.truncf %203 : vector<32x256xf32> to vector<32x256xbf16>
    %c224_154 = arith.constant 224 : index
    %c256_155 = arith.constant 256 : index
    %205 = vector.load %arg8[%c224_154, %c256_155] : memref<288x512xbf16, #tpu.memory_space<vmem>>, vector<32x256xbf16>
    tpu.vector_store %arg8[%c224_154, %c256_155], %204 {strides = array<i32>} : memref<288x512xbf16, #tpu.memory_space<vmem>>, vector<32x256xbf16>,
    %c239_i32_156 = arith.constant 239 : i32
    %206 = tpu.dynamic_rotate %161 by %c239_i32_156 dim 1 : vector<32x256xf32>, i32 -> vector<32x256xf32>
    %c8_157 = arith.constant 8 : index
    %c0_158 = arith.constant 0 : index
    %207 = vector.load %arg2[%c8_157, %c0_158] : memref<16x256xf32, #tpu.memory_space<vmem>>, vector<1x256xf32>
    %208 = vector.broadcast %207 : vector<1x256xf32> to vector<32x256xf32>
    %209 = arith.mulf %206, %208 : vector<32x256xf32>
    %210 = arith.truncf %209 : vector<32x256xf32> to vector<32x256xbf16>
    %c256_159 = arith.constant 256 : index
    %c256_160 = arith.constant 256 : index
    %211 = vector.load %arg8[%c256_159, %c256_160] : memref<288x512xbf16, #tpu.memory_space<vmem>>, vector<32x256xbf16>
    tpu.vector_store %arg8[%c256_159, %c256_160], %210 {strides = array<i32>} : memref<288x512xbf16, #tpu.memory_space<vmem>>, vector<32x256xbf16>,
    %c0_161 = arith.constant 0 : index
    %c0_162 = arith.constant 0 : index
    %212 = vector.load %arg4[%c0_161, %c0_162] : memref<32x288xbf16, #tpu.memory_space<vmem>>, vector<32x288xbf16>
    %c0_163 = arith.constant 0 : index
    %c0_164 = arith.constant 0 : index
    %213 = vector.load %arg8[%c0_163, %c0_164] : memref<288x512xbf16, #tpu.memory_space<vmem>>, vector<288x512xbf16>
    %cst_165 = arith.constant dense<0.000000e+00> : vector<32x512xf32>
    %214 = tpu.matmul %212, %213, %cst_165 {dimension_numbers = #tpu.dot_dimension_numbers<[1], [0], [0], [1], [0, 0, 1, 1], [], []>} : vector<32x288xbf16>, vector<288x512xbf16>, vector<32x512xf32> -> vector<32x512xf32>
    %c0_166 = arith.constant 0 : index
    %c0_167 = arith.constant 0 : index
    %215 = vector.load %arg9[%c0_166, %c0_167] : memref<32x512xf32, #tpu.memory_space<vmem>>, vector<32x512xf32>
    tpu.vector_store %arg9[%c0_166, %c0_167], %214 {strides = array<i32>} : memref<32x512xf32, #tpu.memory_space<vmem>>, vector<32x512xf32>,
    %c0_168 = arith.constant 0 : index
    %c0_169 = arith.constant 0 : index
    %216 = vector.load %arg5[%c0_168, %c0_169] : memref<8x32xbf16, #tpu.memory_space<vmem>>, vector<8x32xbf16>
    %c0_170 = arith.constant 0 : index
    %c0_171 = arith.constant 0 : index
    %217 = vector.load %arg9[%c0_170, %c0_171] : memref<32x512xf32, #tpu.memory_space<vmem>>, vector<32x512xf32>
    %218 = arith.truncf %217 : vector<32x512xf32> to vector<32x512xbf16>
    %cst_172 = arith.constant dense<0.000000e+00> : vector<8x512xf32>
    %219 = tpu.matmul %216, %218, %cst_172 {dimension_numbers = #tpu.dot_dimension_numbers<[1], [0], [0], [1], [0, 0, 1, 1], [], []>} : vector<8x32xbf16>, vector<32x512xbf16>, vector<8x512xf32> -> vector<8x512xf32>
    %cst_173 = arith.constant 0.000000e+00 : f32
    %220 = vector.broadcast %cst_173 : f32 to vector<8x512xf32>
    %221 = arith.maximumf %219, %220 : vector<8x512xf32>
    %c0_174 = arith.constant 0 : index
    %c0_175 = arith.constant 0 : index
    %222 = vector.load %arg6[%c0_174, %c0_175] : memref<32x128xf32, #tpu.memory_space<vmem>>, vector<32x1xf32>
    %223 = vector.extract_strided_slice %221 {offsets = [0, 0], sizes = [1, 256], strides = [1, 1]} : vector<8x512xf32> to vector<1x256xf32>
    %224 = vector.broadcast %222 : vector<32x1xf32> to vector<32x256xf32>
    %225 = vector.broadcast %223 : vector<1x256xf32> to vector<32x256xf32>
    %226 = arith.mulf %224, %225 : vector<32x256xf32>
    %c0_176 = arith.constant 0 : index
    %c1_177 = arith.constant 1 : index
    %227 = vector.load %arg6[%c0_176, %c1_177] : memref<32x128xf32, #tpu.memory_space<vmem>>, vector<32x1xf32>
    %228 = vector.extract_strided_slice %221 {offsets = [1, 0], sizes = [1, 256], strides = [1, 1]} : vector<8x512xf32> to vector<1x256xf32>
    %229 = vector.broadcast %227 : vector<32x1xf32> to vector<32x256xf32>
    %230 = vector.broadcast %228 : vector<1x256xf32> to vector<32x256xf32>
    %231 = arith.mulf %229, %230 : vector<32x256xf32>
    %232 = arith.addf %226, %231 : vector<32x256xf32>
    %233 = arith.negf %232 : vector<32x256xf32>
    %234 = math.exp %233 : vector<32x256xf32>
    %cst_178 = arith.constant 1.000000e+00 : f32
    %235 = vector.broadcast %cst_178 : f32 to vector<32x256xf32>
    %236 = arith.addf %235, %234 : vector<32x256xf32>
    %237 = arith.divf %235, %236 : vector<32x256xf32>
    %c0_179 = arith.constant 0 : index
    %c0_180 = arith.constant 0 : index
    %238 = vector.load %arg9[%c0_179, %c0_180] : memref<32x512xf32, #tpu.memory_space<vmem>>, vector<32x256xf32>
    %239 = arith.mulf %238, %237 : vector<32x256xf32>
    %c0_181 = arith.constant 0 : index
    %c0_182 = arith.constant 0 : index
    %c0_183 = arith.constant 0 : index
    %240 = vector.load %arg1[%c0_181, %c0_182, %c0_183] : memref<2x32x256xf32, #tpu.memory_space<vmem>>, vector<1x32x256xf32>
    %241 = vector.shape_cast %240 : vector<1x32x256xf32> to vector<32x256xf32>
    %242 = arith.addf %239, %241 : vector<32x256xf32>
    %c0_184 = arith.constant 0 : index
    %c0_185 = arith.constant 0 : index
    %c0_186 = arith.constant 0 : index
    %243 = vector.load %arg7[%c0_184, %c0_185, %c0_186] : memref<2x32x256xf32, #tpu.memory_space<vmem>>, vector<1x32x256xf32>
    %244 = vector.shape_cast %243 : vector<1x32x256xf32> to vector<32x256xf32>
    %245 = vector.shape_cast %242 : vector<32x256xf32> to vector<1x32x256xf32>
    tpu.vector_store %arg7[%c0_184, %c0_185, %c0_186], %245 {strides = array<i32>} : memref<2x32x256xf32, #tpu.memory_space<vmem>>, vector<1x32x256xf32>,
    %c0_187 = arith.constant 0 : index
    %c0_188 = arith.constant 0 : index
    %246 = vector.load %arg6[%c0_187, %c0_188] : memref<32x128xf32, #tpu.memory_space<vmem>>, vector<32x1xf32>
    %247 = vector.extract_strided_slice %221 {offsets = [0, 256], sizes = [1, 256], strides = [1, 1]} : vector<8x512xf32> to vector<1x256xf32>
    %248 = vector.broadcast %246 : vector<32x1xf32> to vector<32x256xf32>
    %249 = vector.broadcast %247 : vector<1x256xf32> to vector<32x256xf32>
    %250 = arith.mulf %248, %249 : vector<32x256xf32>
    %c0_189 = arith.constant 0 : index
    %c1_190 = arith.constant 1 : index
    %251 = vector.load %arg6[%c0_189, %c1_190] : memref<32x128xf32, #tpu.memory_space<vmem>>, vector<32x1xf32>
    %252 = vector.extract_strided_slice %221 {offsets = [1, 256], sizes = [1, 256], strides = [1, 1]} : vector<8x512xf32> to vector<1x256xf32>
    %253 = vector.broadcast %251 : vector<32x1xf32> to vector<32x256xf32>
    %254 = vector.broadcast %252 : vector<1x256xf32> to vector<32x256xf32>
    %255 = arith.mulf %253, %254 : vector<32x256xf32>
    %256 = arith.addf %250, %255 : vector<32x256xf32>
    %257 = arith.negf %256 : vector<32x256xf32>
    %258 = math.exp %257 : vector<32x256xf32>
    %cst_191 = arith.constant 1.000000e+00 : f32
    %259 = vector.broadcast %cst_191 : f32 to vector<32x256xf32>
    %260 = arith.addf %259, %258 : vector<32x256xf32>
    %261 = arith.divf %259, %260 : vector<32x256xf32>
    %c0_192 = arith.constant 0 : index
    %c256_193 = arith.constant 256 : index
    %262 = vector.load %arg9[%c0_192, %c256_193] : memref<32x512xf32, #tpu.memory_space<vmem>>, vector<32x256xf32>
    %263 = arith.mulf %262, %261 : vector<32x256xf32>
    %c1_194 = arith.constant 1 : index
    %c0_195 = arith.constant 0 : index
    %c0_196 = arith.constant 0 : index
    %264 = vector.load %arg1[%c1_194, %c0_195, %c0_196] : memref<2x32x256xf32, #tpu.memory_space<vmem>>, vector<1x32x256xf32>
    %265 = vector.shape_cast %264 : vector<1x32x256xf32> to vector<32x256xf32>
    %266 = arith.addf %263, %265 : vector<32x256xf32>
    %c1_197 = arith.constant 1 : index
    %c0_198 = arith.constant 0 : index
    %c0_199 = arith.constant 0 : index
    %267 = vector.load %arg7[%c1_197, %c0_198, %c0_199] : memref<2x32x256xf32, #tpu.memory_space<vmem>>, vector<1x32x256xf32>
    %268 = vector.shape_cast %267 : vector<1x32x256xf32> to vector<32x256xf32>
    %269 = vector.shape_cast %266 : vector<32x256xf32> to vector<1x32x256xf32>
    tpu.vector_store %arg7[%c1_197, %c0_198, %c0_199], %269 {strides = array<i32>} : memref<2x32x256xf32, #tpu.memory_space<vmem>>, vector<1x32x256xf32>,
    return
  }
  func.func @transform_0(%arg0: i32) -> (i32, i32, i32) {
    %c0_i32 = arith.constant 0 : i32
    %c0_i32_0 = arith.constant 0 : i32
    %c0_i32_1 = arith.constant 0 : i32
    return %arg0, %c0_i32, %c0_i32_0 : i32, i32, i32
  }
  func.func @transform_1(%arg0: i32) -> (i32, i32) {
    %c0_i32 = arith.constant 0 : i32
    %c0_i32_0 = arith.constant 0 : i32
    %c0_i32_1 = arith.constant 0 : i32
    return %c0_i32, %c0_i32_0 : i32, i32
  }
  func.func @transform_2(%arg0: i32) -> (i32, i32) {
    %c0_i32 = arith.constant 0 : i32
    %c0_i32_0 = arith.constant 0 : i32
    %c0_i32_1 = arith.constant 0 : i32
    return %c0_i32, %c0_i32_0 : i32, i32
  }
  func.func @transform_3(%arg0: i32) -> (i32, i32) {
    %c0_i32 = arith.constant 0 : i32
    %c0_i32_0 = arith.constant 0 : i32
    %c0_i32_1 = arith.constant 0 : i32
    return %c0_i32, %c0_i32_0 : i32, i32
  }
  func.func @transform_4(%arg0: i32) -> (i32, i32) {
    %c0_i32 = arith.constant 0 : i32
    %c0_i32_0 = arith.constant 0 : i32
    %c0_i32_1 = arith.constant 0 : i32
    return %c0_i32, %c0_i32_0 : i32, i32
  }
  func.func @transform_5(%arg0: i32) -> (i32, i32) {
    %c0_i32 = arith.constant 0 : i32
    %c0_i32_0 = arith.constant 0 : i32
    %c0_i32_1 = arith.constant 0 : i32
    return %c0_i32, %c0_i32_0 : i32, i32
  }
  func.func @transform_6(%arg0: i32) -> (i32, i32, i32) {
    %c0_i32 = arith.constant 0 : i32
    %c0_i32_0 = arith.constant 0 : i32
    %c0_i32_1 = arith.constant 0 : i32
    return %arg0, %c0_i32, %c0_i32_0 : i32, i32, i32
  }
}

</mosaic_0001>

<llo_original>
// kernel: pab_forward_nchw.1
$region0: #{pab_forward_nchw.1}
  #allocation0 [shape = 'u32[]', space=smem, size = 0x4, offset = 0x4, fixed_abs, tag = 'smem constant byte address 0x4 - core index']
  #allocation1 [shape = 'u32[72,128]{1,0:T(1,128)}', space=vmem, size = 0x9000, scoped, tag = 'internal scratch']
  #allocation2 [shape = 'bf16[288,512]{1,0:T(8,128)(2,1)}', space=vmem, size = 0x48000, scoped, tag = 'scratch operand']
  #allocation3 [shape = 'f32[32,512]{1,0:T(8,128)}', space=vmem, size = 0x10000, scoped, tag = 'scratch operand']
  %s0 = inlined_call_operand.vmem [shape: f32[4,32,256], index: 0, kind: input, shape index: {}]
  %s1 = inlined_call_operand.vmem [shape: f32[16,256], index: 1, kind: input, shape index: {}]
  %s2 = inlined_call_operand.vmem [shape: bf16[32,288], index: 2, kind: input, shape index: {}]
  %s3 = inlined_call_operand.vmem [shape: bf16[32,288], index: 3, kind: input, shape index: {}]
  %s4 = inlined_call_operand.vmem [shape: bf16[8,32], index: 4, kind: input, shape index: {}]
  %s5 = inlined_call_operand.vmem [shape: f32[32,128], index: 5, kind: input, shape index: {}]
  %s6 = inlined_call_operand.vmem [shape: f32[4,32,256], index: 6, kind: output, shape index: {}]
  %s7 = sld [smem:[#allocation0]]
  $region57: #{pab_forward_nchw.1} parent=0
    _
  %s9 = ssub.s32 1, %s7
  %s10 = scalar_select 0, %s9, %s7
  loop: start=0, step=1, limit=4
  $region2: #{pab_forward_nchw.1} parent=0 // loop_pre_header
    _
  $region3: #{pab_forward_nchw.1} parent=0 // loop_header
    %s12 = sphi 0, %s16
    %p13 = scmp.ge.s32.totalorder %s12, 4
    %s22 = sphi 0, %s24
    %s25 = sphi 0, %s22
    %s26 = sphi 0, %s25
    %s42 = sphi 0, %s26
    %s46 = sphi 0, %s46
    %s48 = sphi 0, %s46
    %s49 = sphi 0, %s48
    %s63 = sphi 0, %s49
    %s67 = sphi 0, %s67
    %s69 = sphi 0, %s67
    %s70 = sphi 0, %s69
    %s84 = sphi 0, %s70
    %s88 = sphi 0, %s88
    %s90 = sphi 0, %s88
    %s91 = sphi 0, %s90
    %s105 = sphi 0, %s91
    %s109 = sphi 0, %s109
    %s111 = sphi 0, %s109
    %s112 = sphi 0, %s111
    %s126 = sphi 0, %s112
    %s130 = sphi 0, %s130
    %s132 = sphi 0, %s130
    %s133 = sphi 0, %s132
    %s147 = sphi 0, %s133
    %s153 = sphi 0, %s155
    %s156 = sphi 0, %s153
    %s157 = sphi 0, %s156
    %s173 = sphi 0, %s157
  $region4: #{pab_forward_nchw.1} parent=0 // loop_header_branch
    %15 = sbr.rel (%p13) target = $region8
  $region5: #{pab_forward_nchw.1} parent=0 // loop_body
    %s17 = ssub.s32 %s12, 1
    %s18 = ssub.s32 %s12, 2
    %s19 = sadd.s32 %s12, 1
    %s20 = ssub.s32 %s12, %s19
    %p21 = scmp.eq.s32.totalorder %s20, 0
    %s23 = sadd.s32 %s22, 1
    %s24 = scalar_select %p21, %s22, %s23
    %p27 = pneg %p21
    %p28 = scmp.eq.s32.totalorder %s12, 1
    %p29 = por %p27, %p28
    %p30 = scmp.ne.s32.totalorder %s22, %s25
    %p31 = scmp.eq.s32.totalorder %s12, 0
    %p32 = por %p30, %p31
    %p33 = scmp.ne.s32.totalorder %s22, %s25
    %p34 = scmp.eq.s32.totalorder %s17, 1
    %p35 = por %p33, %p34
    %p36 = scmp.ne.s32.totalorder %s25, %s26
    %p37 = scmp.eq.s32.totalorder %s17, 0
    %p38 = por %p36, %p37
    %p39 = scmp.ne.s32.totalorder %s25, %s26
    %p40 = scmp.eq.s32.totalorder %s18, 1
    %p41 = por %p39, %p40
    %p43 = scmp.ne.s32.totalorder %s26, %s42
    %p44 = scmp.eq.s32.totalorder %s18, 0
    %p45 = por %p43, %p44
    %s47 = sadd.s32 %s46, 1
    %p50 = scmp.eq.s32.totalorder %s12, 1
    %p51 = scmp.ne.s32.totalorder %s46, %s48
    %p52 = scmp.eq.s32.totalorder %s12, 0
    %p53 = por %p51, %p52
    %p54 = scmp.ne.s32.totalorder %s46, %s48
    %p55 = scmp.eq.s32.totalorder %s17, 1
    %p56 = por %p54, %p55
    %p57 = scmp.ne.s32.totalorder %s48, %s49
    %p58 = scmp.eq.s32.totalorder %s17, 0
    %p59 = por %p57, %p58
    %p60 = scmp.ne.s32.totalorder %s48, %s49
    %p61 = scmp.eq.s32.totalorder %s18, 1
    %p62 = por %p60, %p61
    %p64 = scmp.ne.s32.totalorder %s49, %s63
    %p65 = scmp.eq.s32.totalorder %s18, 0
    %p66 = por %p64, %p65
    %s68 = sadd.s32 %s67, 1
    %p71 = scmp.eq.s32.totalorder %s12, 1
    %p72 = scmp.ne.s32.totalorder %s67, %s69
    %p73 = scmp.eq.s32.totalorder %s12, 0
    %p74 = por %p72, %p73
    %p75 = scmp.ne.s32.totalorder %s67, %s69
    %p76 = scmp.eq.s32.totalorder %s17, 1
    %p77 = por %p75, %p76
    %p78 = scmp.ne.s32.totalorder %s69, %s70
    %p79 = scmp.eq.s32.totalorder %s17, 0
    %p80 = por %p78, %p79
    %p81 = scmp.ne.s32.totalorder %s69, %s70
    %p82 = scmp.eq.s32.totalorder %s18, 1
    %p83 = por %p81, %p82
    %p85 = scmp.ne.s32.totalorder %s70, %s84
    %p86 = scmp.eq.s32.totalorder %s18, 0
    %p87 = por %p85, %p86
    %s89 = sadd.s32 %s88, 1
    %p92 = scmp.eq.s32.totalorder %s12, 1
    %p93 = scmp.ne.s32.totalorder %s88, %s90
    %p94 = scmp.eq.s32.totalorder %s12, 0
    %p95 = por %p93, %p94
    %p96 = scmp.ne.s32.totalorder %s88, %s90
    %p97 = scmp.eq.s32.totalorder %s17, 1
    %p98 = por %p96, %p97
    %p99 = scmp.ne.s32.totalorder %s90, %s91
    %p100 = scmp.eq.s32.totalorder %s17, 0
    %p101 = por %p99, %p100
    %p102 = scmp.ne.s32.totalorder %s90, %s91
    %p103 = scmp.eq.s32.totalorder %s18, 1
    %p104 = por %p102, %p103
    %p106 = scmp.ne.s32.totalorder %s91, %s105
    %p107 = scmp.eq.s32.totalorder %s18, 0
    %p108 = por %p106, %p107
    %s110 = sadd.s32 %s109, 1
    %p113 = scmp.eq.s32.totalorder %s12, 1
    %p114 = scmp.ne.s32.totalorder %s109, %s111
    %p115 = scmp.eq.s32.totalorder %s12, 0
    %p116 = por %p114, %p115
    %p117 = scmp.ne.s32.totalorder %s109, %s111
    %p118 = scmp.eq.s32.totalorder %s17, 1
    %p119 = por %p117, %p118
    %p120 = scmp.ne.s32.totalorder %s111, %s112
    %p121 = scmp.eq.s32.totalorder %s17, 0
    %p122 = por %p120, %p121
    %p123 = scmp.ne.s32.totalorder %s111, %s112
    %p124 = scmp.eq.s32.totalorder %s18, 1
    %p125 = por %p123, %p124
    %p127 = scmp.ne.s32.totalorder %s112, %s126
    %p128 = scmp.eq.s32.totalorder %s18, 0
    %p129 = por %p127, %p128
    %s131 = sadd.s32 %s130, 1
    %p134 = scmp.eq.s32.totalorder %s12, 1
    %p135 = scmp.ne.s32.totalorder %s130, %s132
    %p136 = scmp.eq.s32.totalorder %s12, 0
    %p137 = por %p135, %p136
    %p138 = scmp.ne.s32.totalorder %s130, %s132
    %p139 = scmp.eq.s32.totalorder %s17, 1
    %p140 = por %p138, %p139
    %p141 = scmp.ne.s32.totalorder %s132, %s133
    %p142 = scmp.eq.s32.totalorder %s17, 0
    %p143 = por %p141, %p142
    %p144 = scmp.ne.s32.totalorder %s132, %s133
    %p145 = scmp.eq.s32.totalorder %s18, 1
    %p146 = por %p144, %p145
    %p148 = scmp.ne.s32.totalorder %s133, %s147
    %p149 = scmp.eq.s32.totalorder %s18, 0
    %p150 = por %p148, %p149
    %s151 = ssub.s32 %s12, %s19
    %p152 = scmp.eq.s32.totalorder %s151, 0
    %s154 = sadd.s32 %s153, 1
    %s155 = scalar_select %p152, %s153, %s154
    %p158 = pneg %p152
    %p159 = scmp.eq.s32.totalorder %s12, 1
    %p160 = por %p158, %p159
    %p161 = scmp.ne.s32.totalorder %s153, %s156
    %p162 = scmp.eq.s32.totalorder %s12, 0
    %p163 = por %p161, %p162
    %p164 = scmp.ne.s32.totalorder %s153, %s156
    %p165 = scmp.eq.s32.totalorder %s17, 1
    %p166 = por %p164, %p165
    %p167 = scmp.ne.s32.totalorder %s156, %s157
    %p168 = scmp.eq.s32.totalorder %s17, 0
    %p169 = por %p167, %p168
    %p170 = scmp.ne.s32.totalorder %s156, %s157
    %p171 = scmp.eq.s32.totalorder %s18, 1
    %p172 = por %p170, %p171
    %p174 = scmp.ne.s32.totalorder %s157, %s173
    %p175 = scmp.eq.s32.totalorder %s18, 0
    %p176 = por %p174, %p175
    %p177 = scmp.le.s32.totalorder 1, %s12
    %p178 = scmp.lt.s32.totalorder %s12, 3
    %p179 = pnand %p177, %p178
    %p180 = pneg %p179
    // Predicated region
    $region9: #{pab_forward_nchw.1} parent=5 // pred_check
      _
    $region10: #{pab_forward_nchw.1} parent=5 // pred_check_branch
      %182 = sbr.rel (%p179) target = $region12
    $region11: #{pab_forward_nchw.1} parent=5 // pred_region
      %s183 = ssub.s32 %s12, 1
      // Predicated region
      $region13: #{pab_forward_nchw.1} parent=11 // pred_check
        %p184 = pneg %p59
      $region14: #{pab_forward_nchw.1} parent=11 // pred_check_branch
        %186 = sbr.rel (%p184) target = $region16
      $region15: #{pab_forward_nchw.1} parent=11 // pred_region
        _
      $region16: #{pab_forward_nchw.1} parent=11 // pred_fallthru
        _
      // Predicated region
      $region17: #{pab_forward_nchw.1} parent=11 // pred_check
        %p187 = pneg %p80
      $region18: #{pab_forward_nchw.1} parent=11 // pred_check_branch
        %189 = sbr.rel (%p187) target = $region20
      $region19: #{pab_forward_nchw.1} parent=11 // pred_region
        _
      $region20: #{pab_forward_nchw.1} parent=11 // pred_fallthru
        _
      // Predicated region
      $region21: #{pab_forward_nchw.1} parent=11 // pred_check
        %p190 = pneg %p101
      $region22: #{pab_forward_nchw.1} parent=11 // pred_check_branch
        %192 = sbr.rel (%p190) target = $region24
      $region23: #{pab_forward_nchw.1} parent=11 // pred_region
        _
      $region24: #{pab_forward_nchw.1} parent=11 // pred_fallthru
        _
      // Predicated region
      $region25: #{pab_forward_nchw.1} parent=11 // pred_check
        %p193 = pneg %p122
      $region26: #{pab_forward_nchw.1} parent=11 // pred_check_branch
        %195 = sbr.rel (%p193) target = $region28
      $region27: #{pab_forward_nchw.1} parent=11 // pred_region
        _
      $region28: #{pab_forward_nchw.1} parent=11 // pred_fallthru
        _
      // Predicated region
      $region29: #{pab_forward_nchw.1} parent=11 // pred_check
        %p196 = pneg %p143
      $region30: #{pab_forward_nchw.1} parent=11 // pred_check_branch
        %198 = sbr.rel (%p196) target = $region32
      $region31: #{pab_forward_nchw.1} parent=11 // pred_region
        _
      $region32: #{pab_forward_nchw.1} parent=11 // pred_fallthru
        _
    $region12: #{pab_forward_nchw.1} parent=5 // pred_fallthru
      _
    %p199 = scmp.lt.s32.totalorder %s12, 2
    // Predicated region
    $region33: #{pab_forward_nchw.1} parent=5 // pred_check
      %p200 = pneg %p199
    $region34: #{pab_forward_nchw.1} parent=5 // pred_check_branch
      %202 = sbr.rel (%p200) target = $region36
    $region35: #{pab_forward_nchw.1} parent=5 // pred_region
      // Predicated region
      $region37: #{pab_forward_nchw.1} parent=35 // pred_check
        %p203 = pneg %p32
      $region38: #{pab_forward_nchw.1} parent=35 // pred_check_branch
        %205 = sbr.rel (%p203) target = $region40
      $region39: #{pab_forward_nchw.1} parent=35 // pred_region
        %s206 = smul.u32 2, %s12
        %p207 = scmp.lt.s32.totalorder %s206, 3
        %s208 = scalar_select %p207, %s206, 3
        %s209 = smul.addr %s208, 8
        %s210 = smul.addr %s209, 8
        %s211 = scalar_lea.vmem %s0, %s210
        %s212 = smul.u32 2, %s12
      $region40: #{pab_forward_nchw.1} parent=35 // pred_fallthru
        _
    $region36: #{pab_forward_nchw.1} parent=5 // pred_fallthru
      _
    %p213 = scmp.le.s32.totalorder 1, %s12
    %p214 = scmp.lt.s32.totalorder %s12, 3
    %p215 = pnand %p213, %p214
    %p216 = pneg %p215
    // Predicated region
    $region41: #{pab_forward_nchw.1} parent=5 // pred_check
      _
    $region42: #{pab_forward_nchw.1} parent=5 // pred_check_branch
      %218 = sbr.rel (%p215) target = $region44
    $region43: #{pab_forward_nchw.1} parent=5 // pred_region
      %s219 = ssub.s32 %s12, 1
      %s220 = smul.u32 2, %s17
      %p221 = scmp.lt.s32.totalorder %s220, 3
      %s222 = scalar_select %p221, %s220, 3
      %s223 = smul.addr %s222, 8
      %s224 = smul.addr %s223, 8
      %s225 = scalar_lea.vmem %s0, %s224
      %p226 = pneg %p38
      %p227 = pneg %p35
      %p228 = pneg %p59
      %p229 = pneg %p56
      %p230 = pneg %p80
      %p231 = pneg %p77
      %p232 = pneg %p101
      %p233 = pneg %p98
      %p234 = pneg %p122
      %p235 = pneg %p119
      %p236 = pneg %p143
      %p237 = pneg %p140
      %p238 = pneg %p169
      %p239 = pneg %p166
      %s240 = smul.u32 2, %s17
      %p241 = scmp.lt.s32.totalorder %s240, 3
      %s242 = scalar_select %p241, %s240, 3
      %s243 = smul.addr %s242, 8
      %s244 = smul.addr %s243, 8
      %s245 = scalar_lea.vmem %s6, %s244
      %s246 = smul.u32 2, %s17
      %p247 = scmp.lt.s32.totalorder %s246, 3
      %s248 = scalar_select %p247, %s246, 3
      %s249 = smul.addr %s248, 8
      %s250 = smul.addr %s249, 8
      %s251 = scalar_lea.vmem %s0, %s250
      %s252 = smul.u32 2, %s17
      %s253 = smul.u32 2, %s17
      %p254 = scmp.lt.s32.totalorder %s253, 3
      %s255 = scalar_select %p254, %s253, 3
      %s256 = smul.addr %s255, 8
      %s257 = smul.addr %s256, 8
      %s258 = scalar_lea.vmem %s6, %s257
      %s259 = smul.u32 2, %s17
      %v261 = vld [vmem:[%s251] sm:$0xff]
      %v262 = vld [vmem:[%s251 + $0x8] sm:$0xff]
      %v263 = vld [vmem:[%s251 + $0x10] sm:$0xff]
      %v264 = vld [vmem:[%s251 + $0x18] sm:$0xff]
      %v265 = vld [vmem:[%s251 + $0x20] sm:$0xff]
      %v266 = vld [vmem:[%s251 + $0x28] sm:$0xff]
      %v267 = vld [vmem:[%s251 + $0x30] sm:$0xff]
      %v268 = vld [vmem:[%s251 + $0x38] sm:$0xff]
      %269 = vrot.lane.b32.xlu0 %v261, 17
      %v270 = vpop.permute.xlu0 %269
      %271 = vrot.lane.b32.xlu0 %v263, 17
      %v272 = vpop.permute.xlu0 %271
      %273 = vrot.lane.b32.xlu0 %v265, 17
      %v274 = vpop.permute.xlu0 %273
      %275 = vrot.lane.b32.xlu0 %v267, 17
      %v276 = vpop.permute.xlu0 %275
      %277 = vrot.lane.b32.xlu0 %v262, 17
      %v278 = vpop.permute.xlu0 %277
      %279 = vrot.lane.b32.xlu0 %v264, 17
      %v280 = vpop.permute.xlu0 %279
      %281 = vrot.lane.b32.xlu0 %v266, 17
      %v282 = vpop.permute.xlu0 %281
      %283 = vrot.lane.b32.xlu0 %v268, 17
      %v284 = vpop.permute.xlu0 %283
      %v285 = vlaneseq
      %v286 = vand.u32 %v285, 127
      %vm287 = vcmp.lt.s32.totalorder %v286, 17
      %v288 = vsel %vm287, %v270, %v278
      %v289 = vsel %vm287, %v272, %v280
      %v290 = vsel %vm287, %v274, %v282
      %v291 = vsel %vm287, %v276, %v284
      %v292 = vsel %vm287, %v278, %v270
      %v293 = vsel %vm287, %v280, %v272
      %v294 = vsel %vm287, %v282, %v274
      %v295 = vsel %vm287, %v284, %v276
      %v296 = vld [vmem:[%s1] ss:$8 sm:$0x3]
      %v298 = vperm.slane %v296, 0
      %v299 = vperm.slane %v296, 1
      %v302 = vmul.f32 %v292, %v298
      %v303 = vmul.f32 %v288, %v299
      %v304 = vmul.f32 %v293, %v298
      %v305 = vmul.f32 %v289, %v299
      %v306 = vmul.f32 %v294, %v298
      %v307 = vmul.f32 %v290, %v299
      %v308 = vmul.f32 %v295, %v298
      %v309 = vmul.f32 %v291, %v299
      %v310 = vpack.c.bf16 %v303, %v302
      %v311 = vpack.c.bf16 %v305, %v304
      %v312 = vpack.c.bf16 %v307, %v306
      %v313 = vpack.c.bf16 %v309, %v308
      %314 = vst [vmem:[#allocation2] sm:$0xff] %v310
      %315 = vst [vmem:[#allocation2 + $0x10] sm:$0xff] %v311
      %316 = vst [vmem:[#allocation2 + $0x20] sm:$0xff] %v312
      %317 = vst [vmem:[#allocation2 + $0x30] sm:$0xff] %v313
      %318 = vrot.lane.b32.xlu0 %v261, 16
      %v319 = vpop.permute.xlu0 %318
      %320 = vrot.lane.b32.xlu0 %v263, 16
      %v321 = vpop.permute.xlu0 %320
      %322 = vrot.lane.b32.xlu0 %v265, 16
      %v323 = vpop.permute.xlu0 %322
      %324 = vrot.lane.b32.xlu0 %v267, 16
      %v325 = vpop.permute.xlu0 %324
      %326 = vrot.lane.b32.xlu0 %v262, 16
      %v327 = vpop.permute.xlu0 %326
      %328 = vrot.lane.b32.xlu0 %v264, 16
      %v329 = vpop.permute.xlu0 %328
      %330 = vrot.lane.b32.xlu0 %v266, 16
      %v331 = vpop.permute.xlu0 %330
      %332 = vrot.lane.b32.xlu0 %v268, 16
      %v333 = vpop.permute.xlu0 %332
      %vm334 = vcmp.lt.s32.totalorder %v286, 16
      %v335 = vsel %vm334, %v319, %v327
      %v336 = vsel %vm334, %v321, %v329
      %v337 = vsel %vm334, %v323, %v331
      %v338 = vsel %vm334, %v325, %v333
      %v339 = vsel %vm334, %v327, %v319
      %v340 = vsel %vm334, %v329, %v321
      %v341 = vsel %vm334, %v331, %v323
      %v342 = vsel %vm334, %v333, %v325
      %s343 = scalar_lea.vmem %s1, 1
      %v344 = vld [vmem:[%s343] ss:$8 sm:$0x3]
      %v346 = vperm.slane %v344, 0
      %v347 = vperm.slane %v344, 1
      %v350 = vmul.f32 %v339, %v346
      %v351 = vmul.f32 %v335, %v347
      %v352 = vmul.f32 %v340, %v346
      %v353 = vmul.f32 %v336, %v347
      %v354 = vmul.f32 %v341, %v346
      %v355 = vmul.f32 %v337, %v347
      %v356 = vmul.f32 %v342, %v346
      %v357 = vmul.f32 %v338, %v347
      %v358 = vpack.c.bf16 %v351, %v350
      %v359 = vpack.c.bf16 %v353, %v352
      %v360 = vpack.c.bf16 %v355, %v354
      %v361 = vpack.c.bf16 %v357, %v356
      %362 = vst [vmem:[#allocation2 + $0x40] sm:$0xff] %v358
      %363 = vst [vmem:[#allocation2 + $0x50] sm:$0xff] %v359
      %364 = vst [vmem:[#allocation2 + $0x60] sm:$0xff] %v360
      %365 = vst [vmem:[#allocation2 + $0x70] sm:$0xff] %v361
      %366 = vrot.lane.b32.xlu0 %v261, 15
      %v367 = vpop.permute.xlu0 %366
      %368 = vrot.lane.b32.xlu0 %v263, 15
      %v369 = vpop.permute.xlu0 %368
      %370 = vrot.lane.b32.xlu0 %v265, 15
      %v371 = vpop.permute.xlu0 %370
      %372 = vrot.lane.b32.xlu0 %v267, 15
      %v373 = vpop.permute.xlu0 %372
      %374 = vrot.lane.b32.xlu0 %v262, 15
      %v375 = vpop.permute.xlu0 %374
      %376 = vrot.lane.b32.xlu0 %v264, 15
      %v377 = vpop.permute.xlu0 %376
      %378 = vrot.lane.b32.xlu0 %v266, 15
      %v379 = vpop.permute.xlu0 %378
      %380 = vrot.lane.b32.xlu0 %v268, 15
      %v381 = vpop.permute.xlu0 %380
      %vm382 = vcmp.lt.s32.totalorder %v286, 15
      %v383 = vsel %vm382, %v367, %v375
      %v384 = vsel %vm382, %v369, %v377
      %v385 = vsel %vm382, %v371, %v379
      %v386 = vsel %vm382, %v373, %v381
      %v387 = vsel %vm382, %v375, %v367
      %v388 = vsel %vm382, %v377, %v369
      %v389 = vsel %vm382, %v379, %v371
      %v390 = vsel %vm382, %v381, %v373
      %s391 = scalar_lea.vmem %s1, 2
      %v392 = vld [vmem:[%s391] ss:$8 sm:$0x3]
      %v394 = vperm.slane %v392, 0
      %v395 = vperm.slane %v392, 1
      %v398 = vmul.f32 %v387, %v394
      %v399 = vmul.f32 %v383, %v395
      %v400 = vmul.f32 %v388, %v394
      %v401 = vmul.f32 %v384, %v395
      %v402 = vmul.f32 %v389, %v394
      %v403 = vmul.f32 %v385, %v395
      %v404 = vmul.f32 %v390, %v394
      %v405 = vmul.f32 %v386, %v395
      %v406 = vpack.c.bf16 %v399, %v398
      %v407 = vpack.c.bf16 %v401, %v400
      %v408 = vpack.c.bf16 %v403, %v402
      %v409 = vpack.c.bf16 %v405, %v404
      %410 = vst [vmem:[#allocation2 + $0x80] sm:$0xff] %v406
      %411 = vst [vmem:[#allocation2 + $0x90] sm:$0xff] %v407
      %412 = vst [vmem:[#allocation2 + $0xa0] sm:$0xff] %v408
      %413 = vst [vmem:[#allocation2 + $0xb0] sm:$0xff] %v409
      %414 = vrot.lane.b32.xlu0 %v261, 1
      %v415 = vpop.permute.xlu0 %414
      %416 = vrot.lane.b32.xlu0 %v263, 1
      %v417 = vpop.permute.xlu0 %416
      %418 = vrot.lane.b32.xlu0 %v265, 1
      %v419 = vpop.permute.xlu0 %418
      %420 = vrot.lane.b32.xlu0 %v267, 1
      %v421 = vpop.permute.xlu0 %420
      %422 = vrot.lane.b32.xlu0 %v262, 1
      %v423 = vpop.permute.xlu0 %422
      %424 = vrot.lane.b32.xlu0 %v264, 1
      %v425 = vpop.permute.xlu0 %424
      %426 = vrot.lane.b32.xlu0 %v266, 1
      %v427 = vpop.permute.xlu0 %426
      %428 = vrot.lane.b32.xlu0 %v268, 1
      %v429 = vpop.permute.xlu0 %428
      %vm430 = vcmp.lt.s32.totalorder %v286, 1
      %v431 = vsel %vm430, %v415, %v423
      %v432 = vsel %vm430, %v417, %v425
      %v433 = vsel %vm430, %v419, %v427
      %v434 = vsel %vm430, %v421, %v429
      %v435 = vsel %vm430, %v423, %v415
      %v436 = vsel %vm430, %v425, %v417
      %v437 = vsel %vm430, %v427, %v419
      %v438 = vsel %vm430, %v429, %v421
      %s439 = scalar_lea.vmem %s1, 3
      %v440 = vld [vmem:[%s439] ss:$8 sm:$0x3]
      %v442 = vperm.slane %v440, 0
      %v443 = vperm.slane %v440, 1
      %v446 = vmul.f32 %v435, %v442
      %v447 = vmul.f32 %v431, %v443
      %v448 = vmul.f32 %v436, %v442
      %v449 = vmul.f32 %v432, %v443
      %v450 = vmul.f32 %v437, %v442
      %v451 = vmul.f32 %v433, %v443
      %v452 = vmul.f32 %v438, %v442
      %v453 = vmul.f32 %v434, %v443
      %v454 = vpack.c.bf16 %v447, %v446
      %v455 = vpack.c.bf16 %v449, %v448
      %v456 = vpack.c.bf16 %v451, %v450
      %v457 = vpack.c.bf16 %v453, %v452
      %458 = vst [vmem:[#allocation2 + $0xc0] sm:$0xff] %v454
      %459 = vst [vmem:[#allocation2 + $0xd0] sm:$0xff] %v455
      %460 = vst [vmem:[#allocation2 + $0xe0] sm:$0xff] %v456
      %461 = vst [vmem:[#allocation2 + $0xf0] sm:$0xff] %v457
      %v462 = vpack.c.bf16 %v262, %v261
      %v463 = vpack.c.bf16 %v264, %v263
      %v464 = vpack.c.bf16 %v266, %v265
      %v465 = vpack.c.bf16 %v268, %v267
      %466 = vst [vmem:[#allocation2 + $0x100] sm:$0xff] %v462
      %467 = vst [vmem:[#allocation2 + $0x110] sm:$0xff] %v463
      %468 = vst [vmem:[#allocation2 + $0x120] sm:$0xff] %v464
      %469 = vst [vmem:[#allocation2 + $0x130] sm:$0xff] %v465
      %470 = vrot.lane.b32.xlu0 %v261, 127
      %v471 = vpop.permute.xlu0 %470
      %472 = vrot.lane.b32.xlu0 %v263, 127
      %v473 = vpop.permute.xlu0 %472
      %474 = vrot.lane.b32.xlu0 %v265, 127
      %v475 = vpop.permute.xlu0 %474
      %476 = vrot.lane.b32.xlu0 %v267, 127
      %v477 = vpop.permute.xlu0 %476
      %478 = vrot.lane.b32.xlu0 %v262, 127
      %v479 = vpop.permute.xlu0 %478
      %480 = vrot.lane.b32.xlu0 %v264, 127
      %v481 = vpop.permute.xlu0 %480
      %482 = vrot.lane.b32.xlu0 %v266, 127
      %v483 = vpop.permute.xlu0 %482
      %484 = vrot.lane.b32.xlu0 %v268, 127
      %v485 = vpop.permute.xlu0 %484
      %vm486 = vcmp.lt.s32.totalorder %v286, 127
      %v487 = vsel %vm486, %v471, %v479
      %v488 = vsel %vm486, %v473, %v481
      %v489 = vsel %vm486, %v475, %v483
      %v490 = vsel %vm486, %v477, %v485
      %v491 = vsel %vm486, %v479, %v471
      %v492 = vsel %vm486, %v481, %v473
      %v493 = vsel %vm486, %v483, %v475
      %v494 = vsel %vm486, %v485, %v477
      %s495 = scalar_lea.vmem %s1, 5
      %v496 = vld [vmem:[%s495] ss:$8 sm:$0x3]
      %v498 = vperm.slane %v496, 0
      %v499 = vperm.slane %v496, 1
      %v502 = vmul.f32 %v487, %v498
      %v503 = vmul.f32 %v491, %v499
      %v504 = vmul.f32 %v488, %v498
      %v505 = vmul.f32 %v492, %v499
      %v506 = vmul.f32 %v489, %v498
      %v507 = vmul.f32 %v493, %v499
      %v508 = vmul.f32 %v490, %v498
      %v509 = vmul.f32 %v494, %v499
      %v510 = vpack.c.bf16 %v503, %v502
      %v511 = vpack.c.bf16 %v505, %v504
      %v512 = vpack.c.bf16 %v507, %v506
      %v513 = vpack.c.bf16 %v509, %v508
      %514 = vst [vmem:[#allocation2 + $0x140] sm:$0xff] %v510
      %515 = vst [vmem:[#allocation2 + $0x150] sm:$0xff] %v511
      %516 = vst [vmem:[#allocation2 + $0x160] sm:$0xff] %v512
      %517 = vst [vmem:[#allocation2 + $0x170] sm:$0xff] %v513
      %518 = vrot.lane.b32.xlu0 %v261, 113
      %v519 = vpop.permute.xlu0 %518
      %520 = vrot.lane.b32.xlu0 %v263, 113
      %v521 = vpop.permute.xlu0 %520
      %522 = vrot.lane.b32.xlu0 %v265, 113
      %v523 = vpop.permute.xlu0 %522
      %524 = vrot.lane.b32.xlu0 %v267, 113
      %v525 = vpop.permute.xlu0 %524
      %526 = vrot.lane.b32.xlu0 %v262, 113
      %v527 = vpop.permute.xlu0 %526
      %528 = vrot.lane.b32.xlu0 %v264, 113
      %v529 = vpop.permute.xlu0 %528
      %530 = vrot.lane.b32.xlu0 %v266, 113
      %v531 = vpop.permute.xlu0 %530
      %532 = vrot.lane.b32.xlu0 %v268, 113
      %v533 = vpop.permute.xlu0 %532
      %vm534 = vcmp.lt.s32.totalorder %v286, 113
      %v535 = vsel %vm534, %v519, %v527
      %v536 = vsel %vm534, %v521, %v529
      %v537 = vsel %vm534, %v523, %v531
      %v538 = vsel %vm534, %v525, %v533
      %v539 = vsel %vm534, %v527, %v519
      %v540 = vsel %vm534, %v529, %v521
      %v541 = vsel %vm534, %v531, %v523
      %v542 = vsel %vm534, %v533, %v525
      %s543 = scalar_lea.vmem %s1, 6
      %v544 = vld [vmem:[%s543] ss:$8 sm:$0x3]
      %v546 = vperm.slane %v544, 0
      %v547 = vperm.slane %v544, 1
      %v550 = vmul.f32 %v535, %v546
      %v551 = vmul.f32 %v539, %v547
      %v552 = vmul.f32 %v536, %v546
      %v553 = vmul.f32 %v540, %v547
      %v554 = vmul.f32 %v537, %v546
      %v555 = vmul.f32 %v541, %v547
      %v556 = vmul.f32 %v538, %v546
      %v557 = vmul.f32 %v542, %v547
      %v558 = vpack.c.bf16 %v551, %v550
      %v559 = vpack.c.bf16 %v553, %v552
      %v560 = vpack.c.bf16 %v555, %v554
      %v561 = vpack.c.bf16 %v557, %v556
      %562 = vst [vmem:[#allocation2 + $0x180] sm:$0xff] %v558
      %563 = vst [vmem:[#allocation2 + $0x190] sm:$0xff] %v559
      %564 = vst [vmem:[#allocation2 + $0x1a0] sm:$0xff] %v560
      %565 = vst [vmem:[#allocation2 + $0x1b0] sm:$0xff] %v561
      %566 = vrot.lane.b32.xlu0 %v261, 112
      %v567 = vpop.permute.xlu0 %566
      %568 = vrot.lane.b32.xlu0 %v263, 112
      %v569 = vpop.permute.xlu0 %568
      %570 = vrot.lane.b32.xlu0 %v265, 112
      %v571 = vpop.permute.xlu0 %570
      %572 = vrot.lane.b32.xlu0 %v267, 112
      %v573 = vpop.permute.xlu0 %572
      %574 = vrot.lane.b32.xlu0 %v262, 112
      %v575 = vpop.permute.xlu0 %574
      %576 = vrot.lane.b32.xlu0 %v264, 112
      %v577 = vpop.permute.xlu0 %576
      %578 = vrot.lane.b32.xlu0 %v266, 112
      %v579 = vpop.permute.xlu0 %578
      %580 = vrot.lane.b32.xlu0 %v268, 112
      %v581 = vpop.permute.xlu0 %580
      %vm582 = vcmp.lt.s32.totalorder %v286, 112
      %v583 = vsel %vm582, %v567, %v575
      %v584 = vsel %vm582, %v569, %v577
      %v585 = vsel %vm582, %v571, %v579
      %v586 = vsel %vm582, %v573, %v581
      %v587 = vsel %vm582, %v575, %v567
      %v588 = vsel %vm582, %v577, %v569
      %v589 = vsel %vm582, %v579, %v571
      %v590 = vsel %vm582, %v581, %v573
      %s591 = scalar_lea.vmem %s1, 7
      %v592 = vld [vmem:[%s591] ss:$8 sm:$0x3]
      %v594 = vperm.slane %v592, 0
      %v595 = vperm.slane %v592, 1
      %v598 = vmul.f32 %v583, %v594
      %v599 = vmul.f32 %v587, %v595
      %v600 = vmul.f32 %v584, %v594
      %v601 = vmul.f32 %v588, %v595
      %v602 = vmul.f32 %v585, %v594
      %v603 = vmul.f32 %v589, %v595
      %v604 = vmul.f32 %v586, %v594
      %v605 = vmul.f32 %v590, %v595
      %v606 = vpack.c.bf16 %v599, %v598
      %v607 = vpack.c.bf16 %v601, %v600
      %v608 = vpack.c.bf16 %v603, %v602
      %v609 = vpack.c.bf16 %v605, %v604
      %610 = vst [vmem:[#allocation2 + $0x1c0] sm:$0xff] %v606
      %611 = vst [vmem:[#allocation2 + $0x1d0] sm:$0xff] %v607
      %612 = vst [vmem:[#allocation2 + $0x1e0] sm:$0xff] %v608
      %613 = vst [vmem:[#allocation2 + $0x1f0] sm:$0xff] %v609
      %614 = vrot.lane.b32.xlu0 %v261, 111
      %v615 = vpop.permute.xlu0 %614
      %616 = vrot.lane.b32.xlu0 %v263, 111
      %v617 = vpop.permute.xlu0 %616
      %618 = vrot.lane.b32.xlu0 %v265, 111
      %v619 = vpop.permute.xlu0 %618
      %620 = vrot.lane.b32.xlu0 %v267, 111
      %v621 = vpop.permute.xlu0 %620
      %622 = vrot.lane.b32.xlu0 %v262, 111
      %v623 = vpop.permute.xlu0 %622
      %624 = vrot.lane.b32.xlu0 %v264, 111
      %v625 = vpop.permute.xlu0 %624
      %626 = vrot.lane.b32.xlu0 %v266, 111
      %v627 = vpop.permute.xlu0 %626
      %628 = vrot.lane.b32.xlu0 %v268, 111
      %v629 = vpop.permute.xlu0 %628
      %vm630 = vcmp.lt.s32.totalorder %v286, 111
      %v631 = vsel %vm630, %v615, %v623
      %v632 = vsel %vm630, %v617, %v625
      %v633 = vsel %vm630, %v619, %v627
      %v634 = vsel %vm630, %v621, %v629
      %v635 = vsel %vm630, %v623, %v615
      %v636 = vsel %vm630, %v625, %v617
      %v637 = vsel %vm630, %v627, %v619
      %v638 = vsel %vm630, %v629, %v621
      %s639 = scalar_lea.vmem %s1, 16
      %v640 = vld [vmem:[%s639] ss:$8 sm:$0x3]
      %v642 = vperm.slane %v640, 0
      %v643 = vperm.slane %v640, 1
      %v646 = vmul.f32 %v631, %v642
      %v647 = vmul.f32 %v635, %v643
      %v648 = vmul.f32 %v632, %v642
      %v649 = vmul.f32 %v636, %v643
      %v650 = vmul.f32 %v633, %v642
      %v651 = vmul.f32 %v637, %v643
      %v652 = vmul.f32 %v634, %v642
      %v653 = vmul.f32 %v638, %v643
      %v654 = vpack.c.bf16 %v647, %v646
      %v655 = vpack.c.bf16 %v649, %v648
      %v656 = vpack.c.bf16 %v651, %v650
      %v657 = vpack.c.bf16 %v653, %v652
      %658 = vst [vmem:[#allocation2 + $0x200] sm:$0xff] %v654
      %659 = vst [vmem:[#allocation2 + $0x210] sm:$0xff] %v655
      %660 = vst [vmem:[#allocation2 + $0x220] sm:$0xff] %v656
      %661 = vst [vmem:[#allocation2 + $0x230] sm:$0xff] %v657
      %s662 = scalar_lea.vmem %s251, 64
      %v663 = vld [vmem:[%s662] sm:$0xff]
      %v664 = vld [vmem:[%s662 + $0x8] sm:$0xff]
      %v665 = vld [vmem:[%s662 + $0x10] sm:$0xff]
      %v666 = vld [vmem:[%s662 + $0x18] sm:$0xff]
      %v667 = vld [vmem:[%s662 + $0x20] sm:$0xff]
      %v668 = vld [vmem:[%s662 + $0x28] sm:$0xff]
      %v669 = vld [vmem:[%s662 + $0x30] sm:$0xff]
      %v670 = vld [vmem:[%s662 + $0x38] sm:$0xff]
      %671 = vrot.lane.b32.xlu0 %v663, 17
      %v672 = vpop.permute.xlu0 %671
      %673 = vrot.lane.b32.xlu0 %v665, 17
      %v674 = vpop.permute.xlu0 %673
      %675 = vrot.lane.b32.xlu0 %v667, 17
      %v676 = vpop.permute.xlu0 %675
      %677 = vrot.lane.b32.xlu0 %v669, 17
      %v678 = vpop.permute.xlu0 %677
      %679 = vrot.lane.b32.xlu0 %v664, 17
      %v680 = vpop.permute.xlu0 %679
      %681 = vrot.lane.b32.xlu0 %v666, 17
      %v682 = vpop.permute.xlu0 %681
      %683 = vrot.lane.b32.xlu0 %v668, 17
      %v684 = vpop.permute.xlu0 %683
      %685 = vrot.lane.b32.xlu0 %v670, 17
      %v686 = vpop.permute.xlu0 %685
      %v687 = vsel %vm287, %v672, %v680
      %v688 = vsel %vm287, %v674, %v682
      %v689 = vsel %vm287, %v676, %v684
      %v690 = vsel %vm287, %v678, %v686
      %v691 = vsel %vm287, %v680, %v672
      %v692 = vsel %vm287, %v682, %v674
      %v693 = vsel %vm287, %v684, %v676
      %v694 = vsel %vm287, %v686, %v678
      %v695 = vld [vmem:[%s1] ss:$8 sm:$0x3]
      %v697 = vperm.slane %v695, 0
      %v698 = vperm.slane %v695, 1
      %v701 = vmul.f32 %v691, %v697
      %v702 = vmul.f32 %v687, %v698
      %v703 = vmul.f32 %v692, %v697
      %v704 = vmul.f32 %v688, %v698
      %v705 = vmul.f32 %v693, %v697
      %v706 = vmul.f32 %v689, %v698
      %v707 = vmul.f32 %v694, %v697
      %v708 = vmul.f32 %v690, %v698
      %v709 = vpack.c.bf16 %v702, %v701
      %v710 = vpack.c.bf16 %v704, %v703
      %v711 = vpack.c.bf16 %v706, %v705
      %v712 = vpack.c.bf16 %v708, %v707
      %713 = vst [vmem:[#allocation2 + $0x8] sm:$0xff] %v709
      %714 = vst [vmem:[#allocation2 + $0x18] sm:$0xff] %v710
      %715 = vst [vmem:[#allocation2 + $0x28] sm:$0xff] %v711
      %716 = vst [vmem:[#allocation2 + $0x38] sm:$0xff] %v712
      %717 = vrot.lane.b32.xlu0 %v663, 16
      %v718 = vpop.permute.xlu0 %717
      %719 = vrot.lane.b32.xlu0 %v665, 16
      %v720 = vpop.permute.xlu0 %719
      %721 = vrot.lane.b32.xlu0 %v667, 16
      %v722 = vpop.permute.xlu0 %721
      %723 = vrot.lane.b32.xlu0 %v669, 16
      %v724 = vpop.permute.xlu0 %723
      %725 = vrot.lane.b32.xlu0 %v664, 16
      %v726 = vpop.permute.xlu0 %725
      %727 = vrot.lane.b32.xlu0 %v666, 16
      %v728 = vpop.permute.xlu0 %727
      %729 = vrot.lane.b32.xlu0 %v668, 16
      %v730 = vpop.permute.xlu0 %729
      %731 = vrot.lane.b32.xlu0 %v670, 16
      %v732 = vpop.permute.xlu0 %731
      %v733 = vsel %vm334, %v718, %v726
      %v734 = vsel %vm334, %v720, %v728
      %v735 = vsel %vm334, %v722, %v730
      %v736 = vsel %vm334, %v724, %v732
      %v737 = vsel %vm334, %v726, %v718
      %v738 = vsel %vm334, %v728, %v720
      %v739 = vsel %vm334, %v730, %v722
      %v740 = vsel %vm334, %v732, %v724
      %v741 = vld [vmem:[%s343] ss:$8 sm:$0x3]
      %v743 = vperm.slane %v741, 0
      %v744 = vperm.slane %v741, 1
      %v747 = vmul.f32 %v737, %v743
      %v748 = vmul.f32 %v733, %v744
      %v749 = vmul.f32 %v738, %v743
      %v750 = vmul.f32 %v734, %v744
      %v751 = vmul.f32 %v739, %v743
      %v752 = vmul.f32 %v735, %v744
      %v753 = vmul.f32 %v740, %v743
      %v754 = vmul.f32 %v736, %v744
      %v755 = vpack.c.bf16 %v748, %v747
      %v756 = vpack.c.bf16 %v750, %v749
      %v757 = vpack.c.bf16 %v752, %v751
      %v758 = vpack.c.bf16 %v754, %v753
      %759 = vst [vmem:[#allocation2 + $0x48] sm:$0xff] %v755
      %760 = vst [vmem:[#allocation2 + $0x58] sm:$0xff] %v756
      %761 = vst [vmem:[#allocation2 + $0x68] sm:$0xff] %v757
      %762 = vst [vmem:[#allocation2 + $0x78] sm:$0xff] %v758
      %763 = vrot.lane.b32.xlu0 %v663, 15
      %v764 = vpop.permute.xlu0 %763
      %765 = vrot.lane.b32.xlu0 %v665, 15
      %v766 = vpop.permute.xlu0 %765
      %767 = vrot.lane.b32.xlu0 %v667, 15
      %v768 = vpop.permute.xlu0 %767
      %769 = vrot.lane.b32.xlu0 %v669, 15
      %v770 = vpop.permute.xlu0 %769
      %771 = vrot.lane.b32.xlu0 %v664, 15
      %v772 = vpop.permute.xlu0 %771
      %773 = vrot.lane.b32.xlu0 %v666, 15
      %v774 = vpop.permute.xlu0 %773
      %775 = vrot.lane.b32.xlu0 %v668, 15
      %v776 = vpop.permute.xlu0 %775
      %777 = vrot.lane.b32.xlu0 %v670, 15
      %v778 = vpop.permute.xlu0 %777
      %v779 = vsel %vm382, %v764, %v772
      %v780 = vsel %vm382, %v766, %v774
      %v781 = vsel %vm382, %v768, %v776
      %v782 = vsel %vm382, %v770, %v778
      %v783 = vsel %vm382, %v772, %v764
      %v784 = vsel %vm382, %v774, %v766
      %v785 = vsel %vm382, %v776, %v768
      %v786 = vsel %vm382, %v778, %v770
      %v787 = vld [vmem:[%s391] ss:$8 sm:$0x3]
      %v789 = vperm.slane %v787, 0
      %v790 = vperm.slane %v787, 1
      %v793 = vmul.f32 %v783, %v789
      %v794 = vmul.f32 %v779, %v790
      %v795 = vmul.f32 %v784, %v789
      %v796 = vmul.f32 %v780, %v790
      %v797 = vmul.f32 %v785, %v789
      %v798 = vmul.f32 %v781, %v790
      %v799 = vmul.f32 %v786, %v789
      %v800 = vmul.f32 %v782, %v790
      %v801 = vpack.c.bf16 %v794, %v793
      %v802 = vpack.c.bf16 %v796, %v795
      %v803 = vpack.c.bf16 %v798, %v797
      %v804 = vpack.c.bf16 %v800, %v799
      %805 = vst [vmem:[#allocation2 + $0x88] sm:$0xff] %v801
      %806 = vst [vmem:[#allocation2 + $0x98] sm:$0xff] %v802
      %807 = vst [vmem:[#allocation2 + $0xa8] sm:$0xff] %v803
      %808 = vst [vmem:[#allocation2 + $0xb8] sm:$0xff] %v804
      %809 = vrot.lane.b32.xlu0 %v663, 1
      %v810 = vpop.permute.xlu0 %809
      %811 = vrot.lane.b32.xlu0 %v665, 1
      %v812 = vpop.permute.xlu0 %811
      %813 = vrot.lane.b32.xlu0 %v667, 1
      %v814 = vpop.permute.xlu0 %813
      %815 = vrot.lane.b32.xlu0 %v669, 1
      %v816 = vpop.permute.xlu0 %815
      %817 = vrot.lane.b32.xlu0 %v664, 1
      %v818 = vpop.permute.xlu0 %817
      %819 = vrot.lane.b32.xlu0 %v666, 1
      %v820 = vpop.permute.xlu0 %819
      %821 = vrot.lane.b32.xlu0 %v668, 1
      %v822 = vpop.permute.xlu0 %821
      %823 = vrot.lane.b32.xlu0 %v670, 1
      %v824 = vpop.permute.xlu0 %823
      %v825 = vsel %vm430, %v810, %v818
      %v826 = vsel %vm430, %v812, %v820
      %v827 = vsel %vm430, %v814, %v822
      %v828 = vsel %vm430, %v816, %v824
      %v829 = vsel %vm430, %v818, %v810
      %v830 = vsel %vm430, %v820, %v812
      %v831 = vsel %vm430, %v822, %v814
      %v832 = vsel %vm430, %v824, %v816
      %v833 = vld [vmem:[%s439] ss:$8 sm:$0x3]
      %v835 = vperm.slane %v833, 0
      %v836 = vperm.slane %v833, 1
      %v839 = vmul.f32 %v829, %v835
      %v840 = vmul.f32 %v825, %v836
      %v841 = vmul.f32 %v830, %v835
      %v842 = vmul.f32 %v826, %v836
      %v843 = vmul.f32 %v831, %v835
      %v844 = vmul.f32 %v827, %v836
      %v845 = vmul.f32 %v832, %v835
      %v846 = vmul.f32 %v828, %v836
      %v847 = vpack.c.bf16 %v840, %v839
      %v848 = vpack.c.bf16 %v842, %v841
      %v849 = vpack.c.bf16 %v844, %v843
      %v850 = vpack.c.bf16 %v846, %v845
      %851 = vst [vmem:[#allocation2 + $0xc8] sm:$0xff] %v847
      %852 = vst [vmem:[#allocation2 + $0xd8] sm:$0xff] %v848
      %853 = vst [vmem:[#allocation2 + $0xe8] sm:$0xff] %v849
      %854 = vst [vmem:[#allocation2 + $0xf8] sm:$0xff] %v850
      %v855 = vpack.c.bf16 %v664, %v663
      %v856 = vpack.c.bf16 %v666, %v665
      %v857 = vpack.c.bf16 %v668, %v667
      %v858 = vpack.c.bf16 %v670, %v669
      %859 = vst [vmem:[#allocation2 + $0x108] sm:$0xff] %v855
      %860 = vst [vmem:[#allocation2 + $0x118] sm:$0xff] %v856
      %861 = vst [vmem:[#allocation2 + $0x128] sm:$0xff] %v857
      %862 = vst [vmem:[#allocation2 + $0x138] sm:$0xff] %v858
      %863 = vrot.lane.b32.xlu0 %v663, 127
      %v864 = vpop.permute.xlu0 %863
      %865 = vrot.lane.b32.xlu0 %v665, 127
      %v866 = vpop.permute.xlu0 %865
      %867 = vrot.lane.b32.xlu0 %v667, 127
      %v868 = vpop.permute.xlu0 %867
      %869 = vrot.lane.b32.xlu0 %v669, 127
      %v870 = vpop.permute.xlu0 %869
      %871 = vrot.lane.b32.xlu0 %v664, 127
      %v872 = vpop.permute.xlu0 %871
      %873 = vrot.lane.b32.xlu0 %v666, 127
      %v874 = vpop.permute.xlu0 %873
      %875 = vrot.lane.b32.xlu0 %v668, 127
      %v876 = vpop.permute.xlu0 %875
      %877 = vrot.lane.b32.xlu0 %v670, 127
      %v878 = vpop.permute.xlu0 %877
      %v879 = vsel %vm486, %v864, %v872
      %v880 = vsel %vm486, %v866, %v874
      %v881 = vsel %vm486, %v868, %v876
      %v882 = vsel %vm486, %v870, %v878
      %v883 = vsel %vm486, %v872, %v864
      %v884 = vsel %vm486, %v874, %v866
      %v885 = vsel %vm486, %v876, %v868
      %v886 = vsel %vm486, %v878, %v870
      %v887 = vld [vmem:[%s495] ss:$8 sm:$0x3]
      %v889 = vperm.slane %v887, 0
      %v890 = vperm.slane %v887, 1
      %v893 = vmul.f32 %v879, %v889
      %v894 = vmul.f32 %v883, %v890
      %v895 = vmul.f32 %v880, %v889
      %v896 = vmul.f32 %v884, %v890
      %v897 = vmul.f32 %v881, %v889
      %v898 = vmul.f32 %v885, %v890
      %v899 = vmul.f32 %v882, %v889
      %v900 = vmul.f32 %v886, %v890
      %v901 = vpack.c.bf16 %v894, %v893
      %v902 = vpack.c.bf16 %v896, %v895
      %v903 = vpack.c.bf16 %v898, %v897
      %v904 = vpack.c.bf16 %v900, %v899
      %905 = vst [vmem:[#allocation2 + $0x148] sm:$0xff] %v901
      %906 = vst [vmem:[#allocation2 + $0x158] sm:$0xff] %v902
      %907 = vst [vmem:[#allocation2 + $0x168] sm:$0xff] %v903
      %908 = vst [vmem:[#allocation2 + $0x178] sm:$0xff] %v904
      %909 = vrot.lane.b32.xlu0 %v663, 113
      %v910 = vpop.permute.xlu0 %909
      %911 = vrot.lane.b32.xlu0 %v665, 113
      %v912 = vpop.permute.xlu0 %911
      %913 = vrot.lane.b32.xlu0 %v667, 113
      %v914 = vpop.permute.xlu0 %913
      %915 = vrot.lane.b32.xlu0 %v669, 113
      %v916 = vpop.permute.xlu0 %915
      %917 = vrot.lane.b32.xlu0 %v664, 113
      %v918 = vpop.permute.xlu0 %917
      %919 = vrot.lane.b32.xlu0 %v666, 113
      %v920 = vpop.permute.xlu0 %919
      %921 = vrot.lane.b32.xlu0 %v668, 113
      %v922 = vpop.permute.xlu0 %921
      %923 = vrot.lane.b32.xlu0 %v670, 113
      %v924 = vpop.permute.xlu0 %923
      %v925 = vsel %vm534, %v910, %v918
      %v926 = vsel %vm534, %v912, %v920
      %v927 = vsel %vm534, %v914, %v922
      %v928 = vsel %vm534, %v916, %v924
      %v929 = vsel %vm534, %v918, %v910
      %v930 = vsel %vm534, %v920, %v912
      %v931 = vsel %vm534, %v922, %v914
      %v932 = vsel %vm534, %v924, %v916
      %v933 = vld [vmem:[%s543] ss:$8 sm:$0x3]
      %v935 = vperm.slane %v933, 0
      %v936 = vperm.slane %v933, 1
      %v939 = vmul.f32 %v925, %v935
      %v940 = vmul.f32 %v929, %v936
      %v941 = vmul.f32 %v926, %v935
      %v942 = vmul.f32 %v930, %v936
      %v943 = vmul.f32 %v927, %v935
      %v944 = vmul.f32 %v931, %v936
      %v945 = vmul.f32 %v928, %v935
      %v946 = vmul.f32 %v932, %v936
      %v947 = vpack.c.bf16 %v940, %v939
      %v948 = vpack.c.bf16 %v942, %v941
      %v949 = vpack.c.bf16 %v944, %v943
      %v950 = vpack.c.bf16 %v946, %v945
      %951 = vst [vmem:[#allocation2 + $0x188] sm:$0xff] %v947
      %952 = vst [vmem:[#allocation2 + $0x198] sm:$0xff] %v948
      %953 = vst [vmem:[#allocation2 + $0x1a8] sm:$0xff] %v949
      %954 = vst [vmem:[#allocation2 + $0x1b8] sm:$0xff] %v950
      %955 = vrot.lane.b32.xlu0 %v663, 112
      %v956 = vpop.permute.xlu0 %955
      %957 = vrot.lane.b32.xlu0 %v665, 112
      %v958 = vpop.permute.xlu0 %957
      %959 = vrot.lane.b32.xlu0 %v667, 112
      %v960 = vpop.permute.xlu0 %959
      %961 = vrot.lane.b32.xlu0 %v669, 112
      %v962 = vpop.permute.xlu0 %961
      %963 = vrot.lane.b32.xlu0 %v664, 112
      %v964 = vpop.permute.xlu0 %963
      %965 = vrot.lane.b32.xlu0 %v666, 112
      %v966 = vpop.permute.xlu0 %965
      %967 = vrot.lane.b32.xlu0 %v668, 112
      %v968 = vpop.permute.xlu0 %967
      %969 = vrot.lane.b32.xlu0 %v670, 112
      %v970 = vpop.permute.xlu0 %969
      %v971 = vsel %vm582, %v956, %v964
      %v972 = vsel %vm582, %v958, %v966
      %v973 = vsel %vm582, %v960, %v968
      %v974 = vsel %vm582, %v962, %v970
      %v975 = vsel %vm582, %v964, %v956
      %v976 = vsel %vm582, %v966, %v958
      %v977 = vsel %vm582, %v968, %v960
      %v978 = vsel %vm582, %v970, %v962
      %v979 = vld [vmem:[%s591] ss:$8 sm:$0x3]
      %v981 = vperm.slane %v979, 0
      %v982 = vperm.slane %v979, 1
      %v985 = vmul.f32 %v971, %v981
      %v986 = vmul.f32 %v975, %v982
      %v987 = vmul.f32 %v972, %v981
      %v988 = vmul.f32 %v976, %v982
      %v989 = vmul.f32 %v973, %v981
      %v990 = vmul.f32 %v977, %v982
      %v991 = vmul.f32 %v974, %v981
      %v992 = vmul.f32 %v978, %v982
      %v993 = vpack.c.bf16 %v986, %v985
      %v994 = vpack.c.bf16 %v988, %v987
      %v995 = vpack.c.bf16 %v990, %v989
      %v996 = vpack.c.bf16 %v992, %v991
      %997 = vst [vmem:[#allocation2 + $0x1c8] sm:$0xff] %v993
      %998 = vst [vmem:[#allocation2 + $0x1d8] sm:$0xff] %v994
      %999 = vst [vmem:[#allocation2 + $0x1e8] sm:$0xff] %v995
      %1000 = vst [vmem:[#allocation2 + $0x1f8] sm:$0xff] %v996
      %1001 = vrot.lane.b32.xlu0 %v663, 111
      %v1002 = vpop.permute.xlu0 %1001
      %1003 = vrot.lane.b32.xlu0 %v665, 111
      %v1004 = vpop.permute.xlu0 %1003
      %1005 = vrot.lane.b32.xlu0 %v667, 111
      %v1006 = vpop.permute.xlu0 %1005
      %1007 = vrot.lane.b32.xlu0 %v669, 111
      %v1008 = vpop.permute.xlu0 %1007
      %1009 = vrot.lane.b32.xlu0 %v664, 111
      %v1010 = vpop.permute.xlu0 %1009
      %1011 = vrot.lane.b32.xlu0 %v666, 111
      %v1012 = vpop.permute.xlu0 %1011
      %1013 = vrot.lane.b32.xlu0 %v668, 111
      %v1014 = vpop.permute.xlu0 %1013
      %1015 = vrot.lane.b32.xlu0 %v670, 111
      %v1016 = vpop.permute.xlu0 %1015
      %v1017 = vsel %vm630, %v1002, %v1010
      %v1018 = vsel %vm630, %v1004, %v1012
      %v1019 = vsel %vm630, %v1006, %v1014
      %v1020 = vsel %vm630, %v1008, %v1016
      %v1021 = vsel %vm630, %v1010, %v1002
      %v1022 = vsel %vm630, %v1012, %v1004
      %v1023 = vsel %vm630, %v1014, %v1006
      %v1024 = vsel %vm630, %v1016, %v1008
      %v1025 = vld [vmem:[%s639] ss:$8 sm:$0x3]
      %v1027 = vperm.slane %v1025, 0
      %v1028 = vperm.slane %v1025, 1
      %v1031 = vmul.f32 %v1017, %v1027
      %v1032 = vmul.f32 %v1021, %v1028
      %v1033 = vmul.f32 %v1018, %v1027
      %v1034 = vmul.f32 %v1022, %v1028
      %v1035 = vmul.f32 %v1019, %v1027
      %v1036 = vmul.f32 %v1023, %v1028
      %v1037 = vmul.f32 %v1020, %v1027
      %v1038 = vmul.f32 %v1024, %v1028
      %v1039 = vpack.c.bf16 %v1032, %v1031
      %v1040 = vpack.c.bf16 %v1034, %v1033
      %v1041 = vpack.c.bf16 %v1036, %v1035
      %v1042 = vpack.c.bf16 %v1038, %v1037
      %1043 = vst [vmem:[#allocation2 + $0x208] sm:$0xff] %v1039
      %1044 = vst [vmem:[#allocation2 + $0x218] sm:$0xff] %v1040
      %1045 = vst [vmem:[#allocation2 + $0x228] sm:$0xff] %v1041
      %1046 = vst [vmem:[#allocation2 + $0x238] sm:$0xff] %v1042
      %v1047 = vld [vmem:[%s2] sm:$0xff]
      %v1048 = vld [vmem:[%s2 + $0x8] sm:$0xf]
      %v1049 = vld [vmem:[%s2 + $0xc] sm:$0xff]
      %v1050 = vld [vmem:[%s2 + $0x14] sm:$0xf]
      %v1051 = vld [vmem:[%s2 + $0x18] sm:$0xff]
      %v1052 = vld [vmem:[%s2 + $0x20] sm:$0xf]
      %v1053 = vld [vmem:[%s2 + $0x24] sm:$0xff]
      %v1054 = vld [vmem:[%s2 + $0x2c] sm:$0xf]
      %v1055 = vld [vmem:[#allocation2] sm:$0xff]
      %v1056 = vld [vmem:[#allocation2 + $0x8] sm:$0xff]
      %v1057 = vld [vmem:[#allocation2 + $0x10] sm:$0xff]
      %v1058 = vld [vmem:[#allocation2 + $0x18] sm:$0xff]
      %v1059 = vld [vmem:[#allocation2 + $0x20] sm:$0xff]
      %v1060 = vld [vmem:[#allocation2 + $0x28] sm:$0xff]
      %v1061 = vld [vmem:[#allocation2 + $0x30] sm:$0xff]
      %v1062 = vld [vmem:[#allocation2 + $0x38] sm:$0xff]
      %v1063 = vld [vmem:[#allocation2 + $0x40] sm:$0xff]
      %v1064 = vld [vmem:[#allocation2 + $0x48] sm:$0xff]
      %v1065 = vld [vmem:[#allocation2 + $0x50] sm:$0xff]
      %v1066 = vld [vmem:[#allocation2 + $0x58] sm:$0xff]
      %v1067 = vld [vmem:[#allocation2 + $0x60] sm:$0xff]
      %v1068 = vld [vmem:[#allocation2 + $0x68] sm:$0xff]
      %v1069 = vld [vmem:[#allocation2 + $0x70] sm:$0xff]
      %v1070 = vld [vmem:[#allocation2 + $0x78] sm:$0xff]
      %v1071 = vld [vmem:[#allocation2 + $0x80] sm:$0xff]
      %v1072 = vld [vmem:[#allocation2 + $0x88] sm:$0xff]
      %v1073 = vld [vmem:[#allocation2 + $0x90] sm:$0xff]
      %v1074 = vld [vmem:[#allocation2 + $0x98] sm:$0xff]
      %v1075 = vld [vmem:[#allocation2 + $0xa0] sm:$0xff]
      %v1076 = vld [vmem:[#allocation2 + $0xa8] sm:$0xff]
      %v1077 = vld [vmem:[#allocation2 + $0xb0] sm:$0xff]
      %v1078 = vld [vmem:[#allocation2 + $0xb8] sm:$0xff]
      %v1079 = vld [vmem:[#allocation2 + $0xc0] sm:$0xff]
      %v1080 = vld [vmem:[#allocation2 + $0xc8] sm:$0xff]
      %v1081 = vld [vmem:[#allocation2 + $0xd0] sm:$0xff]
      %v1082 = vld [vmem:[#allocation2 + $0xd8] sm:$0xff]
      %v1083 = vld [vmem:[#allocation2 + $0xe0] sm:$0xff]
      %v1084 = vld [vmem:[#allocation2 + $0xe8] sm:$0xff]
      %v1085 = vld [vmem:[#allocation2 + $0xf0] sm:$0xff]
      %v1086 = vld [vmem:[#allocation2 + $0xf8] sm:$0xff]
      %v1087 = vld [vmem:[#allocation2 + $0x100] sm:$0xff]
      %v1088 = vld [vmem:[#allocation2 + $0x108] sm:$0xff]
      %v1089 = vld [vmem:[#allocation2 + $0x110] sm:$0xff]
      %v1090 = vld [vmem:[#allocation2 + $0x118] sm:$0xff]
      %v1091 = vld [vmem:[#allocation2 + $0x120] sm:$0xff]
      %v1092 = vld [vmem:[#allocation2 + $0x128] sm:$0xff]
      %v1093 = vld [vmem:[#allocation2 + $0x130] sm:$0xff]
      %v1094 = vld [vmem:[#allocation2 + $0x138] sm:$0xff]
      %v1095 = vld [vmem:[#allocation2 + $0x140] sm:$0xff]
      %v1096 = vld [vmem:[#allocation2 + $0x148] sm:$0xff]
      %v1097 = vld [vmem:[#allocation2 + $0x150] sm:$0xff]
      %v1098 = vld [vmem:[#allocation2 + $0x158] sm:$0xff]
      %v1099 = vld [vmem:[#allocation2 + $0x160] sm:$0xff]
      %v1100 = vld [vmem:[#allocation2 + $0x168] sm:$0xff]
      %v1101 = vld [vmem:[#allocation2 + $0x170] sm:$0xff]
      %v1102 = vld [vmem:[#allocation2 + $0x178] sm:$0xff]
      %v1103 = vld [vmem:[#allocation2 + $0x180] sm:$0xff]
      %v1104 = vld [vmem:[#allocation2 + $0x188] sm:$0xff]
      %v1105 = vld [vmem:[#allocation2 + $0x190] sm:$0xff]
      %v1106 = vld [vmem:[#allocation2 + $0x198] sm:$0xff]
      %v1107 = vld [vmem:[#allocation2 + $0x1a0] sm:$0xff]
      %v1108 = vld [vmem:[#allocation2 + $0x1a8] sm:$0xff]
      %v1109 = vld [vmem:[#allocation2 + $0x1b0] sm:$0xff]
      %v1110 = vld [vmem:[#allocation2 + $0x1b8] sm:$0xff]
      %v1111 = vld [vmem:[#allocation2 + $0x1c0] sm:$0xff]
      %v1112 = vld [vmem:[#allocation2 + $0x1c8] sm:$0xff]
      %v1113 = vld [vmem:[#allocation2 + $0x1d0] sm:$0xff]
      %v1114 = vld [vmem:[#allocation2 + $0x1d8] sm:$0xff]
      %v1115 = vld [vmem:[#allocation2 + $0x1e0] sm:$0xff]
      %v1116 = vld [vmem:[#allocation2 + $0x1e8] sm:$0xff]
      %v1117 = vld [vmem:[#allocation2 + $0x1f0] sm:$0xff]
      %v1118 = vld [vmem:[#allocation2 + $0x1f8] sm:$0xff]
      %v1119 = vld [vmem:[#allocation2 + $0x200] sm:$0xff]
      %v1120 = vld [vmem:[#allocation2 + $0x208] sm:$0xff]
      %v1121 = vld [vmem:[#allocation2 + $0x210] sm:$0xff]
      %v1122 = vld [vmem:[#allocation2 + $0x218] sm:$0xff]
      %v1123 = vld [vmem:[#allocation2 + $0x220] sm:$0xff]
      %v1124 = vld [vmem:[#allocation2 + $0x228] sm:$0xff]
      %v1125 = vld [vmem:[#allocation2 + $0x230] sm:$0xff]
      %v1126 = vld [vmem:[#allocation2 + $0x238] sm:$0xff]
      %v1135 = vunpack.c.l.b16 %v1047
      %v1136 = vunpack.c.h.b16 %v1047
      %v1137 = vunpack.c.l.b16 %v1048
      %v1138 = vunpack.c.l.b16 %v1049
      %v1139 = vunpack.c.h.b16 %v1049
      %v1140 = vunpack.c.l.b16 %v1050
      %v1141 = vunpack.c.l.b16 %v1051
      %v1142 = vunpack.c.h.b16 %v1051
      %v1143 = vunpack.c.l.b16 %v1052
      %v1144 = vunpack.c.l.b16 %v1053
      %v1145 = vunpack.c.h.b16 %v1053
      %v1146 = vunpack.c.l.b16 %v1054
      %v1147 = vpack.c.b16 %v1138, %v1135
      %v1148 = vpack.c.b16 %v1139, %v1136
      %v1149 = vpack.c.b16 %v1140, %v1137
      %v1150 = vpack.c.b16 %v1144, %v1141
      %v1151 = vpack.c.b16 %v1145, %v1142
      %v1152 = vpack.c.b16 %v1146, %v1143
      %v1229 = vunpack.c.l.b16 %v1055
      %v1230 = vunpack.c.h.b16 %v1055
      %v1231 = vunpack.c.l.b16 %v1056
      %v1232 = vunpack.c.h.b16 %v1056
      %v1233 = vunpack.c.l.b16 %v1057
      %v1234 = vunpack.c.h.b16 %v1057
      %v1235 = vunpack.c.l.b16 %v1058
      %v1236 = vunpack.c.h.b16 %v1058
      %v1237 = vunpack.c.l.b16 %v1059
      %v1238 = vunpack.c.h.b16 %v1059
      %v1239 = vunpack.c.l.b16 %v1060
      %v1240 = vunpack.c.h.b16 %v1060
      %v1241 = vunpack.c.l.b16 %v1061
      %v1242 = vunpack.c.h.b16 %v1061
      %v1243 = vunpack.c.l.b16 %v1062
      %v1244 = vunpack.c.h.b16 %v1062
      %v1245 = vunpack.c.l.b16 %v1063
      %v1246 = vunpack.c.h.b16 %v1063
      %v1247 = vunpack.c.l.b16 %v1064
      %v1248 = vunpack.c.h.b16 %v1064
      %v1249 = vunpack.c.l.b16 %v1065
      %v1250 = vunpack.c.h.b16 %v1065
      %v1251 = vunpack.c.l.b16 %v1066
      %v1252 = vunpack.c.h.b16 %v1066
      %v1253 = vunpack.c.l.b16 %v1067
      %v1254 = vunpack.c.h.b16 %v1067
      %v1255 = vunpack.c.l.b16 %v1068
      %v1256 = vunpack.c.h.b16 %v1068
      %v1257 = vunpack.c.l.b16 %v1069
      %v1258 = vunpack.c.h.b16 %v1069
      %v1259 = vunpack.c.l.b16 %v1070
      %v1260 = vunpack.c.h.b16 %v1070
      %v1261 = vunpack.c.l.b16 %v1071
      %v1262 = vunpack.c.h.b16 %v1071
      %v1263 = vunpack.c.l.b16 %v1072
      %v1264 = vunpack.c.h.b16 %v1072
      %v1265 = vunpack.c.l.b16 %v1073
      %v1266 = vunpack.c.h.b16 %v1073
      %v1267 = vunpack.c.l.b16 %v1074
      %v1268 = vunpack.c.h.b16 %v1074
      %v1269 = vunpack.c.l.b16 %v1075
      %v1270 = vunpack.c.h.b16 %v1075
      %v1271 = vunpack.c.l.b16 %v1076
      %v1272 = vunpack.c.h.b16 %v1076
      %v1273 = vunpack.c.l.b16 %v1077
      %v1274 = vunpack.c.h.b16 %v1077
      %v1275 = vunpack.c.l.b16 %v1078
      %v1276 = vunpack.c.h.b16 %v1078
      %v1277 = vunpack.c.l.b16 %v1079
      %v1278 = vunpack.c.h.b16 %v1079
      %v1279 = vunpack.c.l.b16 %v1080
      %v1280 = vunpack.c.h.b16 %v1080
      %v1281 = vunpack.c.l.b16 %v1081
      %v1282 = vunpack.c.h.b16 %v1081
      %v1283 = vunpack.c.l.b16 %v1082
      %v1284 = vunpack.c.h.b16 %v1082
      %v1285 = vunpack.c.l.b16 %v1083
      %v1286 = vunpack.c.h.b16 %v1083
      %v1287 = vunpack.c.l.b16 %v1084
      %v1288 = vunpack.c.h.b16 %v1084
      %v1289 = vunpack.c.l.b16 %v1085
      %v1290 = vunpack.c.h.b16 %v1085
      %v1291 = vunpack.c.l.b16 %v1086
      %v1292 = vunpack.c.h.b16 %v1086
      %v1293 = vunpack.c.l.b16 %v1087
      %v1294 = vunpack.c.h.b16 %v1087
      %v1295 = vunpack.c.l.b16 %v1088
      %v1296 = vunpack.c.h.b16 %v1088
      %v1297 = vunpack.c.l.b16 %v1089
      %v1298 = vunpack.c.h.b16 %v1089
      %v1299 = vunpack.c.l.b16 %v1090
      %v1300 = vunpack.c.h.b16 %v1090
      %v1301 = vunpack.c.l.b16 %v1091
      %v1302 = vunpack.c.h.b16 %v1091
      %v1303 = vunpack.c.l.b16 %v1092
      %v1304 = vunpack.c.h.b16 %v1092
      %v1305 = vunpack.c.l.b16 %v1093
      %v1306 = vunpack.c.h.b16 %v1093
      %v1307 = vunpack.c.l.b16 %v1094
      %v1308 = vunpack.c.h.b16 %v1094
      %v1309 = vunpack.c.l.b16 %v1095
      %v1310 = vunpack.c.h.b16 %v1095
      %v1311 = vunpack.c.l.b16 %v1096
      %v1312 = vunpack.c.h.b16 %v1096
      %v1313 = vunpack.c.l.b16 %v1097
      %v1314 = vunpack.c.h.b16 %v1097
      %v1315 = vunpack.c.l.b16 %v1098
      %v1316 = vunpack.c.h.b16 %v1098
      %v1317 = vunpack.c.l.b16 %v1099
      %v1318 = vunpack.c.h.b16 %v1099
      %v1319 = vunpack.c.l.b16 %v1100
      %v1320 = vunpack.c.h.b16 %v1100
      %v1321 = vunpack.c.l.b16 %v1101
      %v1322 = vunpack.c.h.b16 %v1101
      %v1323 = vunpack.c.l.b16 %v1102
      %v1324 = vunpack.c.h.b16 %v1102
      %v1325 = vunpack.c.l.b16 %v1103
      %v1326 = vunpack.c.h.b16 %v1103
      %v1327 = vunpack.c.l.b16 %v1104
      %v1328 = vunpack.c.h.b16 %v1104
      %v1329 = vunpack.c.l.b16 %v1105
      %v1330 = vunpack.c.h.b16 %v1105
      %v1331 = vunpack.c.l.b16 %v1106
      %v1332 = vunpack.c.h.b16 %v1106
      %v1333 = vunpack.c.l.b16 %v1107
      %v1334 = vunpack.c.h.b16 %v1107
      %v1335 = vunpack.c.l.b16 %v1108
      %v1336 = vunpack.c.h.b16 %v1108
      %v1337 = vunpack.c.l.b16 %v1109
      %v1338 = vunpack.c.h.b16 %v1109
      %v1339 = vunpack.c.l.b16 %v1110
      %v1340 = vunpack.c.h.b16 %v1110
      %v1341 = vunpack.c.l.b16 %v1111
      %v1342 = vunpack.c.h.b16 %v1111
      %v1343 = vunpack.c.l.b16 %v1112
      %v1344 = vunpack.c.h.b16 %v1112
      %v1345 = vunpack.c.l.b16 %v1113
      %v1346 = vunpack.c.h.b16 %v1113
      %v1347 = vunpack.c.l.b16 %v1114
      %v1348 = vunpack.c.h.b16 %v1114
      %v1349 = vunpack.c.l.b16 %v1115
      %v1350 = vunpack.c.h.b16 %v1115
      %v1351 = vunpack.c.l.b16 %v1116
      %v1352 = vunpack.c.h.b16 %v1116
      %v1353 = vunpack.c.l.b16 %v1117
      %v1354 = vunpack.c.h.b16 %v1117
      %v1355 = vunpack.c.l.b16 %v1118
      %v1356 = vunpack.c.h.b16 %v1118
      %v1357 = vunpack.c.l.b16 %v1119
      %v1358 = vunpack.c.h.b16 %v1119
      %v1359 = vunpack.c.l.b16 %v1120
      %v1360 = vunpack.c.h.b16 %v1120
      %v1361 = vunpack.c.l.b16 %v1121
      %v1362 = vunpack.c.h.b16 %v1121
      %v1363 = vunpack.c.l.b16 %v1122
      %v1364 = vunpack.c.h.b16 %v1122
      %v1365 = vunpack.c.l.b16 %v1123
      %v1366 = vunpack.c.h.b16 %v1123
      %v1367 = vunpack.c.l.b16 %v1124
      %v1368 = vunpack.c.h.b16 %v1124
      %v1369 = vunpack.c.l.b16 %v1125
      %v1370 = vunpack.c.h.b16 %v1125
      %v1371 = vunpack.c.l.b16 %v1126
      %v1372 = vunpack.c.h.b16 %v1126
      %v1373 = vpack.c.b16 %v1233, %v1229
      %v1374 = vpack.c.b16 %v1234, %v1230
      %v1375 = vpack.c.b16 %v1235, %v1231
      %v1376 = vpack.c.b16 %v1236, %v1232
      %v1377 = vpack.c.b16 %v1241, %v1237
      %v1378 = vpack.c.b16 %v1242, %v1238
      %v1379 = vpack.c.b16 %v1243, %v1239
      %v1380 = vpack.c.b16 %v1244, %v1240
      %v1381 = vpack.c.b16 %v1249, %v1245
      %v1382 = vpack.c.b16 %v1250, %v1246
      %v1383 = vpack.c.b16 %v1251, %v1247
      %v1384 = vpack.c.b16 %v1252, %v1248
      %v1385 = vpack.c.b16 %v1257, %v1253
      %v1386 = vpack.c.b16 %v1258, %v1254
      %v1387 = vpack.c.b16 %v1259, %v1255
      %v1388 = vpack.c.b16 %v1260, %v1256
      %v1389 = vpack.c.b16 %v1265, %v1261
      %v1390 = vpack.c.b16 %v1266, %v1262
      %v1391 = vpack.c.b16 %v1267, %v1263
      %v1392 = vpack.c.b16 %v1268, %v1264
      %v1393 = vpack.c.b16 %v1273, %v1269
      %v1394 = vpack.c.b16 %v1274, %v1270
      %v1395 = vpack.c.b16 %v1275, %v1271
      %v1396 = vpack.c.b16 %v1276, %v1272
      %v1397 = vpack.c.b16 %v1281, %v1277
      %v1398 = vpack.c.b16 %v1282, %v1278
      %v1399 = vpack.c.b16 %v1283, %v1279
      %v1400 = vpack.c.b16 %v1284, %v1280
      %v1401 = vpack.c.b16 %v1289, %v1285
      %v1402 = vpack.c.b16 %v1290, %v1286
      %v1403 = vpack.c.b16 %v1291, %v1287
      %v1404 = vpack.c.b16 %v1292, %v1288
      %v1405 = vpack.c.b16 %v1297, %v1293
      %v1406 = vpack.c.b16 %v1298, %v1294
      %v1407 = vpack.c.b16 %v1299, %v1295
      %v1408 = vpack.c.b16 %v1300, %v1296
      %v1409 = vpack.c.b16 %v1305, %v1301
      %v1410 = vpack.c.b16 %v1306, %v1302
      %v1411 = vpack.c.b16 %v1307, %v1303
      %v1412 = vpack.c.b16 %v1308, %v1304
      %v1413 = vpack.c.b16 %v1313, %v1309
      %v1414 = vpack.c.b16 %v1314, %v1310
      %v1415 = vpack.c.b16 %v1315, %v1311
      %v1416 = vpack.c.b16 %v1316, %v1312
      %v1417 = vpack.c.b16 %v1321, %v1317
      %v1418 = vpack.c.b16 %v1322, %v1318
      %v1419 = vpack.c.b16 %v1323, %v1319
      %v1420 = vpack.c.b16 %v1324, %v1320
      %v1421 = vpack.c.b16 %v1329, %v1325
      %v1422 = vpack.c.b16 %v1330, %v1326
      %v1423 = vpack.c.b16 %v1331, %v1327
      %v1424 = vpack.c.b16 %v1332, %v1328
      %v1425 = vpack.c.b16 %v1337, %v1333
      %v1426 = vpack.c.b16 %v1338, %v1334
      %v1427 = vpack.c.b16 %v1339, %v1335
      %v1428 = vpack.c.b16 %v1340, %v1336
      %v1429 = vpack.c.b16 %v1345, %v1341
      %v1430 = vpack.c.b16 %v1346, %v1342
      %v1431 = vpack.c.b16 %v1347, %v1343
      %v1432 = vpack.c.b16 %v1348, %v1344
      %v1433 = vpack.c.b16 %v1353, %v1349
      %v1434 = vpack.c.b16 %v1354, %v1350
      %v1435 = vpack.c.b16 %v1355, %v1351
      %v1436 = vpack.c.b16 %v1356, %v1352
      %v1437 = vpack.c.b16 %v1361, %v1357
      %v1438 = vpack.c.b16 %v1362, %v1358
      %v1439 = vpack.c.b16 %v1363, %v1359
      %v1440 = vpack.c.b16 %v1364, %v1360
      %v1441 = vpack.c.b16 %v1369, %v1365
      %v1442 = vpack.c.b16 %v1370, %v1366
      %v1443 = vpack.c.b16 %v1371, %v1367
      %v1444 = vpack.c.b16 %v1372, %v1368
      %vm1517 = vcmask 261120
      %v1519 = vsel %vm1517, %v1149, 0
      %v1522 = vsel %vm1517, %v1152, 0
      %1524 = vmatpush.bf16.msra.mxu0 %v1401
      %1525 = vmatpush.bf16.msra.mxu0 %v1397
      %1526 = vmatpush.bf16.msra.mxu0 %v1393
      %1527 = vmatpush.bf16.msra.mxu0 %v1389
      %1528 = vmatpush.bf16.msra.mxu0 %v1385
      %1529 = vmatpush.bf16.msra.mxu0 %v1381
      %1530 = vmatpush.bf16.msra.mxu0 %v1377
      %1531 = vmatpush.bf16.msra.mxu0 %v1373
      %1532 = vmatmul.bf16.gmra.mxu0 %v1147
      %v1533 = vpop.f32.mrf.mxu0
      %v1534 = vadd.f32 0.0, %v1533
      %v1535 = vpop.f32.mrf.mxu0
      %v1536 = vadd.f32 0.0, %v1535
      %1537 = vmatmul.bf16.gmra.mxu0 %v1150
      %v1538 = vpop.f32.mrf.mxu0
      %v1539 = vadd.f32 0.0, %v1538
      %v1540 = vpop.f32.mrf.mxu0
      %v1541 = vadd.f32 0.0, %v1540
      %1542 = vdwg.mxu0
      %1543 = vmatpush.bf16.msra.mxu0 %v1433
      %1544 = vmatpush.bf16.msra.mxu0 %v1429
      %1545 = vmatpush.bf16.msra.mxu0 %v1425
      %1546 = vmatpush.bf16.msra.mxu0 %v1421
      %1547 = vmatpush.bf16.msra.mxu0 %v1417
      %1548 = vmatpush.bf16.msra.mxu0 %v1413
      %1549 = vmatpush.bf16.msra.mxu0 %v1409
      %1550 = vmatpush.bf16.msra.mxu0 %v1405
      %1551 = vmatmul.bf16.gmra.mxu0 %v1148
      %v1552 = vpop.f32.mrf.mxu0
      %v1553 = vadd.f32 %v1534, %v1552
      %v1554 = vpop.f32.mrf.mxu0
      %v1555 = vadd.f32 %v1536, %v1554
      %1556 = vmatmul.bf16.gmra.mxu0 %v1151
      %v1557 = vpop.f32.mrf.mxu0
      %v1558 = vadd.f32 %v1539, %v1557
      %v1559 = vpop.f32.mrf.mxu0
      %v1560 = vadd.f32 %v1541, %v1559
      %1561 = vdwg.mxu0
      %1562 = vmatpush.bf16.msra.mxu0 0
      %1563 = vmatpush.bf16.msra.mxu0 0
      %1564 = vmatpush.bf16.msra.mxu0 0
      %1565 = vmatpush.bf16.msra.mxu0 0
      %1566 = vmatpush.bf16.msra.mxu0 0
      %1567 = vmatpush.bf16.msra.mxu0 0
      %1568 = vmatpush.bf16.msra.mxu0 %v1441
      %1569 = vmatpush.bf16.msra.mxu0 %v1437
      %1570 = vmatmul.bf16.gmra.mxu0 %v1519
      %v1571 = vpop.f32.mrf.mxu0
      %v1572 = vadd.f32 %v1553, %v1571
      %v1573 = vpop.f32.mrf.mxu0
      %v1574 = vadd.f32 %v1555, %v1573
      %1575 = vmatmul.bf16.gmra.mxu0 %v1522
      %v1576 = vpop.f32.mrf.mxu0
      %v1577 = vadd.f32 %v1558, %v1576
      %v1578 = vpop.f32.mrf.mxu0
      %v1579 = vadd.f32 %v1560, %v1578
      %1580 = vdwg.mxu0
      %1581 = vmatpush.bf16.msra.mxu0 %v1402
      %1582 = vmatpush.bf16.msra.mxu0 %v1398
      %1583 = vmatpush.bf16.msra.mxu0 %v1394
      %1584 = vmatpush.bf16.msra.mxu0 %v1390
      %1585 = vmatpush.bf16.msra.mxu0 %v1386
      %1586 = vmatpush.bf16.msra.mxu0 %v1382
      %1587 = vmatpush.bf16.msra.mxu0 %v1378
      %1588 = vmatpush.bf16.msra.mxu0 %v1374
      %1589 = vmatmul.bf16.gmra.mxu0 %v1147
      %v1590 = vpop.f32.mrf.mxu0
      %v1591 = vadd.f32 0.0, %v1590
      %v1592 = vpop.f32.mrf.mxu0
      %v1593 = vadd.f32 0.0, %v1592
      %1594 = vmatmul.bf16.gmra.mxu0 %v1150
      %v1595 = vpop.f32.mrf.mxu0
      %v1596 = vadd.f32 0.0, %v1595
      %v1597 = vpop.f32.mrf.mxu0
      %v1598 = vadd.f32 0.0, %v1597
      %1599 = vdwg.mxu0
      %1600 = vmatpush.bf16.msra.mxu0 %v1434
      %1601 = vmatpush.bf16.msra.mxu0 %v1430
      %1602 = vmatpush.bf16.msra.mxu0 %v1426
      %1603 = vmatpush.bf16.msra.mxu0 %v1422
      %1604 = vmatpush.bf16.msra.mxu0 %v1418
      %1605 = vmatpush.bf16.msra.mxu0 %v1414
      %1606 = vmatpush.bf16.msra.mxu0 %v1410
      %1607 = vmatpush.bf16.msra.mxu0 %v1406
      %1608 = vmatmul.bf16.gmra.mxu0 %v1148
      %v1609 = vpop.f32.mrf.mxu0
      %v1610 = vadd.f32 %v1591, %v1609
      %v1611 = vpop.f32.mrf.mxu0
      %v1612 = vadd.f32 %v1593, %v1611
      %1613 = vmatmul.bf16.gmra.mxu0 %v1151
      %v1614 = vpop.f32.mrf.mxu0
      %v1615 = vadd.f32 %v1596, %v1614
      %v1616 = vpop.f32.mrf.mxu0
      %v1617 = vadd.f32 %v1598, %v1616
      %1618 = vdwg.mxu0
      %1619 = vmatpush.bf16.msra.mxu0 0
      %1620 = vmatpush.bf16.msra.mxu0 0
      %1621 = vmatpush.bf16.msra.mxu0 0
      %1622 = vmatpush.bf16.msra.mxu0 0
      %1623 = vmatpush.bf16.msra.mxu0 0
      %1624 = vmatpush.bf16.msra.mxu0 0
      %1625 = vmatpush.bf16.msra.mxu0 %v1442
      %1626 = vmatpush.bf16.msra.mxu0 %v1438
      %1627 = vmatmul.bf16.gmra.mxu0 %v1519
      %v1628 = vpop.f32.mrf.mxu0
      %v1629 = vadd.f32 %v1610, %v1628
      %v1630 = vpop.f32.mrf.mxu0
      %v1631 = vadd.f32 %v1612, %v1630
      %1632 = vmatmul.bf16.gmra.mxu0 %v1522
      %v1633 = vpop.f32.mrf.mxu0
      %v1634 = vadd.f32 %v1615, %v1633
      %v1635 = vpop.f32.mrf.mxu0
      %v1636 = vadd.f32 %v1617, %v1635
      %1637 = vdwg.mxu0
      %1638 = vmatpush.bf16.msra.mxu0 %v1403
      %1639 = vmatpush.bf16.msra.mxu0 %v1399
      %1640 = vmatpush.bf16.msra.mxu0 %v1395
      %1641 = vmatpush.bf16.msra.mxu0 %v1391
      %1642 = vmatpush.bf16.msra.mxu0 %v1387
      %1643 = vmatpush.bf16.msra.mxu0 %v1383
      %1644 = vmatpush.bf16.msra.mxu0 %v1379
      %1645 = vmatpush.bf16.msra.mxu0 %v1375
      %1646 = vmatmul.bf16.gmra.mxu0 %v1147
      %v1647 = vpop.f32.mrf.mxu0
      %v1648 = vadd.f32 0.0, %v1647
      %v1649 = vpop.f32.mrf.mxu0
      %v1650 = vadd.f32 0.0, %v1649
      %1651 = vmatmul.bf16.gmra.mxu0 %v1150
      %v1652 = vpop.f32.mrf.mxu0
      %v1653 = vadd.f32 0.0, %v1652
      %v1654 = vpop.f32.mrf.mxu0
      %v1655 = vadd.f32 0.0, %v1654
      %1656 = vdwg.mxu0
      %1657 = vmatpush.bf16.msra.mxu0 %v1435
      %1658 = vmatpush.bf16.msra.mxu0 %v1431
      %1659 = vmatpush.bf16.msra.mxu0 %v1427
      %1660 = vmatpush.bf16.msra.mxu0 %v1423
      %1661 = vmatpush.bf16.msra.mxu0 %v1419
      %1662 = vmatpush.bf16.msra.mxu0 %v1415
      %1663 = vmatpush.bf16.msra.mxu0 %v1411
      %1664 = vmatpush.bf16.msra.mxu0 %v1407
      %1665 = vmatmul.bf16.gmra.mxu0 %v1148
      %v1666 = vpop.f32.mrf.mxu0
      %v1667 = vadd.f32 %v1648, %v1666
      %v1668 = vpop.f32.mrf.mxu0
      %v1669 = vadd.f32 %v1650, %v1668
      %1670 = vmatmul.bf16.gmra.mxu0 %v1151
      %v1671 = vpop.f32.mrf.mxu0
      %v1672 = vadd.f32 %v1653, %v1671
      %v1673 = vpop.f32.mrf.mxu0
      %v1674 = vadd.f32 %v1655, %v1673
      %1675 = vdwg.mxu0
      %1676 = vmatpush.bf16.msra.mxu0 0
      %1677 = vmatpush.bf16.msra.mxu0 0
      %1678 = vmatpush.bf16.msra.mxu0 0
      %1679 = vmatpush.bf16.msra.mxu0 0
      %1680 = vmatpush.bf16.msra.mxu0 0
      %1681 = vmatpush.bf16.msra.mxu0 0
      %1682 = vmatpush.bf16.msra.mxu0 %v1443
      %1683 = vmatpush.bf16.msra.mxu0 %v1439
      %1684 = vmatmul.bf16.gmra.mxu0 %v1519
      %v1685 = vpop.f32.mrf.mxu0
      %v1686 = vadd.f32 %v1667, %v1685
      %v1687 = vpop.f32.mrf.mxu0
      %v1688 = vadd.f32 %v1669, %v1687
      %1689 = vmatmul.bf16.gmra.mxu0 %v1522
      %v1690 = vpop.f32.mrf.mxu0
      %v1691 = vadd.f32 %v1672, %v1690
      %v1692 = vpop.f32.mrf.mxu0
      %v1693 = vadd.f32 %v1674, %v1692
      %1694 = vdwg.mxu0
      %1695 = vmatpush.bf16.msra.mxu0 %v1404
      %1696 = vmatpush.bf16.msra.mxu0 %v1400
      %1697 = vmatpush.bf16.msra.mxu0 %v1396
      %1698 = vmatpush.bf16.msra.mxu0 %v1392
      %1699 = vmatpush.bf16.msra.mxu0 %v1388
      %1700 = vmatpush.bf16.msra.mxu0 %v1384
      %1701 = vmatpush.bf16.msra.mxu0 %v1380
      %1702 = vmatpush.bf16.msra.mxu0 %v1376
      %1703 = vmatmul.bf16.gmra.mxu0 %v1147
      %v1704 = vpop.f32.mrf.mxu0
      %v1705 = vadd.f32 0.0, %v1704
      %v1706 = vpop.f32.mrf.mxu0
      %v1707 = vadd.f32 0.0, %v1706
      %1708 = vmatmul.bf16.gmra.mxu0 %v1150
      %v1709 = vpop.f32.mrf.mxu0
      %v1710 = vadd.f32 0.0, %v1709
      %v1711 = vpop.f32.mrf.mxu0
      %v1712 = vadd.f32 0.0, %v1711
      %1713 = vdwg.mxu0
      %1714 = vmatpush.bf16.msra.mxu0 %v1436
      %1715 = vmatpush.bf16.msra.mxu0 %v1432
      %1716 = vmatpush.bf16.msra.mxu0 %v1428
      %1717 = vmatpush.bf16.msra.mxu0 %v1424
      %1718 = vmatpush.bf16.msra.mxu0 %v1420
      %1719 = vmatpush.bf16.msra.mxu0 %v1416
      %1720 = vmatpush.bf16.msra.mxu0 %v1412
      %1721 = vmatpush.bf16.msra.mxu0 %v1408
      %1722 = vmatmul.bf16.gmra.mxu0 %v1148
      %v1723 = vpop.f32.mrf.mxu0
      %v1724 = vadd.f32 %v1705, %v1723
      %v1725 = vpop.f32.mrf.mxu0
      %v1726 = vadd.f32 %v1707, %v1725
      %1727 = vmatmul.bf16.gmra.mxu0 %v1151
      %v1728 = vpop.f32.mrf.mxu0
      %v1729 = vadd.f32 %v1710, %v1728
      %v1730 = vpop.f32.mrf.mxu0
      %v1731 = vadd.f32 %v1712, %v1730
      %1732 = vdwg.mxu0
      %1733 = vmatpush.bf16.msra.mxu0 0
      %1734 = vmatpush.bf16.msra.mxu0 0
      %1735 = vmatpush.bf16.msra.mxu0 0
      %1736 = vmatpush.bf16.msra.mxu0 0
      %1737 = vmatpush.bf16.msra.mxu0 0
      %1738 = vmatpush.bf16.msra.mxu0 0
      %1739 = vmatpush.bf16.msra.mxu0 %v1444
      %1740 = vmatpush.bf16.msra.mxu0 %v1440
      %1741 = vmatmul.bf16.gmra.mxu0 %v1519
      %v1742 = vpop.f32.mrf.mxu0
      %v1743 = vadd.f32 %v1724, %v1742
      %v1744 = vpop.f32.mrf.mxu0
      %v1745 = vadd.f32 %v1726, %v1744
      %1746 = vmatmul.bf16.gmra.mxu0 %v1522
      %v1747 = vpop.f32.mrf.mxu0
      %v1748 = vadd.f32 %v1729, %v1747
      %v1749 = vpop.f32.mrf.mxu0
      %v1750 = vadd.f32 %v1731, %v1749
      %1751 = vdwg.mxu0
      %v1752 = vmax.f32 %v1572, 0.0
      %v1753 = vmax.f32 %v1629, 0.0
      %v1754 = vmax.f32 %v1686, 0.0
      %v1755 = vmax.f32 %v1743, 0.0
      %v1756 = vmax.f32 %v1574, 0.0
      %v1757 = vmax.f32 %v1631, 0.0
      %v1758 = vmax.f32 %v1688, 0.0
      %v1759 = vmax.f32 %v1745, 0.0
      %v1760 = vmax.f32 %v1577, 0.0
      %v1761 = vmax.f32 %v1634, 0.0
      %v1762 = vmax.f32 %v1691, 0.0
      %v1763 = vmax.f32 %v1748, 0.0
      %v1764 = vmax.f32 %v1579, 0.0
      %v1765 = vmax.f32 %v1636, 0.0
      %v1766 = vmax.f32 %v1693, 0.0
      %v1767 = vmax.f32 %v1750, 0.0
      %1768 = vst [vmem:[#allocation3] sm:$0xff] %v1752
      %1769 = vst [vmem:[#allocation3 + $0x8] sm:$0xff] %v1753
      %1770 = vst [vmem:[#allocation3 + $0x10] sm:$0xff] %v1754
      %1771 = vst [vmem:[#allocation3 + $0x18] sm:$0xff] %v1755
      %1772 = vst [vmem:[#allocation3 + $0x20] sm:$0xff] %v1756
      %1773 = vst [vmem:[#allocation3 + $0x28] sm:$0xff] %v1757
      %1774 = vst [vmem:[#allocation3 + $0x30] sm:$0xff] %v1758
      %1775 = vst [vmem:[#allocation3 + $0x38] sm:$0xff] %v1759
      %1776 = vst [vmem:[#allocation3 + $0x40] sm:$0xff] %v1760
      %1777 = vst [vmem:[#allocation3 + $0x48] sm:$0xff] %v1761
      %1778 = vst [vmem:[#allocation3 + $0x50] sm:$0xff] %v1762
      %1779 = vst [vmem:[#allocation3 + $0x58] sm:$0xff] %v1763
      %1780 = vst [vmem:[#allocation3 + $0x60] sm:$0xff] %v1764
      %1781 = vst [vmem:[#allocation3 + $0x68] sm:$0xff] %v1765
      %1782 = vst [vmem:[#allocation3 + $0x70] sm:$0xff] %v1766
      %1783 = vst [vmem:[#allocation3 + $0x78] sm:$0xff] %v1767
      %v1784 = vld [vmem:[#allocation3] sm:$0xff]
      %v1785 = vld [vmem:[#allocation3 + $0x8] sm:$0xff]
      %v1786 = vld [vmem:[#allocation3 + $0x20] sm:$0xff]
      %v1787 = vld [vmem:[#allocation3 + $0x28] sm:$0xff]
      %v1788 = vld [vmem:[#allocation3 + $0x40] sm:$0xff]
      %v1789 = vld [vmem:[#allocation3 + $0x48] sm:$0xff]
      %v1790 = vld [vmem:[#allocation3 + $0x60] sm:$0xff]
      %v1791 = vld [vmem:[#allocation3 + $0x68] sm:$0xff]
      %1792 = vrot.lane.b32.xlu0 %v1784, 17
      %v1793 = vpop.permute.xlu0 %1792
      %1794 = vrot.lane.b32.xlu0 %v1786, 17
      %v1795 = vpop.permute.xlu0 %1794
      %1796 = vrot.lane.b32.xlu0 %v1788, 17
      %v1797 = vpop.permute.xlu0 %1796
      %1798 = vrot.lane.b32.xlu0 %v1790, 17
      %v1799 = vpop.permute.xlu0 %1798
      %1800 = vrot.lane.b32.xlu0 %v1785, 17
      %v1801 = vpop.permute.xlu0 %1800
      %1802 = vrot.lane.b32.xlu0 %v1787, 17
      %v1803 = vpop.permute.xlu0 %1802
      %1804 = vrot.lane.b32.xlu0 %v1789, 17
      %v1805 = vpop.permute.xlu0 %1804
      %1806 = vrot.lane.b32.xlu0 %v1791, 17
      %v1807 = vpop.permute.xlu0 %1806
      %v1808 = vsel %vm287, %v1793, %v1801
      %v1809 = vsel %vm287, %v1795, %v1803
      %v1810 = vsel %vm287, %v1797, %v1805
      %v1811 = vsel %vm287, %v1799, %v1807
      %v1812 = vsel %vm287, %v1801, %v1793
      %v1813 = vsel %vm287, %v1803, %v1795
      %v1814 = vsel %vm287, %v1805, %v1797
      %v1815 = vsel %vm287, %v1807, %v1799
      %v1816 = vld [vmem:[%s1] ss:$8 sm:$0x3]
      %v1818 = vperm.slane %v1816, 0
      %v1819 = vperm.slane %v1816, 1
      %v1822 = vmul.f32 %v1812, %v1818
      %v1823 = vmul.f32 %v1808, %v1819
      %v1824 = vmul.f32 %v1813, %v1818
      %v1825 = vmul.f32 %v1809, %v1819
      %v1826 = vmul.f32 %v1814, %v1818
      %v1827 = vmul.f32 %v1810, %v1819
      %v1828 = vmul.f32 %v1815, %v1818
      %v1829 = vmul.f32 %v1811, %v1819
      %v1830 = vpack.c.bf16 %v1823, %v1822
      %v1831 = vpack.c.bf16 %v1825, %v1824
      %v1832 = vpack.c.bf16 %v1827, %v1826
      %v1833 = vpack.c.bf16 %v1829, %v1828
      %1834 = vst [vmem:[#allocation2] sm:$0xff] %v1830
      %1835 = vst [vmem:[#allocation2 + $0x10] sm:$0xff] %v1831
      %1836 = vst [vmem:[#allocation2 + $0x20] sm:$0xff] %v1832
      %1837 = vst [vmem:[#allocation2 + $0x30] sm:$0xff] %v1833
      %1838 = vrot.lane.b32.xlu0 %v1784, 16
      %v1839 = vpop.permute.xlu0 %1838
      %1840 = vrot.lane.b32.xlu0 %v1786, 16
      %v1841 = vpop.permute.xlu0 %1840
      %1842 = vrot.lane.b32.xlu0 %v1788, 16
      %v1843 = vpop.permute.xlu0 %1842
      %1844 = vrot.lane.b32.xlu0 %v1790, 16
      %v1845 = vpop.permute.xlu0 %1844
      %1846 = vrot.lane.b32.xlu0 %v1785, 16
      %v1847 = vpop.permute.xlu0 %1846
      %1848 = vrot.lane.b32.xlu0 %v1787, 16
      %v1849 = vpop.permute.xlu0 %1848
      %1850 = vrot.lane.b32.xlu0 %v1789, 16
      %v1851 = vpop.permute.xlu0 %1850
      %1852 = vrot.lane.b32.xlu0 %v1791, 16
      %v1853 = vpop.permute.xlu0 %1852
      %v1854 = vsel %vm334, %v1839, %v1847
      %v1855 = vsel %vm334, %v1841, %v1849
      %v1856 = vsel %vm334, %v1843, %v1851
      %v1857 = vsel %vm334, %v1845, %v1853
      %v1858 = vsel %vm334, %v1847, %v1839
      %v1859 = vsel %vm334, %v1849, %v1841
      %v1860 = vsel %vm334, %v1851, %v1843
      %v1861 = vsel %vm334, %v1853, %v1845
      %v1862 = vld [vmem:[%s343] ss:$8 sm:$0x3]
      %v1864 = vperm.slane %v1862, 0
      %v1865 = vperm.slane %v1862, 1
      %v1868 = vmul.f32 %v1858, %v1864
      %v1869 = vmul.f32 %v1854, %v1865
      %v1870 = vmul.f32 %v1859, %v1864
      %v1871 = vmul.f32 %v1855, %v1865
      %v1872 = vmul.f32 %v1860, %v1864
      %v1873 = vmul.f32 %v1856, %v1865
      %v1874 = vmul.f32 %v1861, %v1864
      %v1875 = vmul.f32 %v1857, %v1865
      %v1876 = vpack.c.bf16 %v1869, %v1868
      %v1877 = vpack.c.bf16 %v1871, %v1870
      %v1878 = vpack.c.bf16 %v1873, %v1872
      %v1879 = vpack.c.bf16 %v1875, %v1874
      %1880 = vst [vmem:[#allocation2 + $0x40] sm:$0xff] %v1876
      %1881 = vst [vmem:[#allocation2 + $0x50] sm:$0xff] %v1877
      %1882 = vst [vmem:[#allocation2 + $0x60] sm:$0xff] %v1878
      %1883 = vst [vmem:[#allocation2 + $0x70] sm:$0xff] %v1879
      %1884 = vrot.lane.b32.xlu0 %v1784, 15
      %v1885 = vpop.permute.xlu0 %1884
      %1886 = vrot.lane.b32.xlu0 %v1786, 15
      %v1887 = vpop.permute.xlu0 %1886
      %1888 = vrot.lane.b32.xlu0 %v1788, 15
      %v1889 = vpop.permute.xlu0 %1888
      %1890 = vrot.lane.b32.xlu0 %v1790, 15
      %v1891 = vpop.permute.xlu0 %1890
      %1892 = vrot.lane.b32.xlu0 %v1785, 15
      %v1893 = vpop.permute.xlu0 %1892
      %1894 = vrot.lane.b32.xlu0 %v1787, 15
      %v1895 = vpop.permute.xlu0 %1894
      %1896 = vrot.lane.b32.xlu0 %v1789, 15
      %v1897 = vpop.permute.xlu0 %1896
      %1898 = vrot.lane.b32.xlu0 %v1791, 15
      %v1899 = vpop.permute.xlu0 %1898
      %v1900 = vsel %vm382, %v1885, %v1893
      %v1901 = vsel %vm382, %v1887, %v1895
      %v1902 = vsel %vm382, %v1889, %v1897
      %v1903 = vsel %vm382, %v1891, %v1899
      %v1904 = vsel %vm382, %v1893, %v1885
      %v1905 = vsel %vm382, %v1895, %v1887
      %v1906 = vsel %vm382, %v1897, %v1889
      %v1907 = vsel %vm382, %v1899, %v1891
      %v1908 = vld [vmem:[%s391] ss:$8 sm:$0x3]
      %v1910 = vperm.slane %v1908, 0
      %v1911 = vperm.slane %v1908, 1
      %v1914 = vmul.f32 %v1904, %v1910
      %v1915 = vmul.f32 %v1900, %v1911
      %v1916 = vmul.f32 %v1905, %v1910
      %v1917 = vmul.f32 %v1901, %v1911
      %v1918 = vmul.f32 %v1906, %v1910
      %v1919 = vmul.f32 %v1902, %v1911
      %v1920 = vmul.f32 %v1907, %v1910
      %v1921 = vmul.f32 %v1903, %v1911
      %v1922 = vpack.c.bf16 %v1915, %v1914
      %v1923 = vpack.c.bf16 %v1917, %v1916
      %v1924 = vpack.c.bf16 %v1919, %v1918
      %v1925 = vpack.c.bf16 %v1921, %v1920
      %1926 = vst [vmem:[#allocation2 + $0x80] sm:$0xff] %v1922
      %1927 = vst [vmem:[#allocation2 + $0x90] sm:$0xff] %v1923
      %1928 = vst [vmem:[#allocation2 + $0xa0] sm:$0xff] %v1924
      %1929 = vst [vmem:[#allocation2 + $0xb0] sm:$0xff] %v1925
      %1930 = vrot.lane.b32.xlu0 %v1784, 1
      %v1931 = vpop.permute.xlu0 %1930
      %1932 = vrot.lane.b32.xlu0 %v1786, 1
      %v1933 = vpop.permute.xlu0 %1932
      %1934 = vrot.lane.b32.xlu0 %v1788, 1
      %v1935 = vpop.permute.xlu0 %1934
      %1936 = vrot.lane.b32.xlu0 %v1790, 1
      %v1937 = vpop.permute.xlu0 %1936
      %1938 = vrot.lane.b32.xlu0 %v1785, 1
      %v1939 = vpop.permute.xlu0 %1938
      %1940 = vrot.lane.b32.xlu0 %v1787, 1
      %v1941 = vpop.permute.xlu0 %1940
      %1942 = vrot.lane.b32.xlu0 %v1789, 1
      %v1943 = vpop.permute.xlu0 %1942
      %1944 = vrot.lane.b32.xlu0 %v1791, 1
      %v1945 = vpop.permute.xlu0 %1944
      %v1946 = vsel %vm430, %v1931, %v1939
      %v1947 = vsel %vm430, %v1933, %v1941
      %v1948 = vsel %vm430, %v1935, %v1943
      %v1949 = vsel %vm430, %v1937, %v1945
      %v1950 = vsel %vm430, %v1939, %v1931
      %v1951 = vsel %vm430, %v1941, %v1933
      %v1952 = vsel %vm430, %v1943, %v1935
      %v1953 = vsel %vm430, %v1945, %v1937
      %v1954 = vld [vmem:[%s439] ss:$8 sm:$0x3]
      %v1956 = vperm.slane %v1954, 0
      %v1957 = vperm.slane %v1954, 1
      %v1960 = vmul.f32 %v1950, %v1956
      %v1961 = vmul.f32 %v1946, %v1957
      %v1962 = vmul.f32 %v1951, %v1956
      %v1963 = vmul.f32 %v1947, %v1957
      %v1964 = vmul.f32 %v1952, %v1956
      %v1965 = vmul.f32 %v1948, %v1957
      %v1966 = vmul.f32 %v1953, %v1956
      %v1967 = vmul.f32 %v1949, %v1957
      %v1968 = vpack.c.bf16 %v1961, %v1960
      %v1969 = vpack.c.bf16 %v1963, %v1962
      %v1970 = vpack.c.bf16 %v1965, %v1964
      %v1971 = vpack.c.bf16 %v1967, %v1966
      %1972 = vst [vmem:[#allocation2 + $0xc0] sm:$0xff] %v1968
      %1973 = vst [vmem:[#allocation2 + $0xd0] sm:$0xff] %v1969
      %1974 = vst [vmem:[#allocation2 + $0xe0] sm:$0xff] %v1970
      %1975 = vst [vmem:[#allocation2 + $0xf0] sm:$0xff] %v1971
      %v1976 = vpack.c.bf16 %v1785, %v1784
      %v1977 = vpack.c.bf16 %v1787, %v1786
      %v1978 = vpack.c.bf16 %v1789, %v1788
      %v1979 = vpack.c.bf16 %v1791, %v1790
      %1980 = vst [vmem:[#allocation2 + $0x100] sm:$0xff] %v1976
      %1981 = vst [vmem:[#allocation2 + $0x110] sm:$0xff] %v1977
      %1982 = vst [vmem:[#allocation2 + $0x120] sm:$0xff] %v1978
      %1983 = vst [vmem:[#allocation2 + $0x130] sm:$0xff] %v1979
      %1984 = vrot.lane.b32.xlu0 %v1784, 127
      %v1985 = vpop.permute.xlu0 %1984
      %1986 = vrot.lane.b32.xlu0 %v1786, 127
      %v1987 = vpop.permute.xlu0 %1986
      %1988 = vrot.lane.b32.xlu0 %v1788, 127
      %v1989 = vpop.permute.xlu0 %1988
      %1990 = vrot.lane.b32.xlu0 %v1790, 127
      %v1991 = vpop.permute.xlu0 %1990
      %1992 = vrot.lane.b32.xlu0 %v1785, 127
      %v1993 = vpop.permute.xlu0 %1992
      %1994 = vrot.lane.b32.xlu0 %v1787, 127
      %v1995 = vpop.permute.xlu0 %1994
      %1996 = vrot.lane.b32.xlu0 %v1789, 127
      %v1997 = vpop.permute.xlu0 %1996
      %1998 = vrot.lane.b32.xlu0 %v1791, 127
      %v1999 = vpop.permute.xlu0 %1998
      %v2000 = vsel %vm486, %v1985, %v1993
      %v2001 = vsel %vm486, %v1987, %v1995
      %v2002 = vsel %vm486, %v1989, %v1997
      %v2003 = vsel %vm486, %v1991, %v1999
      %v2004 = vsel %vm486, %v1993, %v1985
      %v2005 = vsel %vm486, %v1995, %v1987
      %v2006 = vsel %vm486, %v1997, %v1989
      %v2007 = vsel %vm486, %v1999, %v1991
      %v2008 = vld [vmem:[%s495] ss:$8 sm:$0x3]
      %v2010 = vperm.slane %v2008, 0
      %v2011 = vperm.slane %v2008, 1
      %v2014 = vmul.f32 %v2000, %v2010
      %v2015 = vmul.f32 %v2004, %v2011
      %v2016 = vmul.f32 %v2001, %v2010
      %v2017 = vmul.f32 %v2005, %v2011
      %v2018 = vmul.f32 %v2002, %v2010
      %v2019 = vmul.f32 %v2006, %v2011
      %v2020 = vmul.f32 %v2003, %v2010
      %v2021 = vmul.f32 %v2007, %v2011
      %v2022 = vpack.c.bf16 %v2015, %v2014
      %v2023 = vpack.c.bf16 %v2017, %v2016
      %v2024 = vpack.c.bf16 %v2019, %v2018
      %v2025 = vpack.c.bf16 %v2021, %v2020
      %2026 = vst [vmem:[#allocation2 + $0x140] sm:$0xff] %v2022
      %2027 = vst [vmem:[#allocation2 + $0x150] sm:$0xff] %v2023
      %2028 = vst [vmem:[#allocation2 + $0x160] sm:$0xff] %v2024
      %2029 = vst [vmem:[#allocation2 + $0x170] sm:$0xff] %v2025
      %2030 = vrot.lane.b32.xlu0 %v1784, 113
      %v2031 = vpop.permute.xlu0 %2030
      %2032 = vrot.lane.b32.xlu0 %v1786, 113
      %v2033 = vpop.permute.xlu0 %2032
      %2034 = vrot.lane.b32.xlu0 %v1788, 113
      %v2035 = vpop.permute.xlu0 %2034
      %2036 = vrot.lane.b32.xlu0 %v1790, 113
      %v2037 = vpop.permute.xlu0 %2036
      %2038 = vrot.lane.b32.xlu0 %v1785, 113
      %v2039 = vpop.permute.xlu0 %2038
      %2040 = vrot.lane.b32.xlu0 %v1787, 113
      %v2041 = vpop.permute.xlu0 %2040
      %2042 = vrot.lane.b32.xlu0 %v1789, 113
      %v2043 = vpop.permute.xlu0 %2042
      %2044 = vrot.lane.b32.xlu0 %v1791, 113
      %v2045 = vpop.permute.xlu0 %2044
      %v2046 = vsel %vm534, %v2031, %v2039
      %v2047 = vsel %vm534, %v2033, %v2041
      %v2048 = vsel %vm534, %v2035, %v2043
      %v2049 = vsel %vm534, %v2037, %v2045
      %v2050 = vsel %vm534, %v2039, %v2031
      %v2051 = vsel %vm534, %v2041, %v2033
      %v2052 = vsel %vm534, %v2043, %v2035
      %v2053 = vsel %vm534, %v2045, %v2037
      %v2054 = vld [vmem:[%s543] ss:$8 sm:$0x3]
      %v2056 = vperm.slane %v2054, 0
      %v2057 = vperm.slane %v2054, 1
      %v2060 = vmul.f32 %v2046, %v2056
      %v2061 = vmul.f32 %v2050, %v2057
      %v2062 = vmul.f32 %v2047, %v2056
      %v2063 = vmul.f32 %v2051, %v2057
      %v2064 = vmul.f32 %v2048, %v2056
      %v2065 = vmul.f32 %v2052, %v2057
      %v2066 = vmul.f32 %v2049, %v2056
      %v2067 = vmul.f32 %v2053, %v2057
      %v2068 = vpack.c.bf16 %v2061, %v2060
      %v2069 = vpack.c.bf16 %v2063, %v2062
      %v2070 = vpack.c.bf16 %v2065, %v2064
      %v2071 = vpack.c.bf16 %v2067, %v2066
      %2072 = vst [vmem:[#allocation2 + $0x180] sm:$0xff] %v2068
      %2073 = vst [vmem:[#allocation2 + $0x190] sm:$0xff] %v2069
      %2074 = vst [vmem:[#allocation2 + $0x1a0] sm:$0xff] %v2070
      %2075 = vst [vmem:[#allocation2 + $0x1b0] sm:$0xff] %v2071
      %2076 = vrot.lane.b32.xlu0 %v1784, 112
      %v2077 = vpop.permute.xlu0 %2076
      %2078 = vrot.lane.b32.xlu0 %v1786, 112
      %v2079 = vpop.permute.xlu0 %2078
      %2080 = vrot.lane.b32.xlu0 %v1788, 112
      %v2081 = vpop.permute.xlu0 %2080
      %2082 = vrot.lane.b32.xlu0 %v1790, 112
      %v2083 = vpop.permute.xlu0 %2082
      %2084 = vrot.lane.b32.xlu0 %v1785, 112
      %v2085 = vpop.permute.xlu0 %2084
      %2086 = vrot.lane.b32.xlu0 %v1787, 112
      %v2087 = vpop.permute.xlu0 %2086
      %2088 = vrot.lane.b32.xlu0 %v1789, 112
      %v2089 = vpop.permute.xlu0 %2088
      %2090 = vrot.lane.b32.xlu0 %v1791, 112
      %v2091 = vpop.permute.xlu0 %2090
      %v2092 = vsel %vm582, %v2077, %v2085
      %v2093 = vsel %vm582, %v2079, %v2087
      %v2094 = vsel %vm582, %v2081, %v2089
      %v2095 = vsel %vm582, %v2083, %v2091
      %v2096 = vsel %vm582, %v2085, %v2077
      %v2097 = vsel %vm582, %v2087, %v2079
      %v2098 = vsel %vm582, %v2089, %v2081
      %v2099 = vsel %vm582, %v2091, %v2083
      %v2100 = vld [vmem:[%s591] ss:$8 sm:$0x3]
      %v2102 = vperm.slane %v2100, 0
      %v2103 = vperm.slane %v2100, 1
      %v2106 = vmul.f32 %v2092, %v2102
      %v2107 = vmul.f32 %v2096, %v2103
      %v2108 = vmul.f32 %v2093, %v2102
      %v2109 = vmul.f32 %v2097, %v2103
      %v2110 = vmul.f32 %v2094, %v2102
      %v2111 = vmul.f32 %v2098, %v2103
      %v2112 = vmul.f32 %v2095, %v2102
      %v2113 = vmul.f32 %v2099, %v2103
      %v2114 = vpack.c.bf16 %v2107, %v2106
      %v2115 = vpack.c.bf16 %v2109, %v2108
      %v2116 = vpack.c.bf16 %v2111, %v2110
      %v2117 = vpack.c.bf16 %v2113, %v2112
      %2118 = vst [vmem:[#allocation2 + $0x1c0] sm:$0xff] %v2114
      %2119 = vst [vmem:[#allocation2 + $0x1d0] sm:$0xff] %v2115
      %2120 = vst [vmem:[#allocation2 + $0x1e0] sm:$0xff] %v2116
      %2121 = vst [vmem:[#allocation2 + $0x1f0] sm:$0xff] %v2117
      %2122 = vrot.lane.b32.xlu0 %v1784, 111
      %v2123 = vpop.permute.xlu0 %2122
      %2124 = vrot.lane.b32.xlu0 %v1786, 111
      %v2125 = vpop.permute.xlu0 %2124
      %2126 = vrot.lane.b32.xlu0 %v1788, 111
      %v2127 = vpop.permute.xlu0 %2126
      %2128 = vrot.lane.b32.xlu0 %v1790, 111
      %v2129 = vpop.permute.xlu0 %2128
      %2130 = vrot.lane.b32.xlu0 %v1785, 111
      %v2131 = vpop.permute.xlu0 %2130
      %2132 = vrot.lane.b32.xlu0 %v1787, 111
      %v2133 = vpop.permute.xlu0 %2132
      %2134 = vrot.lane.b32.xlu0 %v1789, 111
      %v2135 = vpop.permute.xlu0 %2134
      %2136 = vrot.lane.b32.xlu0 %v1791, 111
      %v2137 = vpop.permute.xlu0 %2136
      %v2138 = vsel %vm630, %v2123, %v2131
      %v2139 = vsel %vm630, %v2125, %v2133
      %v2140 = vsel %vm630, %v2127, %v2135
      %v2141 = vsel %vm630, %v2129, %v2137
      %v2142 = vsel %vm630, %v2131, %v2123
      %v2143 = vsel %vm630, %v2133, %v2125
      %v2144 = vsel %vm630, %v2135, %v2127
      %v2145 = vsel %vm630, %v2137, %v2129
      %v2146 = vld [vmem:[%s639] ss:$8 sm:$0x3]
      %v2148 = vperm.slane %v2146, 0
      %v2149 = vperm.slane %v2146, 1
      %v2152 = vmul.f32 %v2138, %v2148
      %v2153 = vmul.f32 %v2142, %v2149
      %v2154 = vmul.f32 %v2139, %v2148
      %v2155 = vmul.f32 %v2143, %v2149
      %v2156 = vmul.f32 %v2140, %v2148
      %v2157 = vmul.f32 %v2144, %v2149
      %v2158 = vmul.f32 %v2141, %v2148
      %v2159 = vmul.f32 %v2145, %v2149
      %v2160 = vpack.c.bf16 %v2153, %v2152
      %v2161 = vpack.c.bf16 %v2155, %v2154
      %v2162 = vpack.c.bf16 %v2157, %v2156
      %v2163 = vpack.c.bf16 %v2159, %v2158
      %2164 = vst [vmem:[#allocation2 + $0x200] sm:$0xff] %v2160
      %2165 = vst [vmem:[#allocation2 + $0x210] sm:$0xff] %v2161
      %2166 = vst [vmem:[#allocation2 + $0x220] sm:$0xff] %v2162
      %2167 = vst [vmem:[#allocation2 + $0x230] sm:$0xff] %v2163
      %v2168 = vld [vmem:[#allocation3 + $0x10] sm:$0xff]
      %v2169 = vld [vmem:[#allocation3 + $0x18] sm:$0xff]
      %v2170 = vld [vmem:[#allocation3 + $0x30] sm:$0xff]
      %v2171 = vld [vmem:[#allocation3 + $0x38] sm:$0xff]
      %v2172 = vld [vmem:[#allocation3 + $0x50] sm:$0xff]
      %v2173 = vld [vmem:[#allocation3 + $0x58] sm:$0xff]
      %v2174 = vld [vmem:[#allocation3 + $0x70] sm:$0xff]
      %v2175 = vld [vmem:[#allocation3 + $0x78] sm:$0xff]
      %2176 = vrot.lane.b32.xlu0 %v2168, 17
      %v2177 = vpop.permute.xlu0 %2176
      %2178 = vrot.lane.b32.xlu0 %v2170, 17
      %v2179 = vpop.permute.xlu0 %2178
      %2180 = vrot.lane.b32.xlu0 %v2172, 17
      %v2181 = vpop.permute.xlu0 %2180
      %2182 = vrot.lane.b32.xlu0 %v2174, 17
      %v2183 = vpop.permute.xlu0 %2182
      %2184 = vrot.lane.b32.xlu0 %v2169, 17
      %v2185 = vpop.permute.xlu0 %2184
      %2186 = vrot.lane.b32.xlu0 %v2171, 17
      %v2187 = vpop.permute.xlu0 %2186
      %2188 = vrot.lane.b32.xlu0 %v2173, 17
      %v2189 = vpop.permute.xlu0 %2188
      %2190 = vrot.lane.b32.xlu0 %v2175, 17
      %v2191 = vpop.permute.xlu0 %2190
      %v2192 = vsel %vm287, %v2177, %v2185
      %v2193 = vsel %vm287, %v2179, %v2187
      %v2194 = vsel %vm287, %v2181, %v2189
      %v2195 = vsel %vm287, %v2183, %v2191
      %v2196 = vsel %vm287, %v2185, %v2177
      %v2197 = vsel %vm287, %v2187, %v2179
      %v2198 = vsel %vm287, %v2189, %v2181
      %v2199 = vsel %vm287, %v2191, %v2183
      %v2200 = vld [vmem:[%s1] ss:$8 sm:$0x3]
      %v2202 = vperm.slane %v2200, 0
      %v2203 = vperm.slane %v2200, 1
      %v2206 = vmul.f32 %v2196, %v2202
      %v2207 = vmul.f32 %v2192, %v2203
      %v2208 = vmul.f32 %v2197, %v2202
      %v2209 = vmul.f32 %v2193, %v2203
      %v2210 = vmul.f32 %v2198, %v2202
      %v2211 = vmul.f32 %v2194, %v2203
      %v2212 = vmul.f32 %v2199, %v2202
      %v2213 = vmul.f32 %v2195, %v2203
      %v2214 = vpack.c.bf16 %v2207, %v2206
      %v2215 = vpack.c.bf16 %v2209, %v2208
      %v2216 = vpack.c.bf16 %v2211, %v2210
      %v2217 = vpack.c.bf16 %v2213, %v2212
      %2218 = vst [vmem:[#allocation2 + $0x8] sm:$0xff] %v2214
      %2219 = vst [vmem:[#allocation2 + $0x18] sm:$0xff] %v2215
      %2220 = vst [vmem:[#allocation2 + $0x28] sm:$0xff] %v2216
      %2221 = vst [vmem:[#allocation2 + $0x38] sm:$0xff] %v2217
      %2222 = vrot.lane.b32.xlu0 %v2168, 16
      %v2223 = vpop.permute.xlu0 %2222
      %2224 = vrot.lane.b32.xlu0 %v2170, 16
      %v2225 = vpop.permute.xlu0 %2224
      %2226 = vrot.lane.b32.xlu0 %v2172, 16
      %v2227 = vpop.permute.xlu0 %2226
      %2228 = vrot.lane.b32.xlu0 %v2174, 16
      %v2229 = vpop.permute.xlu0 %2228
      %2230 = vrot.lane.b32.xlu0 %v2169, 16
      %v2231 = vpop.permute.xlu0 %2230
      %2232 = vrot.lane.b32.xlu0 %v2171, 16
      %v2233 = vpop.permute.xlu0 %2232
      %2234 = vrot.lane.b32.xlu0 %v2173, 16
      %v2235 = vpop.permute.xlu0 %2234
      %2236 = vrot.lane.b32.xlu0 %v2175, 16
      %v2237 = vpop.permute.xlu0 %2236
      %v2238 = vsel %vm334, %v2223, %v2231
      %v2239 = vsel %vm334, %v2225, %v2233
      %v2240 = vsel %vm334, %v2227, %v2235
      %v2241 = vsel %vm334, %v2229, %v2237
      %v2242 = vsel %vm334, %v2231, %v2223
      %v2243 = vsel %vm334, %v2233, %v2225
      %v2244 = vsel %vm334, %v2235, %v2227
      %v2245 = vsel %vm334, %v2237, %v2229
      %v2246 = vld [vmem:[%s343] ss:$8 sm:$0x3]
      %v2248 = vperm.slane %v2246, 0
      %v2249 = vperm.slane %v2246, 1
      %v2252 = vmul.f32 %v2242, %v2248
      %v2253 = vmul.f32 %v2238, %v2249
      %v2254 = vmul.f32 %v2243, %v2248
      %v2255 = vmul.f32 %v2239, %v2249
      %v2256 = vmul.f32 %v2244, %v2248
      %v2257 = vmul.f32 %v2240, %v2249
      %v2258 = vmul.f32 %v2245, %v2248
      %v2259 = vmul.f32 %v2241, %v2249
      %v2260 = vpack.c.bf16 %v2253, %v2252
      %v2261 = vpack.c.bf16 %v2255, %v2254
      %v2262 = vpack.c.bf16 %v2257, %v2256
      %v2263 = vpack.c.bf16 %v2259, %v2258
      %2264 = vst [vmem:[#allocation2 + $0x48] sm:$0xff] %v2260
      %2265 = vst [vmem:[#allocation2 + $0x58] sm:$0xff] %v2261
      %2266 = vst [vmem:[#allocation2 + $0x68] sm:$0xff] %v2262
      %2267 = vst [vmem:[#allocation2 + $0x78] sm:$0xff] %v2263
      %2268 = vrot.lane.b32.xlu0 %v2168, 15
      %v2269 = vpop.permute.xlu0 %2268
      %2270 = vrot.lane.b32.xlu0 %v2170, 15
      %v2271 = vpop.permute.xlu0 %2270
      %2272 = vrot.lane.b32.xlu0 %v2172, 15
      %v2273 = vpop.permute.xlu0 %2272
      %2274 = vrot.lane.b32.xlu0 %v2174, 15
      %v2275 = vpop.permute.xlu0 %2274
      %2276 = vrot.lane.b32.xlu0 %v2169, 15
      %v2277 = vpop.permute.xlu0 %2276
      %2278 = vrot.lane.b32.xlu0 %v2171, 15
      %v2279 = vpop.permute.xlu0 %2278
      %2280 = vrot.lane.b32.xlu0 %v2173, 15
      %v2281 = vpop.permute.xlu0 %2280
      %2282 = vrot.lane.b32.xlu0 %v2175, 15
      %v2283 = vpop.permute.xlu0 %2282
      %v2284 = vsel %vm382, %v2269, %v2277
      %v2285 = vsel %vm382, %v2271, %v2279
      %v2286 = vsel %vm382, %v2273, %v2281
      %v2287 = vsel %vm382, %v2275, %v2283
      %v2288 = vsel %vm382, %v2277, %v2269
      %v2289 = vsel %vm382, %v2279, %v2271
      %v2290 = vsel %vm382, %v2281, %v2273
      %v2291 = vsel %vm382, %v2283, %v2275
      %v2292 = vld [vmem:[%s391] ss:$8 sm:$0x3]
      %v2294 = vperm.slane %v2292, 0
      %v2295 = vperm.slane %v2292, 1
      %v2298 = vmul.f32 %v2288, %v2294
      %v2299 = vmul.f32 %v2284, %v2295
      %v2300 = vmul.f32 %v2289, %v2294
      %v2301 = vmul.f32 %v2285, %v2295
      %v2302 = vmul.f32 %v2290, %v2294
      %v2303 = vmul.f32 %v2286, %v2295
      %v2304 = vmul.f32 %v2291, %v2294
      %v2305 = vmul.f32 %v2287, %v2295
      %v2306 = vpack.c.bf16 %v2299, %v2298
      %v2307 = vpack.c.bf16 %v2301, %v2300
      %v2308 = vpack.c.bf16 %v2303, %v2302
      %v2309 = vpack.c.bf16 %v2305, %v2304
      %2310 = vst [vmem:[#allocation2 + $0x88] sm:$0xff] %v2306
      %2311 = vst [vmem:[#allocation2 + $0x98] sm:$0xff] %v2307
      %2312 = vst [vmem:[#allocation2 + $0xa8] sm:$0xff] %v2308
      %2313 = vst [vmem:[#allocation2 + $0xb8] sm:$0xff] %v2309
      %2314 = vrot.lane.b32.xlu0 %v2168, 1
      %v2315 = vpop.permute.xlu0 %2314
      %2316 = vrot.lane.b32.xlu0 %v2170, 1
      %v2317 = vpop.permute.xlu0 %2316
      %2318 = vrot.lane.b32.xlu0 %v2172, 1
      %v2319 = vpop.permute.xlu0 %2318
      %2320 = vrot.lane.b32.xlu0 %v2174, 1
      %v2321 = vpop.permute.xlu0 %2320
      %2322 = vrot.lane.b32.xlu0 %v2169, 1
      %v2323 = vpop.permute.xlu0 %2322
      %2324 = vrot.lane.b32.xlu0 %v2171, 1
      %v2325 = vpop.permute.xlu0 %2324
      %2326 = vrot.lane.b32.xlu0 %v2173, 1
      %v2327 = vpop.permute.xlu0 %2326
      %2328 = vrot.lane.b32.xlu0 %v2175, 1
      %v2329 = vpop.permute.xlu0 %2328
      %v2330 = vsel %vm430, %v2315, %v2323
      %v2331 = vsel %vm430, %v2317, %v2325
      %v2332 = vsel %vm430, %v2319, %v2327
      %v2333 = vsel %vm430, %v2321, %v2329
      %v2334 = vsel %vm430, %v2323, %v2315
      %v2335 = vsel %vm430, %v2325, %v2317
      %v2336 = vsel %vm430, %v2327, %v2319
      %v2337 = vsel %vm430, %v2329, %v2321
      %v2338 = vld [vmem:[%s439] ss:$8 sm:$0x3]
      %v2340 = vperm.slane %v2338, 0
      %v2341 = vperm.slane %v2338, 1
      %v2344 = vmul.f32 %v2334, %v2340
      %v2345 = vmul.f32 %v2330, %v2341
      %v2346 = vmul.f32 %v2335, %v2340
      %v2347 = vmul.f32 %v2331, %v2341
      %v2348 = vmul.f32 %v2336, %v2340
      %v2349 = vmul.f32 %v2332, %v2341
      %v2350 = vmul.f32 %v2337, %v2340
      %v2351 = vmul.f32 %v2333, %v2341
      %v2352 = vpack.c.bf16 %v2345, %v2344
      %v2353 = vpack.c.bf16 %v2347, %v2346
      %v2354 = vpack.c.bf16 %v2349, %v2348
      %v2355 = vpack.c.bf16 %v2351, %v2350
      %2356 = vst [vmem:[#allocation2 + $0xc8] sm:$0xff] %v2352
      %2357 = vst [vmem:[#allocation2 + $0xd8] sm:$0xff] %v2353
      %2358 = vst [vmem:[#allocation2 + $0xe8] sm:$0xff] %v2354
      %2359 = vst [vmem:[#allocation2 + $0xf8] sm:$0xff] %v2355
      %v2360 = vpack.c.bf16 %v2169, %v2168
      %v2361 = vpack.c.bf16 %v2171, %v2170
      %v2362 = vpack.c.bf16 %v2173, %v2172
      %v2363 = vpack.c.bf16 %v2175, %v2174
      %2364 = vst [vmem:[#allocation2 + $0x108] sm:$0xff] %v2360
      %2365 = vst [vmem:[#allocation2 + $0x118] sm:$0xff] %v2361
      %2366 = vst [vmem:[#allocation2 + $0x128] sm:$0xff] %v2362
      %2367 = vst [vmem:[#allocation2 + $0x138] sm:$0xff] %v2363
      %2368 = vrot.lane.b32.xlu0 %v2168, 127
      %v2369 = vpop.permute.xlu0 %2368
      %2370 = vrot.lane.b32.xlu0 %v2170, 127
      %v2371 = vpop.permute.xlu0 %2370
      %2372 = vrot.lane.b32.xlu0 %v2172, 127
      %v2373 = vpop.permute.xlu0 %2372
      %2374 = vrot.lane.b32.xlu0 %v2174, 127
      %v2375 = vpop.permute.xlu0 %2374
      %2376 = vrot.lane.b32.xlu0 %v2169, 127
      %v2377 = vpop.permute.xlu0 %2376
      %2378 = vrot.lane.b32.xlu0 %v2171, 127
      %v2379 = vpop.permute.xlu0 %2378
      %2380 = vrot.lane.b32.xlu0 %v2173, 127
      %v2381 = vpop.permute.xlu0 %2380
      %2382 = vrot.lane.b32.xlu0 %v2175, 127
      %v2383 = vpop.permute.xlu0 %2382
      %v2384 = vsel %vm486, %v2369, %v2377
      %v2385 = vsel %vm486, %v2371, %v2379
      %v2386 = vsel %vm486, %v2373, %v2381
      %v2387 = vsel %vm486, %v2375, %v2383
      %v2388 = vsel %vm486, %v2377, %v2369
      %v2389 = vsel %vm486, %v2379, %v2371
      %v2390 = vsel %vm486, %v2381, %v2373
      %v2391 = vsel %vm486, %v2383, %v2375
      %v2392 = vld [vmem:[%s495] ss:$8 sm:$0x3]
      %v2394 = vperm.slane %v2392, 0
      %v2395 = vperm.slane %v2392, 1
      %v2398 = vmul.f32 %v2384, %v2394
      %v2399 = vmul.f32 %v2388, %v2395
      %v2400 = vmul.f32 %v2385, %v2394
      %v2401 = vmul.f32 %v2389, %v2395
      %v2402 = vmul.f32 %v2386, %v2394
      %v2403 = vmul.f32 %v2390, %v2395
      %v2404 = vmul.f32 %v2387, %v2394
      %v2405 = vmul.f32 %v2391, %v2395
      %v2406 = vpack.c.bf16 %v2399, %v2398
      %v2407 = vpack.c.bf16 %v2401, %v2400
      %v2408 = vpack.c.bf16 %v2403, %v2402
      %v2409 = vpack.c.bf16 %v2405, %v2404
      %2410 = vst [vmem:[#allocation2 + $0x148] sm:$0xff] %v2406
      %2411 = vst [vmem:[#allocation2 + $0x158] sm:$0xff] %v2407
      %2412 = vst [vmem:[#allocation2 + $0x168] sm:$0xff] %v2408
      %2413 = vst [vmem:[#allocation2 + $0x178] sm:$0xff] %v2409
      %2414 = vrot.lane.b32.xlu0 %v2168, 113
      %v2415 = vpop.permute.xlu0 %2414
      %2416 = vrot.lane.b32.xlu0 %v2170, 113
      %v2417 = vpop.permute.xlu0 %2416
      %2418 = vrot.lane.b32.xlu0 %v2172, 113
      %v2419 = vpop.permute.xlu0 %2418
      %2420 = vrot.lane.b32.xlu0 %v2174, 113
      %v2421 = vpop.permute.xlu0 %2420
      %2422 = vrot.lane.b32.xlu0 %v2169, 113
      %v2423 = vpop.permute.xlu0 %2422
      %2424 = vrot.lane.b32.xlu0 %v2171, 113
      %v2425 = vpop.permute.xlu0 %2424
      %2426 = vrot.lane.b32.xlu0 %v2173, 113
      %v2427 = vpop.permute.xlu0 %2426
      %2428 = vrot.lane.b32.xlu0 %v2175, 113
      %v2429 = vpop.permute.xlu0 %2428
      %v2430 = vsel %vm534, %v2415, %v2423
      %v2431 = vsel %vm534, %v2417, %v2425
      %v2432 = vsel %vm534, %v2419, %v2427
      %v2433 = vsel %vm534, %v2421, %v2429
      %v2434 = vsel %vm534, %v2423, %v2415
      %v2435 = vsel %vm534, %v2425, %v2417
      %v2436 = vsel %vm534, %v2427, %v2419
      %v2437 = vsel %vm534, %v2429, %v2421
      %v2438 = vld [vmem:[%s543] ss:$8 sm:$0x3]
      %v2440 = vperm.slane %v2438, 0
      %v2441 = vperm.slane %v2438, 1
      %v2444 = vmul.f32 %v2430, %v2440
      %v2445 = vmul.f32 %v2434, %v2441
      %v2446 = vmul.f32 %v2431, %v2440
      %v2447 = vmul.f32 %v2435, %v2441
      %v2448 = vmul.f32 %v2432, %v2440
      %v2449 = vmul.f32 %v2436, %v2441
      %v2450 = vmul.f32 %v2433, %v2440
      %v2451 = vmul.f32 %v2437, %v2441
      %v2452 = vpack.c.bf16 %v2445, %v2444
      %v2453 = vpack.c.bf16 %v2447, %v2446
      %v2454 = vpack.c.bf16 %v2449, %v2448
      %v2455 = vpack.c.bf16 %v2451, %v2450
      %2456 = vst [vmem:[#allocation2 + $0x188] sm:$0xff] %v2452
      %2457 = vst [vmem:[#allocation2 + $0x198] sm:$0xff] %v2453
      %2458 = vst [vmem:[#allocation2 + $0x1a8] sm:$0xff] %v2454
      %2459 = vst [vmem:[#allocation2 + $0x1b8] sm:$0xff] %v2455
      %2460 = vrot.lane.b32.xlu0 %v2168, 112
      %v2461 = vpop.permute.xlu0 %2460
      %2462 = vrot.lane.b32.xlu0 %v2170, 112
      %v2463 = vpop.permute.xlu0 %2462
      %2464 = vrot.lane.b32.xlu0 %v2172, 112
      %v2465 = vpop.permute.xlu0 %2464
      %2466 = vrot.lane.b32.xlu0 %v2174, 112
      %v2467 = vpop.permute.xlu0 %2466
      %2468 = vrot.lane.b32.xlu0 %v2169, 112
      %v2469 = vpop.permute.xlu0 %2468
      %2470 = vrot.lane.b32.xlu0 %v2171, 112
      %v2471 = vpop.permute.xlu0 %2470
      %2472 = vrot.lane.b32.xlu0 %v2173, 112
      %v2473 = vpop.permute.xlu0 %2472
      %2474 = vrot.lane.b32.xlu0 %v2175, 112
      %v2475 = vpop.permute.xlu0 %2474
      %v2476 = vsel %vm582, %v2461, %v2469
      %v2477 = vsel %vm582, %v2463, %v2471
      %v2478 = vsel %vm582, %v2465, %v2473
      %v2479 = vsel %vm582, %v2467, %v2475
      %v2480 = vsel %vm582, %v2469, %v2461
      %v2481 = vsel %vm582, %v2471, %v2463
      %v2482 = vsel %vm582, %v2473, %v2465
      %v2483 = vsel %vm582, %v2475, %v2467
      %v2484 = vld [vmem:[%s591] ss:$8 sm:$0x3]
      %v2486 = vperm.slane %v2484, 0
      %v2487 = vperm.slane %v2484, 1
      %v2490 = vmul.f32 %v2476, %v2486
      %v2491 = vmul.f32 %v2480, %v2487
      %v2492 = vmul.f32 %v2477, %v2486
      %v2493 = vmul.f32 %v2481, %v2487
      %v2494 = vmul.f32 %v2478, %v2486
      %v2495 = vmul.f32 %v2482, %v2487
      %v2496 = vmul.f32 %v2479, %v2486
      %v2497 = vmul.f32 %v2483, %v2487
      %v2498 = vpack.c.bf16 %v2491, %v2490
      %v2499 = vpack.c.bf16 %v2493, %v2492
      %v2500 = vpack.c.bf16 %v2495, %v2494
      %v2501 = vpack.c.bf16 %v2497, %v2496
      %2502 = vst [vmem:[#allocation2 + $0x1c8] sm:$0xff] %v2498
      %2503 = vst [vmem:[#allocation2 + $0x1d8] sm:$0xff] %v2499
      %2504 = vst [vmem:[#allocation2 + $0x1e8] sm:$0xff] %v2500
      %2505 = vst [vmem:[#allocation2 + $0x1f8] sm:$0xff] %v2501
      %2506 = vrot.lane.b32.xlu0 %v2168, 111
      %v2507 = vpop.permute.xlu0 %2506
      %2508 = vrot.lane.b32.xlu0 %v2170, 111
      %v2509 = vpop.permute.xlu0 %2508
      %2510 = vrot.lane.b32.xlu0 %v2172, 111
      %v2511 = vpop.permute.xlu0 %2510
      %2512 = vrot.lane.b32.xlu0 %v2174, 111
      %v2513 = vpop.permute.xlu0 %2512
      %2514 = vrot.lane.b32.xlu0 %v2169, 111
      %v2515 = vpop.permute.xlu0 %2514
      %2516 = vrot.lane.b32.xlu0 %v2171, 111
      %v2517 = vpop.permute.xlu0 %2516
      %2518 = vrot.lane.b32.xlu0 %v2173, 111
      %v2519 = vpop.permute.xlu0 %2518
      %2520 = vrot.lane.b32.xlu0 %v2175, 111
      %v2521 = vpop.permute.xlu0 %2520
      %v2522 = vsel %vm630, %v2507, %v2515
      %v2523 = vsel %vm630, %v2509, %v2517
      %v2524 = vsel %vm630, %v2511, %v2519
      %v2525 = vsel %vm630, %v2513, %v2521
      %v2526 = vsel %vm630, %v2515, %v2507
      %v2527 = vsel %vm630, %v2517, %v2509
      %v2528 = vsel %vm630, %v2519, %v2511
      %v2529 = vsel %vm630, %v2521, %v2513
      %v2530 = vld [vmem:[%s639] ss:$8 sm:$0x3]
      %v2532 = vperm.slane %v2530, 0
      %v2533 = vperm.slane %v2530, 1
      %v2536 = vmul.f32 %v2522, %v2532
      %v2537 = vmul.f32 %v2526, %v2533
      %v2538 = vmul.f32 %v2523, %v2532
      %v2539 = vmul.f32 %v2527, %v2533
      %v2540 = vmul.f32 %v2524, %v2532
      %v2541 = vmul.f32 %v2528, %v2533
      %v2542 = vmul.f32 %v2525, %v2532
      %v2543 = vmul.f32 %v2529, %v2533
      %v2544 = vpack.c.bf16 %v2537, %v2536
      %v2545 = vpack.c.bf16 %v2539, %v2538
      %v2546 = vpack.c.bf16 %v2541, %v2540
      %v2547 = vpack.c.bf16 %v2543, %v2542
      %2548 = vst [vmem:[#allocation2 + $0x208] sm:$0xff] %v2544
      %2549 = vst [vmem:[#allocation2 + $0x218] sm:$0xff] %v2545
      %2550 = vst [vmem:[#allocation2 + $0x228] sm:$0xff] %v2546
      %2551 = vst [vmem:[#allocation2 + $0x238] sm:$0xff] %v2547
      %v2552 = vld [vmem:[%s3] sm:$0xff]
      %v2553 = vld [vmem:[%s3 + $0x8] sm:$0xf]
      %v2554 = vld [vmem:[%s3 + $0xc] sm:$0xff]
      %v2555 = vld [vmem:[%s3 + $0x14] sm:$0xf]
      %v2556 = vld [vmem:[%s3 + $0x18] sm:$0xff]
      %v2557 = vld [vmem:[%s3 + $0x20] sm:$0xf]
      %v2558 = vld [vmem:[%s3 + $0x24] sm:$0xff]
      %v2559 = vld [vmem:[%s3 + $0x2c] sm:$0xf]
      %v2560 = vld [vmem:[#allocation2] sm:$0xff]
      %v2561 = vld [vmem:[#allocation2 + $0x8] sm:$0xff]
      %v2562 = vld [vmem:[#allocation2 + $0x10] sm:$0xff]
      %v2563 = vld [vmem:[#allocation2 + $0x18] sm:$0xff]
      %v2564 = vld [vmem:[#allocation2 + $0x20] sm:$0xff]
      %v2565 = vld [vmem:[#allocation2 + $0x28] sm:$0xff]
      %v2566 = vld [vmem:[#allocation2 + $0x30] sm:$0xff]
      %v2567 = vld [vmem:[#allocation2 + $0x38] sm:$0xff]
      %v2568 = vld [vmem:[#allocation2 + $0x40] sm:$0xff]
      %v2569 = vld [vmem:[#allocation2 + $0x48] sm:$0xff]
      %v2570 = vld [vmem:[#allocation2 + $0x50] sm:$0xff]
      %v2571 = vld [vmem:[#allocation2 + $0x58] sm:$0xff]
      %v2572 = vld [vmem:[#allocation2 + $0x60] sm:$0xff]
      %v2573 = vld [vmem:[#allocation2 + $0x68] sm:$0xff]
      %v2574 = vld [vmem:[#allocation2 + $0x70] sm:$0xff]
      %v2575 = vld [vmem:[#allocation2 + $0x78] sm:$0xff]
      %v2576 = vld [vmem:[#allocation2 + $0x80] sm:$0xff]
      %v2577 = vld [vmem:[#allocation2 + $0x88] sm:$0xff]
      %v2578 = vld [vmem:[#allocation2 + $0x90] sm:$0xff]
      %v2579 = vld [vmem:[#allocation2 + $0x98] sm:$0xff]
      %v2580 = vld [vmem:[#allocation2 + $0xa0] sm:$0xff]
      %v2581 = vld [vmem:[#allocation2 + $0xa8] sm:$0xff]
      %v2582 = vld [vmem:[#allocation2 + $0xb0] sm:$0xff]
      %v2583 = vld [vmem:[#allocation2 + $0xb8] sm:$0xff]
      %v2584 = vld [vmem:[#allocation2 + $0xc0] sm:$0xff]
      %v2585 = vld [vmem:[#allocation2 + $0xc8] sm:$0xff]
      %v2586 = vld [vmem:[#allocation2 + $0xd0] sm:$0xff]
      %v2587 = vld [vmem:[#allocation2 + $0xd8] sm:$0xff]
      %v2588 = vld [vmem:[#allocation2 + $0xe0] sm:$0xff]
      %v2589 = vld [vmem:[#allocation2 + $0xe8] sm:$0xff]
      %v2590 = vld [vmem:[#allocation2 + $0xf0] sm:$0xff]
      %v2591 = vld [vmem:[#allocation2 + $0xf8] sm:$0xff]
      %v2592 = vld [vmem:[#allocation2 + $0x100] sm:$0xff]
      %v2593 = vld [vmem:[#allocation2 + $0x108] sm:$0xff]
      %v2594 = vld [vmem:[#allocation2 + $0x110] sm:$0xff]
      %v2595 = vld [vmem:[#allocation2 + $0x118] sm:$0xff]
      %v2596 = vld [vmem:[#allocation2 + $0x120] sm:$0xff]
      %v2597 = vld [vmem:[#allocation2 + $0x128] sm:$0xff]
      %v2598 = vld [vmem:[#allocation2 + $0x130] sm:$0xff]
      %v2599 = vld [vmem:[#allocation2 + $0x138] sm:$0xff]
      %v2600 = vld [vmem:[#allocation2 + $0x140] sm:$0xff]
      %v2601 = vld [vmem:[#allocation2 + $0x148] sm:$0xff]
      %v2602 = vld [vmem:[#allocation2 + $0x150] sm:$0xff]
      %v2603 = vld [vmem:[#allocation2 + $0x158] sm:$0xff]
      %v2604 = vld [vmem:[#allocation2 + $0x160] sm:$0xff]
      %v2605 = vld [vmem:[#allocation2 + $0x168] sm:$0xff]
      %v2606 = vld [vmem:[#allocation2 + $0x170] sm:$0xff]
      %v2607 = vld [vmem:[#allocation2 + $0x178] sm:$0xff]
      %v2608 = vld [vmem:[#allocation2 + $0x180] sm:$0xff]
      %v2609 = vld [vmem:[#allocation2 + $0x188] sm:$0xff]
      %v2610 = vld [vmem:[#allocation2 + $0x190] sm:$0xff]
      %v2611 = vld [vmem:[#allocation2 + $0x198] sm:$0xff]
      %v2612 = vld [vmem:[#allocation2 + $0x1a0] sm:$0xff]
      %v2613 = vld [vmem:[#allocation2 + $0x1a8] sm:$0xff]
      %v2614 = vld [vmem:[#allocation2 + $0x1b0] sm:$0xff]
      %v2615 = vld [vmem:[#allocation2 + $0x1b8] sm:$0xff]
      %v2616 = vld [vmem:[#allocation2 + $0x1c0] sm:$0xff]
      %v2617 = vld [vmem:[#allocation2 + $0x1c8] sm:$0xff]
      %v2618 = vld [vmem:[#allocation2 + $0x1d0] sm:$0xff]
      %v2619 = vld [vmem:[#allocation2 + $0x1d8] sm:$0xff]
      %v2620 = vld [vmem:[#allocation2 + $0x1e0] sm:$0xff]
      %v2621 = vld [vmem:[#allocation2 + $0x1e8] sm:$0xff]
      %v2622 = vld [vmem:[#allocation2 + $0x1f0] sm:$0xff]
      %v2623 = vld [vmem:[#allocation2 + $0x1f8] sm:$0xff]
      %v2624 = vld [vmem:[#allocation2 + $0x200] sm:$0xff]
      %v2625 = vld [vmem:[#allocation2 + $0x208] sm:$0xff]
      %v2626 = vld [vmem:[#allocation2 + $0x210] sm:$0xff]
      %v2627 = vld [vmem:[#allocation2 + $0x218] sm:$0xff]
      %v2628 = vld [vmem:[#allocation2 + $0x220] sm:$0xff]
      %v2629 = vld [vmem:[#allocation2 + $0x228] sm:$0xff]
      %v2630 = vld [vmem:[#allocation2 + $0x230] sm:$0xff]
      %v2631 = vld [vmem:[#allocation2 + $0x238] sm:$0xff]
      %v2640 = vunpack.c.l.b16 %v2552
      %v2641 = vunpack.c.h.b16 %v2552
      %v2642 = vunpack.c.l.b16 %v2553
      %v2643 = vunpack.c.l.b16 %v2554
      %v2644 = vunpack.c.h.b16 %v2554
      %v2645 = vunpack.c.l.b16 %v2555
      %v2646 = vunpack.c.l.b16 %v2556
      %v2647 = vunpack.c.h.b16 %v2556
      %v2648 = vunpack.c.l.b16 %v2557
      %v2649 = vunpack.c.l.b16 %v2558
      %v2650 = vunpack.c.h.b16 %v2558
      %v2651 = vunpack.c.l.b16 %v2559
      %v2652 = vpack.c.b16 %v2643, %v2640
      %v2653 = vpack.c.b16 %v2644, %v2641
      %v2654 = vpack.c.b16 %v2645, %v2642
      %v2655 = vpack.c.b16 %v2649, %v2646
      %v2656 = vpack.c.b16 %v2650, %v2647
      %v2657 = vpack.c.b16 %v2651, %v2648
      %v2734 = vunpack.c.l.b16 %v2560
      %v2735 = vunpack.c.h.b16 %v2560
      %v2736 = vunpack.c.l.b16 %v2561
      %v2737 = vunpack.c.h.b16 %v2561
      %v2738 = vunpack.c.l.b16 %v2562
      %v2739 = vunpack.c.h.b16 %v2562
      %v2740 = vunpack.c.l.b16 %v2563
      %v2741 = vunpack.c.h.b16 %v2563
      %v2742 = vunpack.c.l.b16 %v2564
      %v2743 = vunpack.c.h.b16 %v2564
      %v2744 = vunpack.c.l.b16 %v2565
      %v2745 = vunpack.c.h.b16 %v2565
      %v2746 = vunpack.c.l.b16 %v2566
      %v2747 = vunpack.c.h.b16 %v2566
      %v2748 = vunpack.c.l.b16 %v2567
      %v2749 = vunpack.c.h.b16 %v2567
      %v2750 = vunpack.c.l.b16 %v2568
      %v2751 = vunpack.c.h.b16 %v2568
      %v2752 = vunpack.c.l.b16 %v2569
      %v2753 = vunpack.c.h.b16 %v2569
      %v2754 = vunpack.c.l.b16 %v2570
      %v2755 = vunpack.c.h.b16 %v2570
      %v2756 = vunpack.c.l.b16 %v2571
      %v2757 = vunpack.c.h.b16 %v2571
      %v2758 = vunpack.c.l.b16 %v2572
      %v2759 = vunpack.c.h.b16 %v2572
      %v2760 = vunpack.c.l.b16 %v2573
      %v2761 = vunpack.c.h.b16 %v2573
      %v2762 = vunpack.c.l.b16 %v2574
      %v2763 = vunpack.c.h.b16 %v2574
      %v2764 = vunpack.c.l.b16 %v2575
      %v2765 = vunpack.c.h.b16 %v2575
      %v2766 = vunpack.c.l.b16 %v2576
      %v2767 = vunpack.c.h.b16 %v2576
      %v2768 = vunpack.c.l.b16 %v2577
      %v2769 = vunpack.c.h.b16 %v2577
      %v2770 = vunpack.c.l.b16 %v2578
      %v2771 = vunpack.c.h.b16 %v2578
      %v2772 = vunpack.c.l.b16 %v2579
      %v2773 = vunpack.c.h.b16 %v2579
      %v2774 = vunpack.c.l.b16 %v2580
      %v2775 = vunpack.c.h.b16 %v2580
      %v2776 = vunpack.c.l.b16 %v2581
      %v2777 = vunpack.c.h.b16 %v2581
      %v2778 = vunpack.c.l.b16 %v2582
      %v2779 = vunpack.c.h.b16 %v2582
      %v2780 = vunpack.c.l.b16 %v2583
      %v2781 = vunpack.c.h.b16 %v2583
      %v2782 = vunpack.c.l.b16 %v2584
      %v2783 = vunpack.c.h.b16 %v2584
      %v2784 = vunpack.c.l.b16 %v2585
      %v2785 = vunpack.c.h.b16 %v2585
      %v2786 = vunpack.c.l.b16 %v2586
      %v2787 = vunpack.c.h.b16 %v2586
      %v2788 = vunpack.c.l.b16 %v2587
      %v2789 = vunpack.c.h.b16 %v2587
      %v2790 = vunpack.c.l.b16 %v2588
      %v2791 = vunpack.c.h.b16 %v2588
      %v2792 = vunpack.c.l.b16 %v2589
      %v2793 = vunpack.c.h.b16 %v2589
      %v2794 = vunpack.c.l.b16 %v2590
      %v2795 = vunpack.c.h.b16 %v2590
      %v2796 = vunpack.c.l.b16 %v2591
      %v2797 = vunpack.c.h.b16 %v2591
      %v2798 = vunpack.c.l.b16 %v2592
      %v2799 = vunpack.c.h.b16 %v2592
      %v2800 = vunpack.c.l.b16 %v2593
      %v2801 = vunpack.c.h.b16 %v2593
      %v2802 = vunpack.c.l.b16 %v2594
      %v2803 = vunpack.c.h.b16 %v2594
      %v2804 = vunpack.c.l.b16 %v2595
      %v2805 = vunpack.c.h.b16 %v2595
      %v2806 = vunpack.c.l.b16 %v2596
      %v2807 = vunpack.c.h.b16 %v2596
      %v2808 = vunpack.c.l.b16 %v2597
      %v2809 = vunpack.c.h.b16 %v2597
      %v2810 = vunpack.c.l.b16 %v2598
      %v2811 = vunpack.c.h.b16 %v2598
      %v2812 = vunpack.c.l.b16 %v2599
      %v2813 = vunpack.c.h.b16 %v2599
      %v2814 = vunpack.c.l.b16 %v2600
      %v2815 = vunpack.c.h.b16 %v2600
      %v2816 = vunpack.c.l.b16 %v2601
      %v2817 = vunpack.c.h.b16 %v2601
      %v2818 = vunpack.c.l.b16 %v2602
      %v2819 = vunpack.c.h.b16 %v2602
      %v2820 = vunpack.c.l.b16 %v2603
      %v2821 = vunpack.c.h.b16 %v2603
      %v2822 = vunpack.c.l.b16 %v2604
      %v2823 = vunpack.c.h.b16 %v2604
      %v2824 = vunpack.c.l.b16 %v2605
      %v2825 = vunpack.c.h.b16 %v2605
      %v2826 = vunpack.c.l.b16 %v2606
      %v2827 = vunpack.c.h.b16 %v2606
      %v2828 = vunpack.c.l.b16 %v2607
      %v2829 = vunpack.c.h.b16 %v2607
      %v2830 = vunpack.c.l.b16 %v2608
      %v2831 = vunpack.c.h.b16 %v2608
      %v2832 = vunpack.c.l.b16 %v2609
      %v2833 = vunpack.c.h.b16 %v2609
      %v2834 = vunpack.c.l.b16 %v2610
      %v2835 = vunpack.c.h.b16 %v2610
      %v2836 = vunpack.c.l.b16 %v2611
      %v2837 = vunpack.c.h.b16 %v2611
      %v2838 = vunpack.c.l.b16 %v2612
      %v2839 = vunpack.c.h.b16 %v2612
      %v2840 = vunpack.c.l.b16 %v2613
      %v2841 = vunpack.c.h.b16 %v2613
      %v2842 = vunpack.c.l.b16 %v2614
      %v2843 = vunpack.c.h.b16 %v2614
      %v2844 = vunpack.c.l.b16 %v2615
      %v2845 = vunpack.c.h.b16 %v2615
      %v2846 = vunpack.c.l.b16 %v2616
      %v2847 = vunpack.c.h.b16 %v2616
      %v2848 = vunpack.c.l.b16 %v2617
      %v2849 = vunpack.c.h.b16 %v2617
      %v2850 = vunpack.c.l.b16 %v2618
      %v2851 = vunpack.c.h.b16 %v2618
      %v2852 = vunpack.c.l.b16 %v2619
      %v2853 = vunpack.c.h.b16 %v2619
      %v2854 = vunpack.c.l.b16 %v2620
      %v2855 = vunpack.c.h.b16 %v2620
      %v2856 = vunpack.c.l.b16 %v2621
      %v2857 = vunpack.c.h.b16 %v2621
      %v2858 = vunpack.c.l.b16 %v2622
      %v2859 = vunpack.c.h.b16 %v2622
      %v2860 = vunpack.c.l.b16 %v2623
      %v2861 = vunpack.c.h.b16 %v2623
      %v2862 = vunpack.c.l.b16 %v2624
      %v2863 = vunpack.c.h.b16 %v2624
      %v2864 = vunpack.c.l.b16 %v2625
      %v2865 = vunpack.c.h.b16 %v2625
      %v2866 = vunpack.c.l.b16 %v2626
      %v2867 = vunpack.c.h.b16 %v2626
      %v2868 = vunpack.c.l.b16 %v2627
      %v2869 = vunpack.c.h.b16 %v2627
      %v2870 = vunpack.c.l.b16 %v2628
      %v2871 = vunpack.c.h.b16 %v2628
      %v2872 = vunpack.c.l.b16 %v2629
      %v2873 = vunpack.c.h.b16 %v2629
      %v2874 = vunpack.c.l.b16 %v2630
      %v2875 = vunpack.c.h.b16 %v2630
      %v2876 = vunpack.c.l.b16 %v2631
      %v2877 = vunpack.c.h.b16 %v2631
      %v2878 = vpack.c.b16 %v2738, %v2734
      %v2879 = vpack.c.b16 %v2739, %v2735
      %v2880 = vpack.c.b16 %v2740, %v2736
      %v2881 = vpack.c.b16 %v2741, %v2737
      %v2882 = vpack.c.b16 %v2746, %v2742
      %v2883 = vpack.c.b16 %v2747, %v2743
      %v2884 = vpack.c.b16 %v2748, %v2744
      %v2885 = vpack.c.b16 %v2749, %v2745
      %v2886 = vpack.c.b16 %v2754, %v2750
      %v2887 = vpack.c.b16 %v2755, %v2751
      %v2888 = vpack.c.b16 %v2756, %v2752
      %v2889 = vpack.c.b16 %v2757, %v2753
      %v2890 = vpack.c.b16 %v2762, %v2758
      %v2891 = vpack.c.b16 %v2763, %v2759
      %v2892 = vpack.c.b16 %v2764, %v2760
      %v2893 = vpack.c.b16 %v2765, %v2761
      %v2894 = vpack.c.b16 %v2770, %v2766
      %v2895 = vpack.c.b16 %v2771, %v2767
      %v2896 = vpack.c.b16 %v2772, %v2768
      %v2897 = vpack.c.b16 %v2773, %v2769
      %v2898 = vpack.c.b16 %v2778, %v2774
      %v2899 = vpack.c.b16 %v2779, %v2775
      %v2900 = vpack.c.b16 %v2780, %v2776
      %v2901 = vpack.c.b16 %v2781, %v2777
      %v2902 = vpack.c.b16 %v2786, %v2782
      %v2903 = vpack.c.b16 %v2787, %v2783
      %v2904 = vpack.c.b16 %v2788, %v2784
      %v2905 = vpack.c.b16 %v2789, %v2785
      %v2906 = vpack.c.b16 %v2794, %v2790
      %v2907 = vpack.c.b16 %v2795, %v2791
      %v2908 = vpack.c.b16 %v2796, %v2792
      %v2909 = vpack.c.b16 %v2797, %v2793
      %v2910 = vpack.c.b16 %v2802, %v2798
      %v2911 = vpack.c.b16 %v2803, %v2799
      %v2912 = vpack.c.b16 %v2804, %v2800
      %v2913 = vpack.c.b16 %v2805, %v2801
      %v2914 = vpack.c.b16 %v2810, %v2806
      %v2915 = vpack.c.b16 %v2811, %v2807
      %v2916 = vpack.c.b16 %v2812, %v2808
      %v2917 = vpack.c.b16 %v2813, %v2809
      %v2918 = vpack.c.b16 %v2818, %v2814
      %v2919 = vpack.c.b16 %v2819, %v2815
      %v2920 = vpack.c.b16 %v2820, %v2816
      %v2921 = vpack.c.b16 %v2821, %v2817
      %v2922 = vpack.c.b16 %v2826, %v2822
      %v2923 = vpack.c.b16 %v2827, %v2823
      %v2924 = vpack.c.b16 %v2828, %v2824
      %v2925 = vpack.c.b16 %v2829, %v2825
      %v2926 = vpack.c.b16 %v2834, %v2830
      %v2927 = vpack.c.b16 %v2835, %v2831
      %v2928 = vpack.c.b16 %v2836, %v2832
      %v2929 = vpack.c.b16 %v2837, %v2833
      %v2930 = vpack.c.b16 %v2842, %v2838
      %v2931 = vpack.c.b16 %v2843, %v2839
      %v2932 = vpack.c.b16 %v2844, %v2840
      %v2933 = vpack.c.b16 %v2845, %v2841
      %v2934 = vpack.c.b16 %v2850, %v2846
      %v2935 = vpack.c.b16 %v2851, %v2847
      %v2936 = vpack.c.b16 %v2852, %v2848
      %v2937 = vpack.c.b16 %v2853, %v2849
      %v2938 = vpack.c.b16 %v2858, %v2854
      %v2939 = vpack.c.b16 %v2859, %v2855
      %v2940 = vpack.c.b16 %v2860, %v2856
      %v2941 = vpack.c.b16 %v2861, %v2857
      %v2942 = vpack.c.b16 %v2866, %v2862
      %v2943 = vpack.c.b16 %v2867, %v2863
      %v2944 = vpack.c.b16 %v2868, %v2864
      %v2945 = vpack.c.b16 %v2869, %v2865
      %v2946 = vpack.c.b16 %v2874, %v2870
      %v2947 = vpack.c.b16 %v2875, %v2871
      %v2948 = vpack.c.b16 %v2876, %v2872
      %v2949 = vpack.c.b16 %v2877, %v2873
      %v3023 = vsel %vm1517, %v2654, 0
      %v3026 = vsel %vm1517, %v2657, 0
      %3028 = vmatpush.bf16.msra.mxu0 %v2906
      %3029 = vmatpush.bf16.msra.mxu0 %v2902
      %3030 = vmatpush.bf16.msra.mxu0 %v2898
      %3031 = vmatpush.bf16.msra.mxu0 %v2894
      %3032 = vmatpush.bf16.msra.mxu0 %v2890
      %3033 = vmatpush.bf16.msra.mxu0 %v2886
      %3034 = vmatpush.bf16.msra.mxu0 %v2882
      %3035 = vmatpush.bf16.msra.mxu0 %v2878
      %3036 = vmatmul.bf16.gmra.mxu0 %v2652
      %v3037 = vpop.f32.mrf.mxu0
      %v3038 = vadd.f32 0.0, %v3037
      %v3039 = vpop.f32.mrf.mxu0
      %v3040 = vadd.f32 0.0, %v3039
      %3041 = vmatmul.bf16.gmra.mxu0 %v2655
      %v3042 = vpop.f32.mrf.mxu0
      %v3043 = vadd.f32 0.0, %v3042
      %v3044 = vpop.f32.mrf.mxu0
      %v3045 = vadd.f32 0.0, %v3044
      %3046 = vdwg.mxu0
      %3047 = vmatpush.bf16.msra.mxu0 %v2938
      %3048 = vmatpush.bf16.msra.mxu0 %v2934
      %3049 = vmatpush.bf16.msra.mxu0 %v2930
      %3050 = vmatpush.bf16.msra.mxu0 %v2926
      %3051 = vmatpush.bf16.msra.mxu0 %v2922
      %3052 = vmatpush.bf16.msra.mxu0 %v2918
      %3053 = vmatpush.bf16.msra.mxu0 %v2914
      %3054 = vmatpush.bf16.msra.mxu0 %v2910
      %3055 = vmatmul.bf16.gmra.mxu0 %v2653
      %v3056 = vpop.f32.mrf.mxu0
      %v3057 = vadd.f32 %v3038, %v3056
      %v3058 = vpop.f32.mrf.mxu0
      %v3059 = vadd.f32 %v3040, %v3058
      %3060 = vmatmul.bf16.gmra.mxu0 %v2656
      %v3061 = vpop.f32.mrf.mxu0
      %v3062 = vadd.f32 %v3043, %v3061
      %v3063 = vpop.f32.mrf.mxu0
      %v3064 = vadd.f32 %v3045, %v3063
      %3065 = vdwg.mxu0
      %3066 = vmatpush.bf16.msra.mxu0 0
      %3067 = vmatpush.bf16.msra.mxu0 0
      %3068 = vmatpush.bf16.msra.mxu0 0
      %3069 = vmatpush.bf16.msra.mxu0 0
      %3070 = vmatpush.bf16.msra.mxu0 0
      %3071 = vmatpush.bf16.msra.mxu0 0
      %3072 = vmatpush.bf16.msra.mxu0 %v2946
      %3073 = vmatpush.bf16.msra.mxu0 %v2942
      %3074 = vmatmul.bf16.gmra.mxu0 %v3023
      %v3075 = vpop.f32.mrf.mxu0
      %v3076 = vadd.f32 %v3057, %v3075
      %v3077 = vpop.f32.mrf.mxu0
      %v3078 = vadd.f32 %v3059, %v3077
      %3079 = vmatmul.bf16.gmra.mxu0 %v3026
      %v3080 = vpop.f32.mrf.mxu0
      %v3081 = vadd.f32 %v3062, %v3080
      %v3082 = vpop.f32.mrf.mxu0
      %v3083 = vadd.f32 %v3064, %v3082
      %3084 = vdwg.mxu0
      %3085 = vmatpush.bf16.msra.mxu0 %v2907
      %3086 = vmatpush.bf16.msra.mxu0 %v2903
      %3087 = vmatpush.bf16.msra.mxu0 %v2899
      %3088 = vmatpush.bf16.msra.mxu0 %v2895
      %3089 = vmatpush.bf16.msra.mxu0 %v2891
      %3090 = vmatpush.bf16.msra.mxu0 %v2887
      %3091 = vmatpush.bf16.msra.mxu0 %v2883
      %3092 = vmatpush.bf16.msra.mxu0 %v2879
      %3093 = vmatmul.bf16.gmra.mxu0 %v2652
      %v3094 = vpop.f32.mrf.mxu0
      %v3095 = vadd.f32 0.0, %v3094
      %v3096 = vpop.f32.mrf.mxu0
      %v3097 = vadd.f32 0.0, %v3096
      %3098 = vmatmul.bf16.gmra.mxu0 %v2655
      %v3099 = vpop.f32.mrf.mxu0
      %v3100 = vadd.f32 0.0, %v3099
      %v3101 = vpop.f32.mrf.mxu0
      %v3102 = vadd.f32 0.0, %v3101
      %3103 = vdwg.mxu0
      %3104 = vmatpush.bf16.msra.mxu0 %v2939
      %3105 = vmatpush.bf16.msra.mxu0 %v2935
      %3106 = vmatpush.bf16.msra.mxu0 %v2931
      %3107 = vmatpush.bf16.msra.mxu0 %v2927
      %3108 = vmatpush.bf16.msra.mxu0 %v2923
      %3109 = vmatpush.bf16.msra.mxu0 %v2919
      %3110 = vmatpush.bf16.msra.mxu0 %v2915
      %3111 = vmatpush.bf16.msra.mxu0 %v2911
      %3112 = vmatmul.bf16.gmra.mxu0 %v2653
      %v3113 = vpop.f32.mrf.mxu0
      %v3114 = vadd.f32 %v3095, %v3113
      %v3115 = vpop.f32.mrf.mxu0
      %v3116 = vadd.f32 %v3097, %v3115
      %3117 = vmatmul.bf16.gmra.mxu0 %v2656
      %v3118 = vpop.f32.mrf.mxu0
      %v3119 = vadd.f32 %v3100, %v3118
      %v3120 = vpop.f32.mrf.mxu0
      %v3121 = vadd.f32 %v3102, %v3120
      %3122 = vdwg.mxu0
      %3123 = vmatpush.bf16.msra.mxu0 0
      %3124 = vmatpush.bf16.msra.mxu0 0
      %3125 = vmatpush.bf16.msra.mxu0 0
      %3126 = vmatpush.bf16.msra.mxu0 0
      %3127 = vmatpush.bf16.msra.mxu0 0
      %3128 = vmatpush.bf16.msra.mxu0 0
      %3129 = vmatpush.bf16.msra.mxu0 %v2947
      %3130 = vmatpush.bf16.msra.mxu0 %v2943
      %3131 = vmatmul.bf16.gmra.mxu0 %v3023
      %v3132 = vpop.f32.mrf.mxu0
      %v3133 = vadd.f32 %v3114, %v3132
      %v3134 = vpop.f32.mrf.mxu0
      %v3135 = vadd.f32 %v3116, %v3134
      %3136 = vmatmul.bf16.gmra.mxu0 %v3026
      %v3137 = vpop.f32.mrf.mxu0
      %v3138 = vadd.f32 %v3119, %v3137
      %v3139 = vpop.f32.mrf.mxu0
      %v3140 = vadd.f32 %v3121, %v3139
      %3141 = vdwg.mxu0
      %3142 = vmatpush.bf16.msra.mxu0 %v2908
      %3143 = vmatpush.bf16.msra.mxu0 %v2904
      %3144 = vmatpush.bf16.msra.mxu0 %v2900
      %3145 = vmatpush.bf16.msra.mxu0 %v2896
      %3146 = vmatpush.bf16.msra.mxu0 %v2892
      %3147 = vmatpush.bf16.msra.mxu0 %v2888
      %3148 = vmatpush.bf16.msra.mxu0 %v2884
      %3149 = vmatpush.bf16.msra.mxu0 %v2880
      %3150 = vmatmul.bf16.gmra.mxu0 %v2652
      %v3151 = vpop.f32.mrf.mxu0
      %v3152 = vadd.f32 0.0, %v3151
      %v3153 = vpop.f32.mrf.mxu0
      %v3154 = vadd.f32 0.0, %v3153
      %3155 = vmatmul.bf16.gmra.mxu0 %v2655
      %v3156 = vpop.f32.mrf.mxu0
      %v3157 = vadd.f32 0.0, %v3156
      %v3158 = vpop.f32.mrf.mxu0
      %v3159 = vadd.f32 0.0, %v3158
      %3160 = vdwg.mxu0
      %3161 = vmatpush.bf16.msra.mxu0 %v2940
      %3162 = vmatpush.bf16.msra.mxu0 %v2936
      %3163 = vmatpush.bf16.msra.mxu0 %v2932
      %3164 = vmatpush.bf16.msra.mxu0 %v2928
      %3165 = vmatpush.bf16.msra.mxu0 %v2924
      %3166 = vmatpush.bf16.msra.mxu0 %v2920
      %3167 = vmatpush.bf16.msra.mxu0 %v2916
      %3168 = vmatpush.bf16.msra.mxu0 %v2912
      %3169 = vmatmul.bf16.gmra.mxu0 %v2653
      %v3170 = vpop.f32.mrf.mxu0
      %v3171 = vadd.f32 %v3152, %v3170
      %v3172 = vpop.f32.mrf.mxu0
      %v3173 = vadd.f32 %v3154, %v3172
      %3174 = vmatmul.bf16.gmra.mxu0 %v2656
      %v3175 = vpop.f32.mrf.mxu0
      %v3176 = vadd.f32 %v3157, %v3175
      %v3177 = vpop.f32.mrf.mxu0
      %v3178 = vadd.f32 %v3159, %v3177
      %3179 = vdwg.mxu0
      %3180 = vmatpush.bf16.msra.mxu0 0
      %3181 = vmatpush.bf16.msra.mxu0 0
      %3182 = vmatpush.bf16.msra.mxu0 0
      %3183 = vmatpush.bf16.msra.mxu0 0
      %3184 = vmatpush.bf16.msra.mxu0 0
      %3185 = vmatpush.bf16.msra.mxu0 0
      %3186 = vmatpush.bf16.msra.mxu0 %v2948
      %3187 = vmatpush.bf16.msra.mxu0 %v2944
      %3188 = vmatmul.bf16.gmra.mxu0 %v3023
      %v3189 = vpop.f32.mrf.mxu0
      %v3190 = vadd.f32 %v3171, %v3189
      %v3191 = vpop.f32.mrf.mxu0
      %v3192 = vadd.f32 %v3173, %v3191
      %3193 = vmatmul.bf16.gmra.mxu0 %v3026
      %v3194 = vpop.f32.mrf.mxu0
      %v3195 = vadd.f32 %v3176, %v3194
      %v3196 = vpop.f32.mrf.mxu0
      %v3197 = vadd.f32 %v3178, %v3196
      %3198 = vdwg.mxu0
      %3199 = vmatpush.bf16.msra.mxu0 %v2909
      %3200 = vmatpush.bf16.msra.mxu0 %v2905
      %3201 = vmatpush.bf16.msra.mxu0 %v2901
      %3202 = vmatpush.bf16.msra.mxu0 %v2897
      %3203 = vmatpush.bf16.msra.mxu0 %v2893
      %3204 = vmatpush.bf16.msra.mxu0 %v2889
      %3205 = vmatpush.bf16.msra.mxu0 %v2885
      %3206 = vmatpush.bf16.msra.mxu0 %v2881
      %3207 = vmatmul.bf16.gmra.mxu0 %v2652
      %v3208 = vpop.f32.mrf.mxu0
      %v3209 = vadd.f32 0.0, %v3208
      %v3210 = vpop.f32.mrf.mxu0
      %v3211 = vadd.f32 0.0, %v3210
      %3212 = vmatmul.bf16.gmra.mxu0 %v2655
      %v3213 = vpop.f32.mrf.mxu0
      %v3214 = vadd.f32 0.0, %v3213
      %v3215 = vpop.f32.mrf.mxu0
      %v3216 = vadd.f32 0.0, %v3215
      %3217 = vdwg.mxu0
      %3218 = vmatpush.bf16.msra.mxu0 %v2941
      %3219 = vmatpush.bf16.msra.mxu0 %v2937
      %3220 = vmatpush.bf16.msra.mxu0 %v2933
      %3221 = vmatpush.bf16.msra.mxu0 %v2929
      %3222 = vmatpush.bf16.msra.mxu0 %v2925
      %3223 = vmatpush.bf16.msra.mxu0 %v2921
      %3224 = vmatpush.bf16.msra.mxu0 %v2917
      %3225 = vmatpush.bf16.msra.mxu0 %v2913
      %3226 = vmatmul.bf16.gmra.mxu0 %v2653
      %v3227 = vpop.f32.mrf.mxu0
      %v3228 = vadd.f32 %v3209, %v3227
      %v3229 = vpop.f32.mrf.mxu0
      %v3230 = vadd.f32 %v3211, %v3229
      %3231 = vmatmul.bf16.gmra.mxu0 %v2656
      %v3232 = vpop.f32.mrf.mxu0
      %v3233 = vadd.f32 %v3214, %v3232
      %v3234 = vpop.f32.mrf.mxu0
      %v3235 = vadd.f32 %v3216, %v3234
      %3236 = vdwg.mxu0
      %3237 = vmatpush.bf16.msra.mxu0 0
      %3238 = vmatpush.bf16.msra.mxu0 0
      %3239 = vmatpush.bf16.msra.mxu0 0
      %3240 = vmatpush.bf16.msra.mxu0 0
      %3241 = vmatpush.bf16.msra.mxu0 0
      %3242 = vmatpush.bf16.msra.mxu0 0
      %3243 = vmatpush.bf16.msra.mxu0 %v2949
      %3244 = vmatpush.bf16.msra.mxu0 %v2945
      %3245 = vmatmul.bf16.gmra.mxu0 %v3023
      %v3246 = vpop.f32.mrf.mxu0
      %v3247 = vadd.f32 %v3228, %v3246
      %v3248 = vpop.f32.mrf.mxu0
      %v3249 = vadd.f32 %v3230, %v3248
      %3250 = vmatmul.bf16.gmra.mxu0 %v3026
      %v3251 = vpop.f32.mrf.mxu0
      %v3252 = vadd.f32 %v3233, %v3251
      %v3253 = vpop.f32.mrf.mxu0
      %v3254 = vadd.f32 %v3235, %v3253
      %3255 = vdwg.mxu0
      %3256 = vst [vmem:[#allocation3] sm:$0xff] %v3076
      %3257 = vst [vmem:[#allocation3 + $0x8] sm:$0xff] %v3133
      %3258 = vst [vmem:[#allocation3 + $0x10] sm:$0xff] %v3190
      %3259 = vst [vmem:[#allocation3 + $0x18] sm:$0xff] %v3247
      %3260 = vst [vmem:[#allocation3 + $0x20] sm:$0xff] %v3078
      %3261 = vst [vmem:[#allocation3 + $0x28] sm:$0xff] %v3135
      %3262 = vst [vmem:[#allocation3 + $0x30] sm:$0xff] %v3192
      %3263 = vst [vmem:[#allocation3 + $0x38] sm:$0xff] %v3249
      %3264 = vst [vmem:[#allocation3 + $0x40] sm:$0xff] %v3081
      %3265 = vst [vmem:[#allocation3 + $0x48] sm:$0xff] %v3138
      %3266 = vst [vmem:[#allocation3 + $0x50] sm:$0xff] %v3195
      %3267 = vst [vmem:[#allocation3 + $0x58] sm:$0xff] %v3252
      %3268 = vst [vmem:[#allocation3 + $0x60] sm:$0xff] %v3083
      %3269 = vst [vmem:[#allocation3 + $0x68] sm:$0xff] %v3140
      %3270 = vst [vmem:[#allocation3 + $0x70] sm:$0xff] %v3197
      %3271 = vst [vmem:[#allocation3 + $0x78] sm:$0xff] %v3254
      %v3272 = vld [vmem:[%s4] sm:$0xf]
      %v3273 = vld [vmem:[#allocation3] sm:$0xff]
      %v3274 = vld [vmem:[#allocation3 + $0x8] sm:$0xff]
      %v3275 = vld [vmem:[#allocation3 + $0x10] sm:$0xff]
      %v3276 = vld [vmem:[#allocation3 + $0x18] sm:$0xff]
      %v3277 = vld [vmem:[#allocation3 + $0x20] sm:$0xff]
      %v3278 = vld [vmem:[#allocation3 + $0x28] sm:$0xff]
      %v3279 = vld [vmem:[#allocation3 + $0x30] sm:$0xff]
      %v3280 = vld [vmem:[#allocation3 + $0x38] sm:$0xff]
      %v3281 = vld [vmem:[#allocation3 + $0x40] sm:$0xff]
      %v3282 = vld [vmem:[#allocation3 + $0x48] sm:$0xff]
      %v3283 = vld [vmem:[#allocation3 + $0x50] sm:$0xff]
      %v3284 = vld [vmem:[#allocation3 + $0x58] sm:$0xff]
      %v3285 = vld [vmem:[#allocation3 + $0x60] sm:$0xff]
      %v3286 = vld [vmem:[#allocation3 + $0x68] sm:$0xff]
      %v3287 = vld [vmem:[#allocation3 + $0x70] sm:$0xff]
      %v3288 = vld [vmem:[#allocation3 + $0x78] sm:$0xff]
      %v3289 = vpack.c.bf16 %v3277, %v3273
      %v3290 = vpack.c.bf16 %v3278, %v3274
      %v3291 = vpack.c.bf16 %v3279, %v3275
      %v3292 = vpack.c.bf16 %v3280, %v3276
      %v3293 = vpack.c.bf16 %v3285, %v3281
      %v3294 = vpack.c.bf16 %v3286, %v3282
      %v3295 = vpack.c.bf16 %v3287, %v3283
      %v3296 = vpack.c.bf16 %v3288, %v3284
      %v3298 = vsel %vm1517, %v3272, 0
      %3300 = vmatpush.bf16.msra.mxu0 0
      %3301 = vmatpush.bf16.msra.mxu0 0
      %3302 = vmatpush.bf16.msra.mxu0 0
      %3303 = vmatpush.bf16.msra.mxu0 0
      %3304 = vmatpush.bf16.msra.mxu0 0
      %3305 = vmatpush.bf16.msra.mxu0 0
      %3306 = vmatpush.bf16.msra.mxu0 %v3293
      %3307 = vmatpush.bf16.msra.mxu0 %v3289
      %3308 = vmatmul.bf16.gmra.mxu0 %v3298
      %v3309 = vpop.f32.mrf.mxu0
      %v3310 = vadd.f32 0.0, %v3309
      %v3311 = vpop.f32.mrf.mxu0
      %3312 = vdwg.mxu0
      %3313 = vmatpush.bf16.msra.mxu0 0
      %3314 = vmatpush.bf16.msra.mxu0 0
      %3315 = vmatpush.bf16.msra.mxu0 0
      %3316 = vmatpush.bf16.msra.mxu0 0
      %3317 = vmatpush.bf16.msra.mxu0 0
      %3318 = vmatpush.bf16.msra.mxu0 0
      %3319 = vmatpush.bf16.msra.mxu0 %v3294
      %3320 = vmatpush.bf16.msra.mxu0 %v3290
      %3321 = vmatmul.bf16.gmra.mxu0 %v3298
      %v3322 = vpop.f32.mrf.mxu0
      %v3323 = vadd.f32 0.0, %v3322
      %v3324 = vpop.f32.mrf.mxu0
      %3325 = vdwg.mxu0
      %3326 = vmatpush.bf16.msra.mxu0 0
      %3327 = vmatpush.bf16.msra.mxu0 0
      %3328 = vmatpush.bf16.msra.mxu0 0
      %3329 = vmatpush.bf16.msra.mxu0 0
      %3330 = vmatpush.bf16.msra.mxu0 0
      %3331 = vmatpush.bf16.msra.mxu0 0
      %3332 = vmatpush.bf16.msra.mxu0 %v3295
      %3333 = vmatpush.bf16.msra.mxu0 %v3291
      %3334 = vmatmul.bf16.gmra.mxu0 %v3298
      %v3335 = vpop.f32.mrf.mxu0
      %v3336 = vadd.f32 0.0, %v3335
      %v3337 = vpop.f32.mrf.mxu0
      %3338 = vdwg.mxu0
      %3339 = vmatpush.bf16.msra.mxu0 0
      %3340 = vmatpush.bf16.msra.mxu0 0
      %3341 = vmatpush.bf16.msra.mxu0 0
      %3342 = vmatpush.bf16.msra.mxu0 0
      %3343 = vmatpush.bf16.msra.mxu0 0
      %3344 = vmatpush.bf16.msra.mxu0 0
      %3345 = vmatpush.bf16.msra.mxu0 %v3296
      %3346 = vmatpush.bf16.msra.mxu0 %v3292
      %3347 = vmatmul.bf16.gmra.mxu0 %v3298
      %v3348 = vpop.f32.mrf.mxu0
      %v3349 = vadd.f32 0.0, %v3348
      %v3350 = vpop.f32.mrf.mxu0
      %3351 = vdwg.mxu0
      %v3352 = vmax.f32 %v3310, 0.0
      %v3353 = vmax.f32 %v3323, 0.0
      %v3354 = vmax.f32 %v3336, 0.0
      %v3355 = vmax.f32 %v3349, 0.0
      %v3356 = vld [vmem:[%s5] sm:$0xff]
      %v3357 = vld [vmem:[%s5 + $0x8] sm:$0xff]
      %v3358 = vld [vmem:[%s5 + $0x10] sm:$0xff]
      %v3359 = vld [vmem:[%s5 + $0x18] sm:$0xff]
      %3361 = vset.pattern.permute.xlu0 0
      %3362 = vperm.xlu0 %3361, %v3356
      %v3363 = vpop.permute.xlu0 %3362
      %3366 = vset.pattern.permute.xlu0 0
      %3367 = vperm.xlu0 %3366, %v3357
      %v3368 = vpop.permute.xlu0 %3367
      %3371 = vset.pattern.permute.xlu0 0
      %3372 = vperm.xlu0 %3371, %v3358
      %v3373 = vpop.permute.xlu0 %3372
      %3376 = vset.pattern.permute.xlu0 0
      %3377 = vperm.xlu0 %3376, %v3359
      %v3378 = vpop.permute.xlu0 %3377
      %v3380 = vperm.slane %v3352, 0
      %v3381 = vperm.slane %v3353, 0
      %v3382 = vmul.f32 %v3363, %v3380
      %v3383 = vmul.f32 %v3363, %v3381
      %v3384 = vmul.f32 %v3368, %v3380
      %v3385 = vmul.f32 %v3368, %v3381
      %v3386 = vmul.f32 %v3373, %v3380
      %v3387 = vmul.f32 %v3373, %v3381
      %v3388 = vmul.f32 %v3378, %v3380
      %v3389 = vmul.f32 %v3378, %v3381
      %3390 = vset.pattern.permute.xlu0 1
      %3391 = vperm.xlu0 %3390, %v3356
      %v3392 = vpop.permute.xlu0 %3391
      %3394 = vset.pattern.permute.xlu0 1
      %3395 = vperm.xlu0 %3394, %v3357
      %v3396 = vpop.permute.xlu0 %3395
      %3398 = vset.pattern.permute.xlu0 1
      %3399 = vperm.xlu0 %3398, %v3358
      %v3400 = vpop.permute.xlu0 %3399
      %3402 = vset.pattern.permute.xlu0 1
      %3403 = vperm.xlu0 %3402, %v3359
      %v3404 = vpop.permute.xlu0 %3403
      %v3406 = vperm.slane %v3352, 1
      %v3407 = vperm.slane %v3353, 1
      %v3408 = vmul.f32 %v3392, %v3406
      %v3409 = vmul.f32 %v3392, %v3407
      %v3410 = vmul.f32 %v3396, %v3406
      %v3411 = vmul.f32 %v3396, %v3407
      %v3412 = vmul.f32 %v3400, %v3406
      %v3413 = vmul.f32 %v3400, %v3407
      %v3414 = vmul.f32 %v3404, %v3406
      %v3415 = vmul.f32 %v3404, %v3407
      %v3416 = vadd.f32 %v3382, %v3408
      %v3417 = vadd.f32 %v3383, %v3409
      %v3418 = vadd.f32 %v3384, %v3410
      %v3419 = vadd.f32 %v3385, %v3411
      %v3420 = vadd.f32 %v3386, %v3412
      %v3421 = vadd.f32 %v3387, %v3413
      %v3422 = vadd.f32 %v3388, %v3414
      %v3423 = vadd.f32 %v3389, %v3415
      %v3424 = vxor.u32 %v3416, 2147483648
      %v3425 = vxor.u32 %v3417, 2147483648
      %v3426 = vxor.u32 %v3418, 2147483648
      %v3427 = vxor.u32 %v3419, 2147483648
      %v3428 = vxor.u32 %v3420, 2147483648
      %v3429 = vxor.u32 %v3421, 2147483648
      %v3430 = vxor.u32 %v3422, 2147483648
      %v3431 = vxor.u32 %v3423, 2147483648
      %v3432 = vmul.f32 %v3424, 1.442695
      %v3433 = vpow.pop %v3432
      %v3434 = vmul.f32 %v3425, 1.442695
      %v3435 = vpow.pop %v3434
      %v3436 = vmul.f32 %v3426, 1.442695
      %v3437 = vpow.pop %v3436
      %v3438 = vmul.f32 %v3427, 1.442695
      %v3439 = vpow.pop %v3438
      %v3440 = vmul.f32 %v3428, 1.442695
      %v3441 = vpow.pop %v3440
      %v3442 = vmul.f32 %v3429, 1.442695
      %v3443 = vpow.pop %v3442
      %v3444 = vmul.f32 %v3430, 1.442695
      %v3445 = vpow.pop %v3444
      %v3446 = vmul.f32 %v3431, 1.442695
      %v3447 = vpow.pop %v3446
      %v3448 = vadd.f32 %v3433, 1.0
      %v3449 = vadd.f32 %v3435, 1.0
      %v3450 = vadd.f32 %v3437, 1.0
      %v3451 = vadd.f32 %v3439, 1.0
      %v3452 = vadd.f32 %v3441, 1.0
      %v3453 = vadd.f32 %v3443, 1.0
      %v3454 = vadd.f32 %v3445, 1.0
      %v3455 = vadd.f32 %v3447, 1.0
      %v3456 = vrcp.pop %v3448
      %v3457 = vmul.f32 %v3448, %v3456
      %v3458 = vsub.f32 1.0, %v3457
      %v3459 = vmul.f32 %v3456, %v3458
      %v3460 = vadd.f32 %v3456, %v3459
      %vm3461 = vweird.f32 %v3448
      %vm3462 = vweird.f32 %v3456
      %vm3463 = vmor %vm3461, %vm3462
      %v3464 = vsel %vm3463, %v3456, %v3460
      %v3465 = vand.u32 2147483647, %v3448
      %vm3466 = vcmp.eq.f32.partialorder %v3465, 8.507059e+37
      %v3467 = vand.u32 %v3448, 2147483648
      %v3468 = vor.u32 1.1754944e-38, %v3467
      %v3469 = vsel %vm3466, %v3468, %v3464
      %v3470 = vmul.f32 1.0, %v3469
      %v3471 = vrcp.pop %v3449
      %v3472 = vmul.f32 %v3449, %v3471
      %v3473 = vsub.f32 1.0, %v3472
      %v3474 = vmul.f32 %v3471, %v3473
      %v3475 = vadd.f32 %v3471, %v3474
      %vm3476 = vweird.f32 %v3449
      %vm3477 = vweird.f32 %v3471
      %vm3478 = vmor %vm3476, %vm3477
      %v3479 = vsel %vm3478, %v3471, %v3475
      %v3480 = vand.u32 2147483647, %v3449
      %vm3481 = vcmp.eq.f32.partialorder %v3480, 8.507059e+37
      %v3482 = vand.u32 %v3449, 2147483648
      %v3483 = vor.u32 1.1754944e-38, %v3482
      %v3484 = vsel %vm3481, %v3483, %v3479
      %v3485 = vmul.f32 1.0, %v3484
      %v3486 = vrcp.pop %v3450
      %v3487 = vmul.f32 %v3450, %v3486
      %v3488 = vsub.f32 1.0, %v3487
      %v3489 = vmul.f32 %v3486, %v3488
      %v3490 = vadd.f32 %v3486, %v3489
      %vm3491 = vweird.f32 %v3450
      %vm3492 = vweird.f32 %v3486
      %vm3493 = vmor %vm3491, %vm3492
      %v3494 = vsel %vm3493, %v3486, %v3490
      %v3495 = vand.u32 2147483647, %v3450
      %vm3496 = vcmp.eq.f32.partialorder %v3495, 8.507059e+37
      %v3497 = vand.u32 %v3450, 2147483648
      %v3498 = vor.u32 1.1754944e-38, %v3497
      %v3499 = vsel %vm3496, %v3498, %v3494
      %v3500 = vmul.f32 1.0, %v3499
      %v3501 = vrcp.pop %v3451
      %v3502 = vmul.f32 %v3451, %v3501
      %v3503 = vsub.f32 1.0, %v3502
      %v3504 = vmul.f32 %v3501, %v3503
      %v3505 = vadd.f32 %v3501, %v3504
      %vm3506 = vweird.f32 %v3451
      %vm3507 = vweird.f32 %v3501
      %vm3508 = vmor %vm3506, %vm3507
      %v3509 = vsel %vm3508, %v3501, %v3505
      %v3510 = vand.u32 2147483647, %v3451
      %vm3511 = vcmp.eq.f32.partialorder %v3510, 8.507059e+37
      %v3512 = vand.u32 %v3451, 2147483648
      %v3513 = vor.u32 1.1754944e-38, %v3512
      %v3514 = vsel %vm3511, %v3513, %v3509
      %v3515 = vmul.f32 1.0, %v3514
      %v3516 = vrcp.pop %v3452
      %v3517 = vmul.f32 %v3452, %v3516
      %v3518 = vsub.f32 1.0, %v3517
      %v3519 = vmul.f32 %v3516, %v3518
      %v3520 = vadd.f32 %v3516, %v3519
      %vm3521 = vweird.f32 %v3452
      %vm3522 = vweird.f32 %v3516
      %vm3523 = vmor %vm3521, %vm3522
      %v3524 = vsel %vm3523, %v3516, %v3520
      %v3525 = vand.u32 2147483647, %v3452
      %vm3526 = vcmp.eq.f32.partialorder %v3525, 8.507059e+37
      %v3527 = vand.u32 %v3452, 2147483648
      %v3528 = vor.u32 1.1754944e-38, %v3527
      %v3529 = vsel %vm3526, %v3528, %v3524
      %v3530 = vmul.f32 1.0, %v3529
      %v3531 = vrcp.pop %v3453
      %v3532 = vmul.f32 %v3453, %v3531
      %v3533 = vsub.f32 1.0, %v3532
      %v3534 = vmul.f32 %v3531, %v3533
      %v3535 = vadd.f32 %v3531, %v3534
      %vm3536 = vweird.f32 %v3453
      %vm3537 = vweird.f32 %v3531
      %vm3538 = vmor %vm3536, %vm3537
      %v3539 = vsel %vm3538, %v3531, %v3535
      %v3540 = vand.u32 2147483647, %v3453
      %vm3541 = vcmp.eq.f32.partialorder %v3540, 8.507059e+37
      %v3542 = vand.u32 %v3453, 2147483648
      %v3543 = vor.u32 1.1754944e-38, %v3542
      %v3544 = vsel %vm3541, %v3543, %v3539
      %v3545 = vmul.f32 1.0, %v3544
      %v3546 = vrcp.pop %v3454
      %v3547 = vmul.f32 %v3454, %v3546
      %v3548 = vsub.f32 1.0, %v3547
      %v3549 = vmul.f32 %v3546, %v3548
      %v3550 = vadd.f32 %v3546, %v3549
      %vm3551 = vweird.f32 %v3454
      %vm3552 = vweird.f32 %v3546
      %vm3553 = vmor %vm3551, %vm3552
      %v3554 = vsel %vm3553, %v3546, %v3550
      %v3555 = vand.u32 2147483647, %v3454
      %vm3556 = vcmp.eq.f32.partialorder %v3555, 8.507059e+37
      %v3557 = vand.u32 %v3454, 2147483648
      %v3558 = vor.u32 1.1754944e-38, %v3557
      %v3559 = vsel %vm3556, %v3558, %v3554
      %v3560 = vmul.f32 1.0, %v3559
      %v3561 = vrcp.pop %v3455
      %v3562 = vmul.f32 %v3455, %v3561
      %v3563 = vsub.f32 1.0, %v3562
      %v3564 = vmul.f32 %v3561, %v3563
      %v3565 = vadd.f32 %v3561, %v3564
      %vm3566 = vweird.f32 %v3455
      %vm3567 = vweird.f32 %v3561
      %vm3568 = vmor %vm3566, %vm3567
      %v3569 = vsel %vm3568, %v3561, %v3565
      %v3570 = vand.u32 2147483647, %v3455
      %vm3571 = vcmp.eq.f32.partialorder %v3570, 8.507059e+37
      %v3572 = vand.u32 %v3455, 2147483648
      %v3573 = vor.u32 1.1754944e-38, %v3572
      %v3574 = vsel %vm3571, %v3573, %v3569
      %v3575 = vmul.f32 1.0, %v3574
      %v3576 = vld [vmem:[#allocation3] sm:$0xff]
      %v3577 = vld [vmem:[#allocation3 + $0x8] sm:$0xff]
      %v3578 = vld [vmem:[#allocation3 + $0x20] sm:$0xff]
      %v3579 = vld [vmem:[#allocation3 + $0x28] sm:$0xff]
      %v3580 = vld [vmem:[#allocation3 + $0x40] sm:$0xff]
      %v3581 = vld [vmem:[#allocation3 + $0x48] sm:$0xff]
      %v3582 = vld [vmem:[#allocation3 + $0x60] sm:$0xff]
      %v3583 = vld [vmem:[#allocation3 + $0x68] sm:$0xff]
      %v3584 = vmul.f32 %v3576, %v3470
      %v3585 = vmul.f32 %v3577, %v3485
      %v3586 = vmul.f32 %v3578, %v3500
      %v3587 = vmul.f32 %v3579, %v3515
      %v3588 = vmul.f32 %v3580, %v3530
      %v3589 = vmul.f32 %v3581, %v3545
      %v3590 = vmul.f32 %v3582, %v3560
      %v3591 = vmul.f32 %v3583, %v3575
      %v3592 = vld [vmem:[%s251] sm:$0xff]
      %v3593 = vld [vmem:[%s251 + $0x8] sm:$0xff]
      %v3594 = vld [vmem:[%s251 + $0x10] sm:$0xff]
      %v3595 = vld [vmem:[%s251 + $0x18] sm:$0xff]
      %v3596 = vld [vmem:[%s251 + $0x20] sm:$0xff]
      %v3597 = vld [vmem:[%s251 + $0x28] sm:$0xff]
      %v3598 = vld [vmem:[%s251 + $0x30] sm:$0xff]
      %v3599 = vld [vmem:[%s251 + $0x38] sm:$0xff]
      %v3600 = vadd.f32 %v3584, %v3592
      %v3601 = vadd.f32 %v3585, %v3593
      %v3602 = vadd.f32 %v3586, %v3594
      %v3603 = vadd.f32 %v3587, %v3595
      %v3604 = vadd.f32 %v3588, %v3596
      %v3605 = vadd.f32 %v3589, %v3597
      %v3606 = vadd.f32 %v3590, %v3598
      %v3607 = vadd.f32 %v3591, %v3599
      %3608 = vst [vmem:[%s258] sm:$0xff] %v3600
      %3609 = vst [vmem:[%s258 + $0x8] sm:$0xff] %v3601
      %3610 = vst [vmem:[%s258 + $0x10] sm:$0xff] %v3602
      %3611 = vst [vmem:[%s258 + $0x18] sm:$0xff] %v3603
      %3612 = vst [vmem:[%s258 + $0x20] sm:$0xff] %v3604
      %3613 = vst [vmem:[%s258 + $0x28] sm:$0xff] %v3605
      %3614 = vst [vmem:[%s258 + $0x30] sm:$0xff] %v3606
      %3615 = vst [vmem:[%s258 + $0x38] sm:$0xff] %v3607
      %v3616 = vld [vmem:[%s5] sm:$0xff]
      %v3617 = vld [vmem:[%s5 + $0x8] sm:$0xff]
      %v3618 = vld [vmem:[%s5 + $0x10] sm:$0xff]
      %v3619 = vld [vmem:[%s5 + $0x18] sm:$0xff]
      %3621 = vset.pattern.permute.xlu0 0
      %3622 = vperm.xlu0 %3621, %v3616
      %v3623 = vpop.permute.xlu0 %3622
      %3626 = vset.pattern.permute.xlu0 0
      %3627 = vperm.xlu0 %3626, %v3617
      %v3628 = vpop.permute.xlu0 %3627
      %3631 = vset.pattern.permute.xlu0 0
      %3632 = vperm.xlu0 %3631, %v3618
      %v3633 = vpop.permute.xlu0 %3632
      %3636 = vset.pattern.permute.xlu0 0
      %3637 = vperm.xlu0 %3636, %v3619
      %v3638 = vpop.permute.xlu0 %3637
      %v3640 = vperm.slane %v3354, 0
      %v3641 = vperm.slane %v3355, 0
      %v3642 = vmul.f32 %v3623, %v3640
      %v3643 = vmul.f32 %v3623, %v3641
      %v3644 = vmul.f32 %v3628, %v3640
      %v3645 = vmul.f32 %v3628, %v3641
      %v3646 = vmul.f32 %v3633, %v3640
      %v3647 = vmul.f32 %v3633, %v3641
      %v3648 = vmul.f32 %v3638, %v3640
      %v3649 = vmul.f32 %v3638, %v3641
      %3650 = vset.pattern.permute.xlu0 1
      %3651 = vperm.xlu0 %3650, %v3616
      %v3652 = vpop.permute.xlu0 %3651
      %3654 = vset.pattern.permute.xlu0 1
      %3655 = vperm.xlu0 %3654, %v3617
      %v3656 = vpop.permute.xlu0 %3655
      %3658 = vset.pattern.permute.xlu0 1
      %3659 = vperm.xlu0 %3658, %v3618
      %v3660 = vpop.permute.xlu0 %3659
      %3662 = vset.pattern.permute.xlu0 1
      %3663 = vperm.xlu0 %3662, %v3619
      %v3664 = vpop.permute.xlu0 %3663
      %v3666 = vperm.slane %v3354, 1
      %v3667 = vperm.slane %v3355, 1
      %v3668 = vmul.f32 %v3652, %v3666
      %v3669 = vmul.f32 %v3652, %v3667
      %v3670 = vmul.f32 %v3656, %v3666
      %v3671 = vmul.f32 %v3656, %v3667
      %v3672 = vmul.f32 %v3660, %v3666
      %v3673 = vmul.f32 %v3660, %v3667
      %v3674 = vmul.f32 %v3664, %v3666
      %v3675 = vmul.f32 %v3664, %v3667
      %v3676 = vadd.f32 %v3642, %v3668
      %v3677 = vadd.f32 %v3643, %v3669
      %v3678 = vadd.f32 %v3644, %v3670
      %v3679 = vadd.f32 %v3645, %v3671
      %v3680 = vadd.f32 %v3646, %v3672
      %v3681 = vadd.f32 %v3647, %v3673
      %v3682 = vadd.f32 %v3648, %v3674
      %v3683 = vadd.f32 %v3649, %v3675
      %v3684 = vxor.u32 %v3676, 2147483648
      %v3685 = vxor.u32 %v3677, 2147483648
      %v3686 = vxor.u32 %v3678, 2147483648
      %v3687 = vxor.u32 %v3679, 2147483648
      %v3688 = vxor.u32 %v3680, 2147483648
      %v3689 = vxor.u32 %v3681, 2147483648
      %v3690 = vxor.u32 %v3682, 2147483648
      %v3691 = vxor.u32 %v3683, 2147483648
      %v3692 = vmul.f32 %v3684, 1.442695
      %v3693 = vpow.pop %v3692
      %v3694 = vmul.f32 %v3685, 1.442695
      %v3695 = vpow.pop %v3694
      %v3696 = vmul.f32 %v3686, 1.442695
      %v3697 = vpow.pop %v3696
      %v3698 = vmul.f32 %v3687, 1.442695
      %v3699 = vpow.pop %v3698
      %v3700 = vmul.f32 %v3688, 1.442695
      %v3701 = vpow.pop %v3700
      %v3702 = vmul.f32 %v3689, 1.442695
      %v3703 = vpow.pop %v3702
      %v3704 = vmul.f32 %v3690, 1.442695
      %v3705 = vpow.pop %v3704
      %v3706 = vmul.f32 %v3691, 1.442695
      %v3707 = vpow.pop %v3706
      %v3708 = vadd.f32 %v3693, 1.0
      %v3709 = vadd.f32 %v3695, 1.0
      %v3710 = vadd.f32 %v3697, 1.0
      %v3711 = vadd.f32 %v3699, 1.0
      %v3712 = vadd.f32 %v3701, 1.0
      %v3713 = vadd.f32 %v3703, 1.0
      %v3714 = vadd.f32 %v3705, 1.0
      %v3715 = vadd.f32 %v3707, 1.0
      %v3716 = vrcp.pop %v3708
      %v3717 = vmul.f32 %v3708, %v3716
      %v3718 = vsub.f32 1.0, %v3717
      %v3719 = vmul.f32 %v3716, %v3718
      %v3720 = vadd.f32 %v3716, %v3719
      %vm3721 = vweird.f32 %v3708
      %vm3722 = vweird.f32 %v3716
      %vm3723 = vmor %vm3721, %vm3722
      %v3724 = vsel %vm3723, %v3716, %v3720
      %v3725 = vand.u32 2147483647, %v3708
      %vm3726 = vcmp.eq.f32.partialorder %v3725, 8.507059e+37
      %v3727 = vand.u32 %v3708, 2147483648
      %v3728 = vor.u32 1.1754944e-38, %v3727
      %v3729 = vsel %vm3726, %v3728, %v3724
      %v3730 = vmul.f32 1.0, %v3729
      %v3731 = vrcp.pop %v3709
      %v3732 = vmul.f32 %v3709, %v3731
      %v3733 = vsub.f32 1.0, %v3732
      %v3734 = vmul.f32 %v3731, %v3733
      %v3735 = vadd.f32 %v3731, %v3734
      %vm3736 = vweird.f32 %v3709
      %vm3737 = vweird.f32 %v3731
      %vm3738 = vmor %vm3736, %vm3737
      %v3739 = vsel %vm3738, %v3731, %v3735
      %v3740 = vand.u32 2147483647, %v3709
      %vm3741 = vcmp.eq.f32.partialorder %v3740, 8.507059e+37
      %v3742 = vand.u32 %v3709, 2147483648
      %v3743 = vor.u32 1.1754944e-38, %v3742
      %v3744 = vsel %vm3741, %v3743, %v3739
      %v3745 = vmul.f32 1.0, %v3744
      %v3746 = vrcp.pop %v3710
      %v3747 = vmul.f32 %v3710, %v3746
      %v3748 = vsub.f32 1.0, %v3747
      %v3749 = vmul.f32 %v3746, %v3748
      %v3750 = vadd.f32 %v3746, %v3749
      %vm3751 = vweird.f32 %v3710
      %vm3752 = vweird.f32 %v3746
      %vm3753 = vmor %vm3751, %vm3752
      %v3754 = vsel %vm3753, %v3746, %v3750
      %v3755 = vand.u32 2147483647, %v3710
      %vm3756 = vcmp.eq.f32.partialorder %v3755, 8.507059e+37
      %v3757 = vand.u32 %v3710, 2147483648
      %v3758 = vor.u32 1.1754944e-38, %v3757
      %v3759 = vsel %vm3756, %v3758, %v3754
      %v3760 = vmul.f32 1.0, %v3759
      %v3761 = vrcp.pop %v3711
      %v3762 = vmul.f32 %v3711, %v3761
      %v3763 = vsub.f32 1.0, %v3762
      %v3764 = vmul.f32 %v3761, %v3763
      %v3765 = vadd.f32 %v3761, %v3764
      %vm3766 = vweird.f32 %v3711
      %vm3767 = vweird.f32 %v3761
      %vm3768 = vmor %vm3766, %vm3767
      %v3769 = vsel %vm3768, %v3761, %v3765
      %v3770 = vand.u32 2147483647, %v3711
      %vm3771 = vcmp.eq.f32.partialorder %v3770, 8.507059e+37
      %v3772 = vand.u32 %v3711, 2147483648
      %v3773 = vor.u32 1.1754944e-38, %v3772
      %v3774 = vsel %vm3771, %v3773, %v3769
      %v3775 = vmul.f32 1.0, %v3774
      %v3776 = vrcp.pop %v3712
      %v3777 = vmul.f32 %v3712, %v3776
      %v3778 = vsub.f32 1.0, %v3777
      %v3779 = vmul.f32 %v3776, %v3778
      %v3780 = vadd.f32 %v3776, %v3779
      %vm3781 = vweird.f32 %v3712
      %vm3782 = vweird.f32 %v3776
      %vm3783 = vmor %vm3781, %vm3782
      %v3784 = vsel %vm3783, %v3776, %v3780
      %v3785 = vand.u32 2147483647, %v3712
      %vm3786 = vcmp.eq.f32.partialorder %v3785, 8.507059e+37
      %v3787 = vand.u32 %v3712, 2147483648
      %v3788 = vor.u32 1.1754944e-38, %v3787
      %v3789 = vsel %vm3786, %v3788, %v3784
      %v3790 = vmul.f32 1.0, %v3789
      %v3791 = vrcp.pop %v3713
      %v3792 = vmul.f32 %v3713, %v3791
      %v3793 = vsub.f32 1.0, %v3792
      %v3794 = vmul.f32 %v3791, %v3793
      %v3795 = vadd.f32 %v3791, %v3794
      %vm3796 = vweird.f32 %v3713
      %vm3797 = vweird.f32 %v3791
      %vm3798 = vmor %vm3796, %vm3797
      %v3799 = vsel %vm3798, %v3791, %v3795
      %v3800 = vand.u32 2147483647, %v3713
      %vm3801 = vcmp.eq.f32.partialorder %v3800, 8.507059e+37
      %v3802 = vand.u32 %v3713, 2147483648
      %v3803 = vor.u32 1.1754944e-38, %v3802
      %v3804 = vsel %vm3801, %v3803, %v3799
      %v3805 = vmul.f32 1.0, %v3804
      %v3806 = vrcp.pop %v3714
      %v3807 = vmul.f32 %v3714, %v3806
      %v3808 = vsub.f32 1.0, %v3807
      %v3809 = vmul.f32 %v3806, %v3808
      %v3810 = vadd.f32 %v3806, %v3809
      %vm3811 = vweird.f32 %v3714
      %vm3812 = vweird.f32 %v3806
      %vm3813 = vmor %vm3811, %vm3812
      %v3814 = vsel %vm3813, %v3806, %v3810
      %v3815 = vand.u32 2147483647, %v3714
      %vm3816 = vcmp.eq.f32.partialorder %v3815, 8.507059e+37
      %v3817 = vand.u32 %v3714, 2147483648
      %v3818 = vor.u32 1.1754944e-38, %v3817
      %v3819 = vsel %vm3816, %v3818, %v3814
      %v3820 = vmul.f32 1.0, %v3819
      %v3821 = vrcp.pop %v3715
      %v3822 = vmul.f32 %v3715, %v3821
      %v3823 = vsub.f32 1.0, %v3822
      %v3824 = vmul.f32 %v3821, %v3823
      %v3825 = vadd.f32 %v3821, %v3824
      %vm3826 = vweird.f32 %v3715
      %vm3827 = vweird.f32 %v3821
      %vm3828 = vmor %vm3826, %vm3827
      %v3829 = vsel %vm3828, %v3821, %v3825
      %v3830 = vand.u32 2147483647, %v3715
      %vm3831 = vcmp.eq.f32.partialorder %v3830, 8.507059e+37
      %v3832 = vand.u32 %v3715, 2147483648
      %v3833 = vor.u32 1.1754944e-38, %v3832
      %v3834 = vsel %vm3831, %v3833, %v3829
      %v3835 = vmul.f32 1.0, %v3834
      %v3836 = vld [vmem:[#allocation3 + $0x10] sm:$0xff]
      %v3837 = vld [vmem:[#allocation3 + $0x18] sm:$0xff]
      %v3838 = vld [vmem:[#allocation3 + $0x30] sm:$0xff]
      %v3839 = vld [vmem:[#allocation3 + $0x38] sm:$0xff]
      %v3840 = vld [vmem:[#allocation3 + $0x50] sm:$0xff]
      %v3841 = vld [vmem:[#allocation3 + $0x58] sm:$0xff]
      %v3842 = vld [vmem:[#allocation3 + $0x70] sm:$0xff]
      %v3843 = vld [vmem:[#allocation3 + $0x78] sm:$0xff]
      %v3844 = vmul.f32 %v3836, %v3730
      %v3845 = vmul.f32 %v3837, %v3745
      %v3846 = vmul.f32 %v3838, %v3760
      %v3847 = vmul.f32 %v3839, %v3775
      %v3848 = vmul.f32 %v3840, %v3790
      %v3849 = vmul.f32 %v3841, %v3805
      %v3850 = vmul.f32 %v3842, %v3820
      %v3851 = vmul.f32 %v3843, %v3835
      %v3852 = vld [vmem:[%s662] sm:$0xff]
      %v3853 = vld [vmem:[%s662 + $0x8] sm:$0xff]
      %v3854 = vld [vmem:[%s662 + $0x10] sm:$0xff]
      %v3855 = vld [vmem:[%s662 + $0x18] sm:$0xff]
      %v3856 = vld [vmem:[%s662 + $0x20] sm:$0xff]
      %v3857 = vld [vmem:[%s662 + $0x28] sm:$0xff]
      %v3858 = vld [vmem:[%s662 + $0x30] sm:$0xff]
      %v3859 = vld [vmem:[%s662 + $0x38] sm:$0xff]
      %v3860 = vadd.f32 %v3844, %v3852
      %v3861 = vadd.f32 %v3845, %v3853
      %v3862 = vadd.f32 %v3846, %v3854
      %v3863 = vadd.f32 %v3847, %v3855
      %v3864 = vadd.f32 %v3848, %v3856
      %v3865 = vadd.f32 %v3849, %v3857
      %v3866 = vadd.f32 %v3850, %v3858
      %v3867 = vadd.f32 %v3851, %v3859
      %s3868 = scalar_lea.vmem %s258, 64
      %3869 = vst [vmem:[%s3868] sm:$0xff] %v3860
      %3870 = vst [vmem:[%s3868 + $0x8] sm:$0xff] %v3861
      %3871 = vst [vmem:[%s3868 + $0x10] sm:$0xff] %v3862
      %3872 = vst [vmem:[%s3868 + $0x18] sm:$0xff] %v3863
      %3873 = vst [vmem:[%s3868 + $0x20] sm:$0xff] %v3864
      %3874 = vst [vmem:[%s3868 + $0x28] sm:$0xff] %v3865
      %3875 = vst [vmem:[%s3868 + $0x30] sm:$0xff] %v3866
      %3876 = vst [vmem:[%s3868 + $0x38] sm:$0xff] %v3867
      %s3877 = smul.u32 2, %s17
      %p3878 = scmp.lt.s32.totalorder %s3877, 3
      %s3879 = scalar_select %p3878, %s3877, 3
      %s3880 = smul.addr %s3879, 8
      %s3881 = smul.addr %s3880, 8
      %s3882 = scalar_lea.vmem %s6, %s3881
      // Predicated region
      $region45: #{pab_forward_nchw.1} parent=43 // pred_check
        %p3883 = pneg %p166
      $region46: #{pab_forward_nchw.1} parent=43 // pred_check_branch
        %3885 = sbr.rel (%p3883) target = $region48
      $region47: #{pab_forward_nchw.1} parent=43 // pred_region
        %s3886 = smul.u32 2, %s17
      $region48: #{pab_forward_nchw.1} parent=43 // pred_fallthru
        _
    $region44: #{pab_forward_nchw.1} parent=5 // pred_fallthru
      _
    %p3887 = scmp.le.s32.totalorder 2, %s12
    // Predicated region
    $region49: #{pab_forward_nchw.1} parent=5 // pred_check
      %p3888 = pneg %p3887
    $region50: #{pab_forward_nchw.1} parent=5 // pred_check_branch
      %3890 = sbr.rel (%p3888) target = $region52
    $region51: #{pab_forward_nchw.1} parent=5 // pred_region
      %s3891 = ssub.s32 %s12, 2
      // Predicated region
      $region53: #{pab_forward_nchw.1} parent=51 // pred_check
        %p3892 = pneg %p172
      $region54: #{pab_forward_nchw.1} parent=51 // pred_check_branch
        %3894 = sbr.rel (%p3892) target = $region56
      $region55: #{pab_forward_nchw.1} parent=51 // pred_region
        %s3895 = smul.u32 2, %s18
        %p3896 = scmp.lt.s32.totalorder %s3895, 3
        %s3897 = scalar_select %p3896, %s3895, 3
        %s3898 = smul.addr %s3897, 8
        %s3899 = smul.addr %s3898, 8
        %s3900 = scalar_lea.vmem %s6, %s3899
      $region56: #{pab_forward_nchw.1} parent=51 // pred_fallthru
        _
    $region52: #{pab_forward_nchw.1} parent=5 // pred_fallthru
      _
  $region6: #{pab_forward_nchw.1} parent=0 // loop_footer
    %s16 = sadd.s32 1, %s12
  $region7: #{pab_forward_nchw.1} parent=0 // loop_footer_branch
    %11 = sbr.rel target = $region3
  $region8: #{pab_forward_nchw.1} parent=0 // loop_exit
    _

</llo_original>
